<compile_context>
chip_gen: v7x
topology: tpu7x:2x2x1
jax: 0.10.0
libtpu: 0.0.40
codegen_flags: <defaults>
</compile_context>

<pallas_src>
import math

import numpy as np

import jax
import jax.numpy as jnp
from jax.experimental import pallas as pl
from jax.experimental.pallas import tpu as pltpu


# ------------------------------ tiling helpers -------------------------------

def _round_up(x, m):
    return ((x + m - 1) // m) * m


def _vmem_budget_bytes(default=16 * 1024 * 1024):
    """Generation-aware VMEM budget: ~1/4 of physical VMEM, capped at 32 MiB
    (v5e/v6e -> 32 MiB, v7x with 64 MiB physical -> 16 MiB).  The same number is passed
    as vmem_limit_bytes so the enforced limit matches the sizing assumption."""
    try:
        cap = int(pltpu.get_tpu_info().vmem_capacity_bytes)
        return int(max(default, min(cap // 4, 32 * 1024 * 1024)))
    except Exception:
        return int(default)  # conservative fallback (matches the v5e scoped default)


def _pick_tile(n, bytes_per_unit, budget, unit=128, min_tile=512, max_tile=2048,
               target_steps=4):
    """Pick a tile along one axis: a multiple of `unit`, sized so the (double-buffer /
    temporary inflated) bytes_per_unit fits `budget`, capped at max_tile, never larger
    than the rounded-up axis, and -- once the axis is large -- small enough to give
    >= target_steps grid steps (>= 2 per TensorCore on v7x megacore) while staying
    >= min_tile to amortize the ~0.35us per-grid-step overhead."""
    cap = (budget // max(bytes_per_unit, 1)) // unit * unit
    tile = max(unit, min(max_tile, cap))
    tile = min(tile, _round_up(n, unit))
    if n >= target_steps * min_tile:
        tile = min(tile, max(min_tile, _round_up(-(-n // target_steps), unit)))
    return tile


# ------------------------------- Pallas kernels -------------------------------

def _proj_kernel(x_ref, w_ref, k_ref, q_ref, v_ref):
    """Fused bias-free 1x1-conv projection.
    x_ref: (1, Cin, TN) with pixels on the lane axis (lane-dense stores);
    w_ref: (3*Cout, Cin) f32;  k/q/v_ref: (1, Cout, TN) storage dtype."""
    co = k_ref.shape[1]
    res = jnp.dot(w_ref[...], x_ref[0], preferred_element_type=jnp.float32)  # (3Co, TN)
    k_ref[0] = res[:co].astype(k_ref.dtype)
    q_ref[0] = res[co:2 * co].astype(q_ref.dtype)
    v_ref[0] = res[2 * co:].astype(v_ref.dtype)
    # TODO(synk): at production channel counts pad Cin to a multiple of 8 (f32)/16 (bf16)
    # and feed bf16 operands to the MXU; at these sizes the projection is HBM-bound.


def _sa_kernel(k_ref, q_ref, v_ref, rep_ch_ref, seg_sum_ref, rep_nb_ref, gather_ch_ref,
               o_ref):
    """Per-patch softmax attention over the K2 unfolded neighbors.

    Blocks (rows n = b*L + l on the sublane axis -- the free row-major view of the
    module's .view()-scrambled tensors, so no HBM transpose pass is needed):
      k_ref, v_ref : (TN, K2*C)    q_ref : (TN, C)    o_ref : (TN, C)
    The neighbor/channel regrouping is folded into tiny constant 0/1 selector matmuls on
    the otherwise-idle MXU; no in-kernel transposes, no lane gathers, and no (K2, C, TN)
    3-D temporaries are materialized."""
    f32 = jnp.float32
    k = k_ref[...].astype(f32)                      # (TN, M)  with M = K2*C
    q = q_ref[...].astype(f32)                      # (TN, C)
    v = v_ref[...].astype(f32)                      # (TN, M)

    # q replicated per neighbor: q_rep[n, j*C+c] = q[n, c]
    q_rep = jnp.dot(q, rep_ch_ref[...], preferred_element_type=f32)            # (TN, M)
    # logits[n, j] = sum_c k[n, j*C+c] * q[n, c]     (segment-sum over channels)
    logits = jnp.dot(k * q_rep, seg_sum_ref[...], preferred_element_type=f32)  # (TN, K2)

    m = jnp.max(logits, axis=-1, keepdims=True)                                # (TN, 1)
    e = jnp.exp(logits - m)                                                    # (TN, K2)
    denom = jnp.sum(e, axis=-1, keepdims=True)                                 # (TN, 1)
    attn = e * pl.reciprocal(denom, approx=False)   # softmax over neighbors   (TN, K2)

    # out[n, c] = sum_j attn[n, j] * v[n, j*C+c]
    attn_rep = jnp.dot(attn, rep_nb_ref[...], preferred_element_type=f32)      # (TN, M)
    out = jnp.dot(attn_rep * v, gather_ch_ref[...], preferred_element_type=f32)  # (TN, C)
    o_ref[...] = out.astype(o_ref.dtype)


# -------------------------------- wrappers ------------------------------------

def fused_proj_pallas(xp, w_cat, out_channels, storage_dtype=jnp.bfloat16):
    """Fused bias-free 1x1 conv: xp (B, Cin, Hp, Wp) f32, w_cat (3*Cout, Cin) f32
    -> (keys, queries, values), each (B, Cout, Hp, Wp) in storage_dtype."""
    B, Cin, Hp, Wp = xp.shape
    Co = out_channels
    Cout3 = w_cat.shape[0]
    P = Hp * Wp
    x3 = xp.reshape(B, Cin, P)                      # free row-major reshape

    budget = _vmem_budget_bytes()
    ob = jnp.dtype(storage_dtype).itemsize
    # double-buffered input/output blocks + the f32 (3Co, TN) intermediate, per lane
    bytes_per_lane = 2 * Cin * 4 + 2 * 3 * Co * ob + Cout3 * 4
    tn = _pick_tile(P, bytes_per_lane, budget)
    grid = (B, pl.cdiv(P, tn))                      # ragged lane tail -> partial blocks

    out_sds = jax.ShapeDtypeStruct((B, Co, P), storage_dtype)
    outs = pl.pallas_call(
        _proj_kernel,
        out_shape=(out_sds, out_sds, out_sds),
        grid=grid,
        in_specs=[
            pl.BlockSpec((1, Cin, tn), lambda b, i: (b, 0, i)),
            pl.BlockSpec((Cout3, Cin), lambda b, i: (0, 0)),
        ],
        out_specs=tuple(pl.BlockSpec((1, Co, tn), lambda b, i: (b, 0, i))
                        for _ in range(3)),
        compiler_params=pltpu.CompilerParams(
            dimension_semantics=("parallel", "parallel"),
            vmem_limit_bytes=budget),
    )(x3, w_cat)
    return tuple(o.reshape(B, Co, Hp, Wp) for o in outs)


def _selector_matrices(num_neighbors, channels):
    """Constant 0/1 matrices that fold the neighbor/channel (de)interleave into matmuls."""
    K2, C = num_neighbors, channels
    m = np.arange(K2 * C)
    rep_ch = (m[None, :] % C == np.arange(C)[:, None])       # (C, M): replicate q per j
    seg_sum = (m[:, None] // C == np.arange(K2)[None, :])    # (M, K2): sum over channels
    rep_nb = (m[None, :] // C == np.arange(K2)[:, None])     # (K2, M): replicate attn per c
    gather_ch = (m[:, None] % C == np.arange(C)[None, :])    # (M, C): sum over neighbors
    to_f32 = lambda a: jnp.asarray(a, dtype=jnp.float32)
    return to_f32(rep_ch), to_f32(seg_sum), to_f32(rep_nb), to_f32(gather_ch)


def sa_attention_pallas(k_flat, q_flat, v_flat, num_neighbors, channels):
    """k_flat/v_flat: (N, K2*C), q_flat: (N, C) (storage dtype) -> (N, C) float32."""
    N, M = k_flat.shape
    C = channels
    assert M == num_neighbors * channels and q_flat.shape == (N, C)

    budget = _vmem_budget_bytes()
    sb = jnp.dtype(k_flat.dtype).itemsize
    # per-row bytes: double-buffered k/v/q/out blocks + generous f32 in-kernel temporaries
    bytes_per_row = 2 * 2 * M * sb + 2 * 2 * C * sb + 2 * C * 4 + 8 * M * 4
    tn = _pick_tile(N, bytes_per_row, budget)

    selectors = _selector_matrices(num_neighbors, channels)
    sel_specs = [pl.BlockSpec(s.shape, lambda i: (0, 0)) for s in selectors]

    out = pl.pallas_call(
        _sa_kernel,
        out_shape=jax.ShapeDtypeStruct((N, C), jnp.float32),
        grid=(pl.cdiv(N, tn),),                     # ragged row tail -> partial blocks
        in_specs=[
            pl.BlockSpec((tn, M), lambda i: (i, 0)),
            pl.BlockSpec((tn, C), lambda i: (i, 0)),
            pl.BlockSpec((tn, M), lambda i: (i, 0)),
        ] + sel_specs,
        out_specs=pl.BlockSpec((tn, C), lambda i: (i, 0)),
        compiler_params=pltpu.CompilerParams(
            dimension_semantics=("parallel",),
            vmem_limit_bytes=budget),
    )(k_flat, q_flat, v_flat, *selectors)
    return out


# ------------------------------ glue (plain JAX) ------------------------------

def unfold(x, k, s):
    """PyTorch nn.Unfold semantics: (B, C, H, W) -> (B, C*k*k, L), dilation=1, pad=0."""
    B, C, H, W = x.shape
    oh = (H - k) // s + 1
    ow = (W - k) // s + 1
    cols = []
    for i in range(k):
        for j in range(k):
            patch = jax.lax.slice(
                x, (0, 0, i, j),
                (B, C, i + (oh - 1) * s + 1, j + (ow - 1) * s + 1),
                (1, 1, s, s),
            )  # (B, C, oh, ow)
            cols.append(patch.reshape(B, C, oh * ow))
    out = jnp.stack(cols, axis=2)                   # (B, C, k*k, L)
    return out.reshape(B, C * k * k, oh * ow)


class SA2DPallas:
    """JAX/Pallas port of the PyTorch SA2D module."""

    def __init__(self, in_channels, out_channels, kernel_size=3, stride=1, padding=1,
                 storage_dtype=jnp.bfloat16, key=None):
        assert padding != 0 and stride != 0
        self.in_channels = in_channels
        self.out_channels = out_channels
        self.kernel_size = kernel_size
        self.stride = stride
        self.padding = padding
        # Storage dtype for projected / unfolded K, Q, V (perf review: halves HBM traffic
        # on the 9x-unfolded path); all kernel arithmetic stays in f32.
        self.storage_dtype = storage_dtype
        # xavier_normal_ for 1x1 conv weights (fan_in=Cin, fan_out=Cout, gain=1)
        std = math.sqrt(2.0 / (in_channels + out_channels))
        k1, k2, k3 = jax.random.split(key, 3)
        self.key_w = std * jax.random.normal(k1, (out_channels, in_channels), jnp.float32)
        self.query_w = std * jax.random.normal(k2, (out_channels, in_channels), jnp.float32)
        self.value_w = std * jax.random.normal(k3, (out_channels, in_channels), jnp.float32)
        self.w_cat = jnp.concatenate([self.key_w, self.query_w, self.value_w], axis=0)

    def __call__(self, x):  # x: (B, Cin, H, W) float32
        B, Cin, H, W = x.shape
        p, k, s = self.padding, self.kernel_size, self.stride
        Co = self.out_channels
        xp = jnp.pad(x, ((0, 0), (0, 0), (p, p), (p, p)))

        # One fused projection on the padded input (input read once); the query
        # projection of the *unpadded* input is the interior crop of the padded one
        # (a bias-free pointwise conv commutes with zero padding).
        keys, queries_pad, values = fused_proj_pallas(
            xp, self.w_cat, Co, storage_dtype=self.storage_dtype)
        queries = queries_pad[:, :, p:p + H, p:p + W]

        keys_block = unfold(keys, k, s)                       # (B, Co*K2, L)
        values_block = unfold(values, k, s)                   # (B, Co*K2, L)
        # nn.Unfold with a 1x1 kernel is just a strided spatial subsample (perf review).
        queries_block = queries[:, :, ::s, ::s].reshape(B, Co, -1)   # (B, Co, L)

        L = keys_block.shape[-1]
        assert queries_block.shape[-1] == L
        K2 = k * k
        assert keys_block.shape[1] % K2 == 0
        C = keys_block.shape[1] // K2

        # Raw row-major reinterpretations matching torch .view() exactly (they
        # deliberately mix channel and patch indices).  These are free metadata reshapes,
        # and the attention kernel consumes the row-major (N, K2*C) / (N, C) layout
        # directly, so no HBM transpose pass is needed (perf review item 1).
        N = B * L
        k_flat = keys_block.reshape(N, K2 * C)
        v_flat = values_block.reshape(N, K2 * C)
        q_flat = queries_block.reshape(N, C)

        weighted = sa_attention_pallas(k_flat, q_flat, v_flat, K2, C)   # (N, C) f32

        # Final raw .view(batch, -1, width//s, height//s): the (W//s, H//s) ordering of
        # the original module (swapped for H != W) is preserved; it is again a free
        # reinterpretation of the row-major (B, L, C) buffer the kernel wrote.
        return weighted.reshape(B, -1, W // s, H // s)


# --------------------------- reference (plain JAX) ----------------------------

def reference_forward(mod, x):
    """Pure-JAX reference of the module, with the projections rounded to the same
    storage dtype as the Pallas path so the comparison isolates kernel correctness
    from the (deliberate) bf16 storage policy."""
    B, Cn, H, W = x.shape
    p, k, s = mod.padding, mod.kernel_size, mod.stride
    xp = jnp.pad(x, ((0, 0), (0, 0), (p, p), (p, p)))
    quant = lambda t: t.astype(mod.storage_dtype).astype(jnp.float32)
    keys = quant(jnp.einsum('oc,bchw->bohw', mod.key_w, xp))
    queries = quant(jnp.einsum('oc,bchw->bohw', mod.query_w, x))
    values = quant(jnp.einsum('oc,bchw->bohw', mod.value_w, xp))
    keys_block = unfold(keys, k, s)
    queries_block = unfold(queries, 1, s)
    values_block = unfold(values, k, s)
    L = keys_block.shape[-1]
    K2 = k * k
    q_r = queries_block.reshape(B, L, 1, -1)
    k_r = keys_block.reshape(B, L, K2, -1)
    v_r = values_block.reshape(B, L, K2, -1)
    logits = jnp.sum(k_r * q_r, axis=-1)                  # (B, L, K2)
    attn = jax.nn.softmax(logits, axis=2)
    wv = jnp.sum(attn[..., None] * v_r, axis=2)           # (B, L, C)
    return wv.reshape(B, -1, W // s, H // s)


if __name__ == "__main__":
    root = jax.random.PRNGKey(0)
    kx, kw = jax.random.split(root)
    B, Cin, Cout, H, W = 2, 4, 8, 16, 16
    x = jax.random.normal(kx, (B, Cin, H, W), jnp.float32)

    mod = SA2DPallas(Cin, Cout, kernel_size=3, stride=1, padding=1, key=kw)
    forward = jax.jit(mod.__call__)
    out = jax.block_until_ready(forward(x))

    assert out.shape == (B, Cout, W, H), out.shape
    ref = reference_forward(mod, x)
    # Tolerance covers the deliberate bfloat16 storage of K/Q/V (mirrored in the
    # reference) plus MXU-vs-XLA f32 matmul rounding differences.
    if not jnp.allclose(out, ref, atol=2e-2, rtol=2e-2):
        raise SystemExit("Pallas output mismatch vs pure-JAX reference")
    print("KERNEL_OK")
</pallas_src>

<mosaic_0001>
module attributes {stable_mosaic.version = 11 : i64} {
  func.func @_proj_kernel(%arg0: i32, %arg1: i32, %arg2: memref<1x4x384xf32, #tpu.memory_space<vmem>>, %arg3: memref<24x4xf32, #tpu.memory_space<vmem>>, %arg4: memref<1x8x384xbf16, #tpu.memory_space<vmem>>, %arg5: memref<1x8x384xbf16, #tpu.memory_space<vmem>>, %arg6: memref<1x8x384xbf16, #tpu.memory_space<vmem>>) attributes {dimension_semantics = [#tpu.dimension_semantics<parallel>, #tpu.dimension_semantics<parallel>], iteration_bounds = array<i64: 2, 1>, scalar_prefetch = 0 : i64, scratch_operands = 0 : i64, tpu.core_type = #tpu.core_type<tc>, window_params = [{transform_indices = @transform_0, window_bounds = array<i64: 1, 4, 384>}, {pipeline_mode = #tpu.pipeline_mode<synchronous>, transform_indices = @transform_1, window_bounds = array<i64: 24, 4>}, {transform_indices = @transform_2, window_bounds = array<i64: 1, 8, 384>}, {transform_indices = @transform_3, window_bounds = array<i64: 1, 8, 384>}, {transform_indices = @transform_4, window_bounds = array<i64: 1, 8, 384>}]} {
    %c0 = arith.constant 0 : index
    %c0_0 = arith.constant 0 : index
    %0 = vector.load %arg3[%c0, %c0_0] : memref<24x4xf32, #tpu.memory_space<vmem>>, vector<24x4xf32>
    %c0_1 = arith.constant 0 : index
    %c0_2 = arith.constant 0 : index
    %c0_3 = arith.constant 0 : index
    %1 = vector.load %arg2[%c0_1, %c0_2, %c0_3] : memref<1x4x384xf32, #tpu.memory_space<vmem>>, vector<1x4x384xf32>
    %2 = vector.shape_cast %1 : vector<1x4x384xf32> to vector<4x384xf32>
    %cst = arith.constant dense<0.000000e+00> : vector<24x384xf32>
    %3 = tpu.matmul %0, %2, %cst {dimension_numbers = #tpu.dot_dimension_numbers<[1], [0], [0], [1], [0, 0, 1, 1], [], []>} : vector<24x4xf32>, vector<4x384xf32>, vector<24x384xf32> -> vector<24x384xf32>
    %4 = vector.extract_strided_slice %3 {offsets = [0, 0], sizes = [8, 384], strides = [1, 1]} : vector<24x384xf32> to vector<8x384xf32>
    %5 = arith.truncf %4 : vector<8x384xf32> to vector<8x384xbf16>
    %c0_4 = arith.constant 0 : index
    %c0_5 = arith.constant 0 : index
    %c0_6 = arith.constant 0 : index
    %6 = vector.load %arg4[%c0_4, %c0_5, %c0_6] : memref<1x8x384xbf16, #tpu.memory_space<vmem>>, vector<1x8x384xbf16>
    %7 = vector.shape_cast %6 : vector<1x8x384xbf16> to vector<8x384xbf16>
    %8 = vector.shape_cast %5 : vector<8x384xbf16> to vector<1x8x384xbf16>
    tpu.vector_store %arg4[%c0_4, %c0_5, %c0_6], %8 {strides = array<i32>} : memref<1x8x384xbf16, #tpu.memory_space<vmem>>, vector<1x8x384xbf16>,
    %9 = vector.extract_strided_slice %3 {offsets = [8, 0], sizes = [8, 384], strides = [1, 1]} : vector<24x384xf32> to vector<8x384xf32>
    %10 = arith.truncf %9 : vector<8x384xf32> to vector<8x384xbf16>
    %c0_7 = arith.constant 0 : index
    %c0_8 = arith.constant 0 : index
    %c0_9 = arith.constant 0 : index
    %11 = vector.load %arg5[%c0_7, %c0_8, %c0_9] : memref<1x8x384xbf16, #tpu.memory_space<vmem>>, vector<1x8x384xbf16>
    %12 = vector.shape_cast %11 : vector<1x8x384xbf16> to vector<8x384xbf16>
    %13 = vector.shape_cast %10 : vector<8x384xbf16> to vector<1x8x384xbf16>
    tpu.vector_store %arg5[%c0_7, %c0_8, %c0_9], %13 {strides = array<i32>} : memref<1x8x384xbf16, #tpu.memory_space<vmem>>, vector<1x8x384xbf16>,
    %14 = vector.extract_strided_slice %3 {offsets = [16, 0], sizes = [8, 384], strides = [1, 1]} : vector<24x384xf32> to vector<8x384xf32>
    %15 = arith.truncf %14 : vector<8x384xf32> to vector<8x384xbf16>
    %c0_10 = arith.constant 0 : index
    %c0_11 = arith.constant 0 : index
    %c0_12 = arith.constant 0 : index
    %16 = vector.load %arg6[%c0_10, %c0_11, %c0_12] : memref<1x8x384xbf16, #tpu.memory_space<vmem>>, vector<1x8x384xbf16>
    %17 = vector.shape_cast %16 : vector<1x8x384xbf16> to vector<8x384xbf16>
    %18 = vector.shape_cast %15 : vector<8x384xbf16> to vector<1x8x384xbf16>
    tpu.vector_store %arg6[%c0_10, %c0_11, %c0_12], %18 {strides = array<i32>} : memref<1x8x384xbf16, #tpu.memory_space<vmem>>, vector<1x8x384xbf16>,
    return
  }
  func.func @transform_0(%arg0: i32, %arg1: i32) -> (i32, i32, i32) {
    %c0_i32 = arith.constant 0 : i32
    %c0_i32_0 = arith.constant 0 : i32
    return %arg0, %c0_i32, %arg1 : i32, i32, i32
  }
  func.func @transform_1(%arg0: i32, %arg1: i32) -> (i32, i32) {
    %c0_i32 = arith.constant 0 : i32
    %c0_i32_0 = arith.constant 0 : i32
    %c0_i32_1 = arith.constant 0 : i32
    return %c0_i32, %c0_i32_0 : i32, i32
  }
  func.func @transform_2(%arg0: i32, %arg1: i32) -> (i32, i32, i32) {
    %c0_i32 = arith.constant 0 : i32
    %c0_i32_0 = arith.constant 0 : i32
    return %arg0, %c0_i32, %arg1 : i32, i32, i32
  }
  func.func @transform_3(%arg0: i32, %arg1: i32) -> (i32, i32, i32) {
    %c0_i32 = arith.constant 0 : i32
    %c0_i32_0 = arith.constant 0 : i32
    return %arg0, %c0_i32, %arg1 : i32, i32, i32
  }
  func.func @transform_4(%arg0: i32, %arg1: i32) -> (i32, i32, i32) {
    %c0_i32 = arith.constant 0 : i32
    %c0_i32_0 = arith.constant 0 : i32
    return %arg0, %c0_i32, %arg1 : i32, i32, i32
  }
}

module attributes {stable_mosaic.version = 11 : i64} {
  func.func @_sa_kernel(%arg0: i32, %arg1: memref<512x72xbf16, #tpu.memory_space<vmem>>, %arg2: memref<512x8xbf16, #tpu.memory_space<vmem>>, %arg3: memref<512x72xbf16, #tpu.memory_space<vmem>>, %arg4: memref<8x72xf32, #tpu.memory_space<vmem>>, %arg5: memref<72x9xf32, #tpu.memory_space<vmem>>, %arg6: memref<9x72xf32, #tpu.memory_space<vmem>>, %arg7: memref<72x8xf32, #tpu.memory_space<vmem>>, %arg8: memref<512x8xf32, #tpu.memory_space<vmem>>) attributes {dimension_semantics = [#tpu.dimension_semantics<parallel>], iteration_bounds = array<i64: 1>, scalar_prefetch = 0 : i64, scratch_operands = 0 : i64, tpu.core_type = #tpu.core_type<tc>, window_params = [{transform_indices = @transform_0, window_bounds = array<i64: 512, 72>}, {transform_indices = @transform_1, window_bounds = array<i64: 512, 8>}, {transform_indices = @transform_2, window_bounds = array<i64: 512, 72>}, {pipeline_mode = #tpu.pipeline_mode<synchronous>, transform_indices = @transform_3, window_bounds = array<i64: 8, 72>}, {pipeline_mode = #tpu.pipeline_mode<synchronous>, transform_indices = @transform_4, window_bounds = array<i64: 72, 9>}, {pipeline_mode = #tpu.pipeline_mode<synchronous>, transform_indices = @transform_5, window_bounds = array<i64: 9, 72>}, {pipeline_mode = #tpu.pipeline_mode<synchronous>, transform_indices = @transform_6, window_bounds = array<i64: 72, 8>}, {transform_indices = @transform_7, window_bounds = array<i64: 512, 8>}]} {
    %c0 = arith.constant 0 : index
    %c0_0 = arith.constant 0 : index
    %0 = vector.load %arg1[%c0, %c0_0] : memref<512x72xbf16, #tpu.memory_space<vmem>>, vector<512x72xbf16>
    %1 = arith.extf %0 : vector<512x72xbf16> to vector<512x72xf32>
    %c0_1 = arith.constant 0 : index
    %c0_2 = arith.constant 0 : index
    %2 = vector.load %arg2[%c0_1, %c0_2] : memref<512x8xbf16, #tpu.memory_space<vmem>>, vector<512x8xbf16>
    %3 = arith.extf %2 : vector<512x8xbf16> to vector<512x8xf32>
    %c0_3 = arith.constant 0 : index
    %c0_4 = arith.constant 0 : index
    %4 = vector.load %arg3[%c0_3, %c0_4] : memref<512x72xbf16, #tpu.memory_space<vmem>>, vector<512x72xbf16>
    %5 = arith.extf %4 : vector<512x72xbf16> to vector<512x72xf32>
    %c0_5 = arith.constant 0 : index
    %c0_6 = arith.constant 0 : index
    %6 = vector.load %arg4[%c0_5, %c0_6] : memref<8x72xf32, #tpu.memory_space<vmem>>, vector<8x72xf32>
    %cst = arith.constant dense<0.000000e+00> : vector<512x72xf32>
    %7 = tpu.matmul %3, %6, %cst {dimension_numbers = #tpu.dot_dimension_numbers<[1], [0], [0], [1], [0, 0, 1, 1], [], []>} : vector<512x8xf32>, vector<8x72xf32>, vector<512x72xf32> -> vector<512x72xf32>
    %8 = arith.mulf %1, %7 : vector<512x72xf32>
    %c0_7 = arith.constant 0 : index
    %c0_8 = arith.constant 0 : index
    %9 = vector.load %arg5[%c0_7, %c0_8] : memref<72x9xf32, #tpu.memory_space<vmem>>, vector<72x9xf32>
    %cst_9 = arith.constant dense<0.000000e+00> : vector<512x9xf32>
    %10 = tpu.matmul %8, %9, %cst_9 {dimension_numbers = #tpu.dot_dimension_numbers<[1], [0], [0], [1], [0, 0, 1, 1], [], []>} : vector<512x72xf32>, vector<72x9xf32>, vector<512x9xf32> -> vector<512x9xf32>
    %cst_10 = arith.constant dense<0xFF800000> : vector<512xf32>
    %11 = vector.multi_reduction <maximumf>, %10, %cst_10 [1] : vector<512x9xf32> to vector<512xf32>
    %12 = vector.shape_cast %11 : vector<512xf32> to vector<512x1xf32>
    %13 = vector.broadcast %12 : vector<512x1xf32> to vector<512x9xf32>
    %14 = arith.subf %10, %13 : vector<512x9xf32>
    %15 = math.exp %14 : vector<512x9xf32>
    %cst_11 = arith.constant dense<0.000000e+00> : vector<512xf32>
    %16 = vector.multi_reduction <add>, %15, %cst_11 [1] : vector<512x9xf32> to vector<512xf32>
    %17 = vector.shape_cast %16 : vector<512xf32> to vector<512x1xf32>
    %18 = tpu.reciprocal %17 : vector<512x1xf32> -> vector<512x1xf32>
    %19 = vector.broadcast %18 : vector<512x1xf32> to vector<512x9xf32>
    %20 = arith.mulf %15, %19 : vector<512x9xf32>
    %c0_12 = arith.constant 0 : index
    %c0_13 = arith.constant 0 : index
    %21 = vector.load %arg6[%c0_12, %c0_13] : memref<9x72xf32, #tpu.memory_space<vmem>>, vector<9x72xf32>
    %cst_14 = arith.constant dense<0.000000e+00> : vector<512x72xf32>
    %22 = tpu.matmul %20, %21, %cst_14 {dimension_numbers = #tpu.dot_dimension_numbers<[1], [0], [0], [1], [0, 0, 1, 1], [], []>} : vector<512x9xf32>, vector<9x72xf32>, vector<512x72xf32> -> vector<512x72xf32>
    %23 = arith.mulf %22, %5 : vector<512x72xf32>
    %c0_15 = arith.constant 0 : index
    %c0_16 = arith.constant 0 : index
    %24 = vector.load %arg7[%c0_15, %c0_16] : memref<72x8xf32, #tpu.memory_space<vmem>>, vector<72x8xf32>
    %cst_17 = arith.constant dense<0.000000e+00> : vector<512x8xf32>
    %25 = tpu.matmul %23, %24, %cst_17 {dimension_numbers = #tpu.dot_dimension_numbers<[1], [0], [0], [1], [0, 0, 1, 1], [], []>} : vector<512x72xf32>, vector<72x8xf32>, vector<512x8xf32> -> vector<512x8xf32>
    %c0_18 = arith.constant 0 : index
    %c0_19 = arith.constant 0 : index
    %26 = vector.load %arg8[%c0_18, %c0_19] : memref<512x8xf32, #tpu.memory_space<vmem>>, vector<512x8xf32>
    tpu.vector_store %arg8[%c0_18, %c0_19], %25 {strides = array<i32>} : memref<512x8xf32, #tpu.memory_space<vmem>>, vector<512x8xf32>,
    return
  }
  func.func @transform_0(%arg0: i32) -> (i32, i32) {
    %c0_i32 = arith.constant 0 : i32
    %c0_i32_0 = arith.constant 0 : i32
    return %arg0, %c0_i32 : i32, i32
  }
  func.func @transform_1(%arg0: i32) -> (i32, i32) {
    %c0_i32 = arith.constant 0 : i32
    %c0_i32_0 = arith.constant 0 : i32
    return %arg0, %c0_i32 : i32, i32
  }
  func.func @transform_2(%arg0: i32) -> (i32, i32) {
    %c0_i32 = arith.constant 0 : i32
    %c0_i32_0 = arith.constant 0 : i32
    return %arg0, %c0_i32 : i32, i32
  }
  func.func @transform_3(%arg0: i32) -> (i32, i32) {
    %c0_i32 = arith.constant 0 : i32
    %c0_i32_0 = arith.constant 0 : i32
    %c0_i32_1 = arith.constant 0 : i32
    return %c0_i32, %c0_i32_0 : i32, i32
  }
  func.func @transform_4(%arg0: i32) -> (i32, i32) {
    %c0_i32 = arith.constant 0 : i32
    %c0_i32_0 = arith.constant 0 : i32
    %c0_i32_1 = arith.constant 0 : i32
    return %c0_i32, %c0_i32_0 : i32, i32
  }
  func.func @transform_5(%arg0: i32) -> (i32, i32) {
    %c0_i32 = arith.constant 0 : i32
    %c0_i32_0 = arith.constant 0 : i32
    %c0_i32_1 = arith.constant 0 : i32
    return %c0_i32, %c0_i32_0 : i32, i32
  }
  func.func @transform_6(%arg0: i32) -> (i32, i32) {
    %c0_i32 = arith.constant 0 : i32
    %c0_i32_0 = arith.constant 0 : i32
    %c0_i32_1 = arith.constant 0 : i32
    return %c0_i32, %c0_i32_0 : i32, i32
  }
  func.func @transform_7(%arg0: i32) -> (i32, i32) {
    %c0_i32 = arith.constant 0 : i32
    %c0_i32_0 = arith.constant 0 : i32
    return %arg0, %c0_i32 : i32, i32
  }
}

</mosaic_0001>

<llo_original>
// kernel: a_call__.2
$region0: #{a_call__.2}
  #allocation0 [shape = 'u32[]', space=smem, size = 0x4, offset = 0x4, fixed_abs, tag = 'smem constant byte address 0x4 - core index']
  #allocation1 [shape = 'u32[144,128]{1,0:T(1,128)}', space=vmem, size = 0x12000, scoped, tag = 'internal scratch']
  %s0 = inlined_call_operand.vmem [shape: f32[2,4,324], index: 0, kind: input, shape index: {}]
  %s1 = inlined_call_operand.vmem [shape: f32[24,4], index: 1, kind: input, shape index: {}]
  %s2 = inlined_call_operand.vmem [shape: bf16[2,8,324], index: 2, kind: output, shape index: {0}]
  %s3 = inlined_call_operand.vmem [shape: bf16[2,8,324], index: 3, kind: output, shape index: {1}]
  %s4 = inlined_call_operand.vmem [shape: bf16[2,8,324], index: 4, kind: output, shape index: {2}]
  %5 = xla_tuple %s2, %s3, %s4
  %s6 = sld [smem:[#allocation0]]
  $region57: #{a_call__.2} parent=0
    _
  %s8 = ssub.s32 1, %s6
  %s9 = scalar_select 0, %s8, %s6
  loop: start=0, step=1, limit=4
  $region2: #{a_call__.2} parent=0 // loop_pre_header
    _
  $region3: #{a_call__.2} parent=0 // loop_header
    %s11 = sphi 0, %s15
    %p12 = scmp.ge.s32.totalorder %s11, 4
    %s18 = sphi 0, %s30
    %s19 = sphi 0, %s26
    %s20 = sphi 0, %s18
    %s21 = sphi 0, %s19
    %s22 = sphi 0, %s20
    %s23 = sphi 0, %s21
    %s35 = sphi 0, %s37
    %s38 = sphi 0, %s35
    %s39 = sphi 0, %s38
    %s55 = sphi 0, %s39
    %s59 = sphi 0, %s59
    %s61 = sphi 0, %s59
    %s62 = sphi 0, %s61
    %s76 = sphi 0, %s62
    %s84 = sphi 0, %s86
    %s87 = sphi 0, %s84
    %s88 = sphi 0, %s87
    %s104 = sphi 0, %s88
    %s112 = sphi 0, %s114
    %s115 = sphi 0, %s112
    %s116 = sphi 0, %s115
    %s132 = sphi 0, %s116
    %s140 = sphi 0, %s142
    %s143 = sphi 0, %s140
    %s144 = sphi 0, %s143
    %s160 = sphi 0, %s144
  $region4: #{a_call__.2} parent=0 // loop_header_branch
    %14 = sbr.rel (%p12) target = $region8
  $region5: #{a_call__.2} parent=0 // loop_body
    %s16 = ssub.s32 %s11, 1
    %s17 = ssub.s32 %s11, 2
    %s24 = sadd.s32 1, %s19
    %p25 = scmp.ge.s32.totalorder %s24, 1
    %s26 = scalar_select %p25, 0, %s24
    %s27 = sadd.s32 1, %s18
    %s28 = scalar_select %p25, %s27, %s18
    %p29 = scmp.ge.s32.totalorder %s28, 2
    %s30 = scalar_select %p29, 0, %s28
    %s31 = ssub.s32 %s18, %s30
    %s32 = ssub.s32 %s19, %s26
    %s33 = sor.u32 %s31, %s32
    %p34 = scmp.eq.s32.totalorder %s33, 0
    %s36 = sadd.s32 %s35, 1
    %s37 = scalar_select %p34, %s35, %s36
    %p40 = pneg %p34
    %p41 = scmp.eq.s32.totalorder %s11, 1
    %p42 = por %p40, %p41
    %p43 = scmp.ne.s32.totalorder %s35, %s38
    %p44 = scmp.eq.s32.totalorder %s11, 0
    %p45 = por %p43, %p44
    %p46 = scmp.ne.s32.totalorder %s35, %s38
    %p47 = scmp.eq.s32.totalorder %s16, 1
    %p48 = por %p46, %p47
    %p49 = scmp.ne.s32.totalorder %s38, %s39
    %p50 = scmp.eq.s32.totalorder %s16, 0
    %p51 = por %p49, %p50
    %p52 = scmp.ne.s32.totalorder %s38, %s39
    %p53 = scmp.eq.s32.totalorder %s17, 1
    %p54 = por %p52, %p53
    %p56 = scmp.ne.s32.totalorder %s39, %s55
    %p57 = scmp.eq.s32.totalorder %s17, 0
    %p58 = por %p56, %p57
    %s60 = sadd.s32 %s59, 1
    %p63 = scmp.eq.s32.totalorder %s11, 1
    %p64 = scmp.ne.s32.totalorder %s59, %s61
    %p65 = scmp.eq.s32.totalorder %s11, 0
    %p66 = por %p64, %p65
    %p67 = scmp.ne.s32.totalorder %s59, %s61
    %p68 = scmp.eq.s32.totalorder %s16, 1
    %p69 = por %p67, %p68
    %p70 = scmp.ne.s32.totalorder %s61, %s62
    %p71 = scmp.eq.s32.totalorder %s16, 0
    %p72 = por %p70, %p71
    %p73 = scmp.ne.s32.totalorder %s61, %s62
    %p74 = scmp.eq.s32.totalorder %s17, 1
    %p75 = por %p73, %p74
    %p77 = scmp.ne.s32.totalorder %s62, %s76
    %p78 = scmp.eq.s32.totalorder %s17, 0
    %p79 = por %p77, %p78
    %s80 = ssub.s32 %s18, %s30
    %s81 = ssub.s32 %s19, %s26
    %s82 = sor.u32 %s80, %s81
    %p83 = scmp.eq.s32.totalorder %s82, 0
    %s85 = sadd.s32 %s84, 1
    %s86 = scalar_select %p83, %s84, %s85
    %p89 = pneg %p83
    %p90 = scmp.eq.s32.totalorder %s11, 1
    %p91 = por %p89, %p90
    %p92 = scmp.ne.s32.totalorder %s84, %s87
    %p93 = scmp.eq.s32.totalorder %s11, 0
    %p94 = por %p92, %p93
    %p95 = scmp.ne.s32.totalorder %s84, %s87
    %p96 = scmp.eq.s32.totalorder %s16, 1
    %p97 = por %p95, %p96
    %p98 = scmp.ne.s32.totalorder %s87, %s88
    %p99 = scmp.eq.s32.totalorder %s16, 0
    %p100 = por %p98, %p99
    %p101 = scmp.ne.s32.totalorder %s87, %s88
    %p102 = scmp.eq.s32.totalorder %s17, 1
    %p103 = por %p101, %p102
    %p105 = scmp.ne.s32.totalorder %s88, %s104
    %p106 = scmp.eq.s32.totalorder %s17, 0
    %p107 = por %p105, %p106
    %s108 = ssub.s32 %s18, %s30
    %s109 = ssub.s32 %s19, %s26
    %s110 = sor.u32 %s108, %s109
    %p111 = scmp.eq.s32.totalorder %s110, 0
    %s113 = sadd.s32 %s112, 1
    %s114 = scalar_select %p111, %s112, %s113
    %p117 = pneg %p111
    %p118 = scmp.eq.s32.totalorder %s11, 1
    %p119 = por %p117, %p118
    %p120 = scmp.ne.s32.totalorder %s112, %s115
    %p121 = scmp.eq.s32.totalorder %s11, 0
    %p122 = por %p120, %p121
    %p123 = scmp.ne.s32.totalorder %s112, %s115
    %p124 = scmp.eq.s32.totalorder %s16, 1
    %p125 = por %p123, %p124
    %p126 = scmp.ne.s32.totalorder %s115, %s116
    %p127 = scmp.eq.s32.totalorder %s16, 0
    %p128 = por %p126, %p127
    %p129 = scmp.ne.s32.totalorder %s115, %s116
    %p130 = scmp.eq.s32.totalorder %s17, 1
    %p131 = por %p129, %p130
    %p133 = scmp.ne.s32.totalorder %s116, %s132
    %p134 = scmp.eq.s32.totalorder %s17, 0
    %p135 = por %p133, %p134
    %s136 = ssub.s32 %s18, %s30
    %s137 = ssub.s32 %s19, %s26
    %s138 = sor.u32 %s136, %s137
    %p139 = scmp.eq.s32.totalorder %s138, 0
    %s141 = sadd.s32 %s140, 1
    %s142 = scalar_select %p139, %s140, %s141
    %p145 = pneg %p139
    %p146 = scmp.eq.s32.totalorder %s11, 1
    %p147 = por %p145, %p146
    %p148 = scmp.ne.s32.totalorder %s140, %s143
    %p149 = scmp.eq.s32.totalorder %s11, 0
    %p150 = por %p148, %p149
    %p151 = scmp.ne.s32.totalorder %s140, %s143
    %p152 = scmp.eq.s32.totalorder %s16, 1
    %p153 = por %p151, %p152
    %p154 = scmp.ne.s32.totalorder %s143, %s144
    %p155 = scmp.eq.s32.totalorder %s16, 0
    %p156 = por %p154, %p155
    %p157 = scmp.ne.s32.totalorder %s143, %s144
    %p158 = scmp.eq.s32.totalorder %s17, 1
    %p159 = por %p157, %p158
    %p161 = scmp.ne.s32.totalorder %s144, %s160
    %p162 = scmp.eq.s32.totalorder %s17, 0
    %p163 = por %p161, %p162
    %p164 = scmp.le.s32.totalorder 1, %s11
    %p165 = scmp.lt.s32.totalorder %s11, 3
    %p166 = pnand %p164, %p165
    %p167 = pneg %p166
    // Predicated region
    $region9: #{a_call__.2} parent=5 // pred_check
      _
    $region10: #{a_call__.2} parent=5 // pred_check_branch
      %169 = sbr.rel (%p166) target = $region12
    $region11: #{a_call__.2} parent=5 // pred_region
      %s170 = ssub.s32 %s11, 1
      // Predicated region
      $region13: #{a_call__.2} parent=11 // pred_check
        %p171 = pneg %p72
      $region14: #{a_call__.2} parent=11 // pred_check_branch
        %173 = sbr.rel (%p171) target = $region16
      $region15: #{a_call__.2} parent=11 // pred_region
        _
      $region16: #{a_call__.2} parent=11 // pred_fallthru
        _
    $region12: #{a_call__.2} parent=5 // pred_fallthru
      _
    %p174 = scmp.lt.s32.totalorder %s11, 2
    // Predicated region
    $region17: #{a_call__.2} parent=5 // pred_check
      %p175 = pneg %p174
    $region18: #{a_call__.2} parent=5 // pred_check_branch
      %177 = sbr.rel (%p175) target = $region20
    $region19: #{a_call__.2} parent=5 // pred_region
      // Predicated region
      $region21: #{a_call__.2} parent=19 // pred_check
        %p178 = pneg %p45
      $region22: #{a_call__.2} parent=19 // pred_check_branch
        %180 = sbr.rel (%p178) target = $region24
      $region23: #{a_call__.2} parent=19 // pred_region
        %s181 = smul.u32 3, %s19
        %p182 = scmp.lt.s32.totalorder %s18, 1
        %s183 = scalar_select %p182, %s18, 1
        %p184 = scmp.lt.s32.totalorder %s181, 2
        %s185 = scalar_select %p184, %s181, 2
        %s186 = smul.addr %s183, 3
        %s187 = sadd.s32 %s185, %s186
        %s188 = smul.addr %s187, 4
        %s189 = scalar_lea.vmem %s0, %s188
        %s190 = smul.u32 3, %s19
      $region24: #{a_call__.2} parent=19 // pred_fallthru
        _
    $region20: #{a_call__.2} parent=5 // pred_fallthru
      _
    %p191 = scmp.le.s32.totalorder 1, %s11
    %p192 = scmp.lt.s32.totalorder %s11, 3
    %p193 = pnand %p191, %p192
    %p194 = pneg %p193
    // Predicated region
    $region25: #{a_call__.2} parent=5 // pred_check
      _
    $region26: #{a_call__.2} parent=5 // pred_check_branch
      %196 = sbr.rel (%p193) target = $region28
    $region27: #{a_call__.2} parent=5 // pred_region
      %s197 = ssub.s32 %s11, 1
      %s198 = smul.u32 3, %s21
      %p199 = scmp.lt.s32.totalorder %s20, 1
      %s200 = scalar_select %p199, %s20, 1
      %p201 = scmp.lt.s32.totalorder %s198, 2
      %s202 = scalar_select %p201, %s198, 2
      %s203 = smul.addr %s200, 3
      %s204 = sadd.s32 %s202, %s203
      %s205 = smul.addr %s204, 4
      %s206 = scalar_lea.vmem %s0, %s205
      %p207 = pneg %p51
      %p208 = pneg %p48
      %p209 = pneg %p72
      %p210 = pneg %p69
      %p211 = pneg %p100
      %p212 = pneg %p97
      %s213 = smul.u32 3, %s21
      %p214 = scmp.lt.s32.totalorder %s20, 1
      %s215 = scalar_select %p214, %s20, 1
      %p216 = scmp.lt.s32.totalorder %s213, 2
      %s217 = scalar_select %p216, %s213, 2
      %s218 = smul.addr %s215, 3
      %s219 = sadd.s32 %s217, %s218
      %s220 = smul.addr %s219, 4
      %s221 = scalar_lea.vmem %s2, %s220
      %p222 = pneg %p128
      %p223 = pneg %p125
      %s224 = smul.u32 3, %s21
      %p225 = scmp.lt.s32.totalorder %s20, 1
      %s226 = scalar_select %p225, %s20, 1
      %p227 = scmp.lt.s32.totalorder %s224, 2
      %s228 = scalar_select %p227, %s224, 2
      %s229 = smul.addr %s226, 3
      %s230 = sadd.s32 %s228, %s229
      %s231 = smul.addr %s230, 4
      %s232 = scalar_lea.vmem %s3, %s231
      %p233 = pneg %p156
      %p234 = pneg %p153
      %s235 = smul.u32 3, %s21
      %p236 = scmp.lt.s32.totalorder %s20, 1
      %s237 = scalar_select %p236, %s20, 1
      %p238 = scmp.lt.s32.totalorder %s235, 2
      %s239 = scalar_select %p238, %s235, 2
      %s240 = smul.addr %s237, 3
      %s241 = sadd.s32 %s239, %s240
      %s242 = smul.addr %s241, 4
      %s243 = scalar_lea.vmem %s4, %s242
      %s244 = smul.u32 3, %s21
      %p245 = scmp.lt.s32.totalorder %s20, 1
      %s246 = scalar_select %p245, %s20, 1
      %p247 = scmp.lt.s32.totalorder %s244, 2
      %s248 = scalar_select %p247, %s244, 2
      %s249 = smul.addr %s246, 3
      %s250 = sadd.s32 %s248, %s249
      %s251 = smul.addr %s250, 4
      %s252 = scalar_lea.vmem %s0, %s251
      %s253 = smul.u32 3, %s21
      %s254 = smul.u32 3, %s21
      %p255 = scmp.lt.s32.totalorder %s20, 1
      %s256 = scalar_select %p255, %s20, 1
      %p257 = scmp.lt.s32.totalorder %s254, 2
      %s258 = scalar_select %p257, %s254, 2
      %s259 = smul.addr %s256, 3
      %s260 = sadd.s32 %s258, %s259
      %s261 = smul.addr %s260, 4
      %s262 = scalar_lea.vmem %s2, %s261
      %s263 = smul.u32 3, %s21
      %s264 = smul.u32 3, %s21
      %p265 = scmp.lt.s32.totalorder %s20, 1
      %s266 = scalar_select %p265, %s20, 1
      %p267 = scmp.lt.s32.totalorder %s264, 2
      %s268 = scalar_select %p267, %s264, 2
      %s269 = smul.addr %s266, 3
      %s270 = sadd.s32 %s268, %s269
      %s271 = smul.addr %s270, 4
      %s272 = scalar_lea.vmem %s3, %s271
      %s273 = smul.u32 3, %s21
      %s274 = smul.u32 3, %s21
      %p275 = scmp.lt.s32.totalorder %s20, 1
      %s276 = scalar_select %p275, %s20, 1
      %p277 = scmp.lt.s32.totalorder %s274, 2
      %s278 = scalar_select %p277, %s274, 2
      %s279 = smul.addr %s276, 3
      %s280 = sadd.s32 %s278, %s279
      %s281 = smul.addr %s280, 4
      %s282 = scalar_lea.vmem %s4, %s281
      %s283 = smul.u32 3, %s21
      %v284 = vld [vmem:[%s1] sm:$0xff]
      %v285 = vld [vmem:[%s1 + $0x8] sm:$0xff]
      %v286 = vld [vmem:[%s1 + $0x10] sm:$0xff]
      %v287 = vld [vmem:[%s252] sm:$0xff]
      %v288 = vld [vmem:[%s252 + $0x8] sm:$0xf]
      %v291 = vcombine.high %v287, %v287
      %vm292 = vcmask 31744
      %v294 = vsel %vm292, %v284, 0
      %v297 = vsel %vm292, %v285, 0
      %v300 = vsel %vm292, %v286, 0
      %vm302 = vcmask 1043456
      %v303 = vsel %vm302, %v287, 0
      %v305 = vsel %vm302, %v291, 0
      %v307 = vsel %vm302, %v288, 0
      %309 = vmatprep.subr.mxu0 %v305
      %310 = vmatpush1.msra.mxu0 %v303
      %311 = vmatprep.subr.mxu0 0.0
      %312 = vmatpush1.msra.mxu0 0.0
      %313 = vmatprep.subr.mxu0 0.0
      %314 = vmatpush1.msra.mxu0 0.0
      %315 = vmatprep.subr.mxu0 0.0
      %316 = vmatpush1.msra.mxu0 0.0
      %317 = vmatprep.subr.mxu0 0.0
      %318 = vmatpush1.msra.mxu0 0.0
      %319 = vmatprep.subr.mxu0 0.0
      %320 = vmatpush1.msra.mxu0 0.0
      %321 = vmatprep.subr.mxu0 0.0
      %322 = vmatpush1.msra.mxu0 0.0
      %323 = vmatprep.subr.mxu0 0.0
      %324 = vmatpush1.msra.mxu0 0.0
      %325 = vmatprep.subr.mxu0 0.0
      %326 = vmatpush1.msra.mxu0 0.0
      %327 = vmatprep.subr.mxu0 0.0
      %328 = vmatpush1.msra.mxu0 0.0
      %329 = vmatprep.subr.mxu0 0.0
      %330 = vmatpush1.msra.mxu0 0.0
      %331 = vmatprep.subr.mxu0 0.0
      %332 = vmatpush1.msra.mxu0 0.0
      %333 = vmatprep.subr.mxu0 0.0
      %334 = vmatpush1.msra.mxu0 0.0
      %335 = vmatprep.subr.mxu0 0.0
      %336 = vmatpush1.msra.mxu0 0.0
      %337 = vmatprep.subr.mxu0 0.0
      %338 = vmatpush1.msra.mxu0 0.0
      %339 = vmatprep.subr.mxu0 0.0
      %340 = vmatpush1.msra.mxu0 0.0
      %341 = vmatprep.subr.mxu0 0.0
      %342 = vmatpush1.msra.mxu0 0.0
      %343 = vmatprep.subr.mxu0 0.0
      %344 = vmatpush1.msra.mxu0 0.0
      %345 = vmatprep.subr.mxu0 0.0
      %346 = vmatpush1.msra.mxu0 0.0
      %347 = vmatprep.subr.mxu0 0.0
      %348 = vmatpush1.msra.mxu0 0.0
      %349 = vmatprep.subr.mxu0 0.0
      %350 = vmatpush1.msra.mxu0 0.0
      %351 = vmatprep.subr.mxu0 0.0
      %352 = vmatpush1.msra.mxu0 0.0
      %353 = vmatprep.subr.mxu0 0.0
      %354 = vmatpush1.msra.mxu0 0.0
      %355 = vmatprep.subr.mxu0 0.0
      %356 = vmatpush1.msra.mxu0 0.0
      %357 = vmatprep.subr.mxu0 0.0
      %358 = vmatpush1.msra.mxu0 0.0
      %359 = vmatprep.subr.mxu0 0.0
      %360 = vmatpush1.msra.mxu0 0.0
      %361 = vmatprep.subr.mxu0 0.0
      %362 = vmatpush1.msra.mxu0 0.0
      %363 = vmatprep.subr.mxu0 0.0
      %364 = vmatpush1.msra.mxu0 0.0
      %365 = vmatprep.subr.mxu0 0.0
      %366 = vmatpush1.msra.mxu0 0.0
      %367 = vmatprep.subr.mxu0 0.0
      %368 = vmatpush1.msra.mxu0 0.0
      %369 = vmatprep.subr.mxu0 0.0
      %370 = vmatpush1.msra.mxu0 0.0
      %371 = vmatprep.subr.mxu0 0.0
      %372 = vmatpush1.msra.mxu0 0.0
      %373 = vmatprep.mubr.f32.mxu0 0.0
      %374 = vmatmul.mubr.f32.gmra.mrb[0].mxu0 %v294
      %v375 = vpop.f32.mrb[0].mxu0
      %v376 = vadd.f32 0.0, %v375
      %v377 = vpop.f32.mrb[0].mxu0
      %v378 = vadd.f32 0.0, %v377
      %379 = vmatprep.mubr.f32.mxu0 0.0
      %380 = vmatmul.mubr.f32.gmra.mrb[0].mxu0 %v297
      %v381 = vpop.f32.mrb[0].mxu0
      %v382 = vadd.f32 0.0, %v381
      %v383 = vpop.f32.mrb[0].mxu0
      %v384 = vadd.f32 0.0, %v383
      %385 = vmatprep.mubr.f32.mxu0 0.0
      %386 = vmatmul.mubr.f32.gmra.mrb[0].mxu0 %v300
      %v387 = vpop.f32.mrb[0].mxu0
      %v388 = vadd.f32 0.0, %v387
      %v389 = vpop.f32.mrb[0].mxu0
      %v390 = vadd.f32 0.0, %v389
      %391 = vdwg.mxu0
      %392 = vmatprep.subr.mxu0 0.0
      %393 = vmatpush1.msra.mxu0 %v307
      %394 = vmatprep.subr.mxu0 0.0
      %395 = vmatpush1.msra.mxu0 0.0
      %396 = vmatprep.subr.mxu0 0.0
      %397 = vmatpush1.msra.mxu0 0.0
      %398 = vmatprep.subr.mxu0 0.0
      %399 = vmatpush1.msra.mxu0 0.0
      %400 = vmatprep.subr.mxu0 0.0
      %401 = vmatpush1.msra.mxu0 0.0
      %402 = vmatprep.subr.mxu0 0.0
      %403 = vmatpush1.msra.mxu0 0.0
      %404 = vmatprep.subr.mxu0 0.0
      %405 = vmatpush1.msra.mxu0 0.0
      %406 = vmatprep.subr.mxu0 0.0
      %407 = vmatpush1.msra.mxu0 0.0
      %408 = vmatprep.subr.mxu0 0.0
      %409 = vmatpush1.msra.mxu0 0.0
      %410 = vmatprep.subr.mxu0 0.0
      %411 = vmatpush1.msra.mxu0 0.0
      %412 = vmatprep.subr.mxu0 0.0
      %413 = vmatpush1.msra.mxu0 0.0
      %414 = vmatprep.subr.mxu0 0.0
      %415 = vmatpush1.msra.mxu0 0.0
      %416 = vmatprep.subr.mxu0 0.0
      %417 = vmatpush1.msra.mxu0 0.0
      %418 = vmatprep.subr.mxu0 0.0
      %419 = vmatpush1.msra.mxu0 0.0
      %420 = vmatprep.subr.mxu0 0.0
      %421 = vmatpush1.msra.mxu0 0.0
      %422 = vmatprep.subr.mxu0 0.0
      %423 = vmatpush1.msra.mxu0 0.0
      %424 = vmatprep.subr.mxu0 0.0
      %425 = vmatpush1.msra.mxu0 0.0
      %426 = vmatprep.subr.mxu0 0.0
      %427 = vmatpush1.msra.mxu0 0.0
      %428 = vmatprep.subr.mxu0 0.0
      %429 = vmatpush1.msra.mxu0 0.0
      %430 = vmatprep.subr.mxu0 0.0
      %431 = vmatpush1.msra.mxu0 0.0
      %432 = vmatprep.subr.mxu0 0.0
      %433 = vmatpush1.msra.mxu0 0.0
      %434 = vmatprep.subr.mxu0 0.0
      %435 = vmatpush1.msra.mxu0 0.0
      %436 = vmatprep.subr.mxu0 0.0
      %437 = vmatpush1.msra.mxu0 0.0
      %438 = vmatprep.subr.mxu0 0.0
      %439 = vmatpush1.msra.mxu0 0.0
      %440 = vmatprep.subr.mxu0 0.0
      %441 = vmatpush1.msra.mxu0 0.0
      %442 = vmatprep.subr.mxu0 0.0
      %443 = vmatpush1.msra.mxu0 0.0
      %444 = vmatprep.subr.mxu0 0.0
      %445 = vmatpush1.msra.mxu0 0.0
      %446 = vmatprep.subr.mxu0 0.0
      %447 = vmatpush1.msra.mxu0 0.0
      %448 = vmatprep.subr.mxu0 0.0
      %449 = vmatpush1.msra.mxu0 0.0
      %450 = vmatprep.subr.mxu0 0.0
      %451 = vmatpush1.msra.mxu0 0.0
      %452 = vmatprep.subr.mxu0 0.0
      %453 = vmatpush1.msra.mxu0 0.0
      %454 = vmatprep.subr.mxu0 0.0
      %455 = vmatpush1.msra.mxu0 0.0
      %456 = vmatprep.mubr.f32.mxu0 0.0
      %457 = vmatmul.mubr.f32.gmra.mrb[0].mxu0 %v294
      %v458 = vpop.f32.mrb[0].mxu0
      %v459 = vadd.f32 0.0, %v458
      %v460 = vpop.f32.mrb[0].mxu0
      %461 = vmatprep.mubr.f32.mxu0 0.0
      %462 = vmatmul.mubr.f32.gmra.mrb[0].mxu0 %v297
      %v463 = vpop.f32.mrb[0].mxu0
      %v464 = vadd.f32 0.0, %v463
      %v465 = vpop.f32.mrb[0].mxu0
      %466 = vmatprep.mubr.f32.mxu0 0.0
      %467 = vmatmul.mubr.f32.gmra.mrb[0].mxu0 %v300
      %v468 = vpop.f32.mrb[0].mxu0
      %v469 = vadd.f32 0.0, %v468
      %v470 = vpop.f32.mrb[0].mxu0
      %471 = vdwg.mxu0
      %v472 = vpack.c.bf16 %v376, %v376
      %v473 = vpack.c.bf16 %v378, %v378
      %v474 = vpack.c.bf16 %v459, %v459
      %v478 = vunpack.c.l.b16 %v472
      %v479 = vunpack.c.l.b16 %v473
      %v480 = vunpack.c.l.b16 %v474
      %v481 = vpack.c.b16 %v479, %v478
      %v482 = vpack.c.b16 %v480, %v480
      %485 = vst [vmem:[%s262] sm:$0xff] %v481
      %486 = vst [vmem:[%s262 + $0x8] sm:$0xf] %v482
      %v487 = vpack.c.bf16 %v382, %v382
      %v488 = vpack.c.bf16 %v384, %v384
      %v489 = vpack.c.bf16 %v464, %v464
      %v493 = vunpack.c.l.b16 %v487
      %v494 = vunpack.c.l.b16 %v488
      %v495 = vunpack.c.l.b16 %v489
      %v496 = vpack.c.b16 %v494, %v493
      %v497 = vpack.c.b16 %v495, %v495
      %500 = vst [vmem:[%s272] sm:$0xff] %v496
      %501 = vst [vmem:[%s272 + $0x8] sm:$0xf] %v497
      %v502 = vpack.c.bf16 %v388, %v388
      %v503 = vpack.c.bf16 %v390, %v390
      %v504 = vpack.c.bf16 %v469, %v469
      %v508 = vunpack.c.l.b16 %v502
      %v509 = vunpack.c.l.b16 %v503
      %v510 = vunpack.c.l.b16 %v504
      %v511 = vpack.c.b16 %v509, %v508
      %v512 = vpack.c.b16 %v510, %v510
      %515 = vst [vmem:[%s282] sm:$0xff] %v511
      %516 = vst [vmem:[%s282 + $0x8] sm:$0xf] %v512
      %s517 = smul.u32 3, %s21
      %p518 = scmp.lt.s32.totalorder %s20, 1
      %s519 = scalar_select %p518, %s20, 1
      %p520 = scmp.lt.s32.totalorder %s517, 2
      %s521 = scalar_select %p520, %s517, 2
      %s522 = smul.addr %s519, 3
      %s523 = sadd.s32 %s521, %s522
      %s524 = smul.addr %s523, 4
      %s525 = scalar_lea.vmem %s2, %s524
      %s526 = smul.u32 3, %s21
      %p527 = scmp.lt.s32.totalorder %s20, 1
      %s528 = scalar_select %p527, %s20, 1
      %p529 = scmp.lt.s32.totalorder %s526, 2
      %s530 = scalar_select %p529, %s526, 2
      %s531 = smul.addr %s528, 3
      %s532 = sadd.s32 %s530, %s531
      %s533 = smul.addr %s532, 4
      %s534 = scalar_lea.vmem %s3, %s533
      %s535 = smul.u32 3, %s21
      %p536 = scmp.lt.s32.totalorder %s20, 1
      %s537 = scalar_select %p536, %s20, 1
      %p538 = scmp.lt.s32.totalorder %s535, 2
      %s539 = scalar_select %p538, %s535, 2
      %s540 = smul.addr %s537, 3
      %s541 = sadd.s32 %s539, %s540
      %s542 = smul.addr %s541, 4
      %s543 = scalar_lea.vmem %s4, %s542
      // Predicated region
      $region29: #{a_call__.2} parent=27 // pred_check
        %p544 = pneg %p97
      $region30: #{a_call__.2} parent=27 // pred_check_branch
        %546 = sbr.rel (%p544) target = $region32
      $region31: #{a_call__.2} parent=27 // pred_region
        %s547 = smul.u32 3, %s21
      $region32: #{a_call__.2} parent=27 // pred_fallthru
        _
      // Predicated region
      $region33: #{a_call__.2} parent=27 // pred_check
        %p548 = pneg %p125
      $region34: #{a_call__.2} parent=27 // pred_check_branch
        %550 = sbr.rel (%p548) target = $region36
      $region35: #{a_call__.2} parent=27 // pred_region
        %s551 = smul.u32 3, %s21
      $region36: #{a_call__.2} parent=27 // pred_fallthru
        _
      // Predicated region
      $region37: #{a_call__.2} parent=27 // pred_check
        %p552 = pneg %p153
      $region38: #{a_call__.2} parent=27 // pred_check_branch
        %554 = sbr.rel (%p552) target = $region40
      $region39: #{a_call__.2} parent=27 // pred_region
        %s555 = smul.u32 3, %s21
      $region40: #{a_call__.2} parent=27 // pred_fallthru
        _
    $region28: #{a_call__.2} parent=5 // pred_fallthru
      _
    %p556 = scmp.le.s32.totalorder 2, %s11
    // Predicated region
    $region41: #{a_call__.2} parent=5 // pred_check
      %p557 = pneg %p556
    $region42: #{a_call__.2} parent=5 // pred_check_branch
      %559 = sbr.rel (%p557) target = $region44
    $region43: #{a_call__.2} parent=5 // pred_region
      %s560 = ssub.s32 %s11, 2
      // Predicated region
      $region45: #{a_call__.2} parent=43 // pred_check
        %p561 = pneg %p103
      $region46: #{a_call__.2} parent=43 // pred_check_branch
        %563 = sbr.rel (%p561) target = $region48
      $region47: #{a_call__.2} parent=43 // pred_region
        %s564 = smul.u32 3, %s23
        %p565 = scmp.lt.s32.totalorder %s22, 1
        %s566 = scalar_select %p565, %s22, 1
        %p567 = scmp.lt.s32.totalorder %s564, 2
        %s568 = scalar_select %p567, %s564, 2
        %s569 = smul.addr %s566, 3
        %s570 = sadd.s32 %s568, %s569
        %s571 = smul.addr %s570, 4
        %s572 = scalar_lea.vmem %s2, %s571
      $region48: #{a_call__.2} parent=43 // pred_fallthru
        _
      // Predicated region
      $region49: #{a_call__.2} parent=43 // pred_check
        %p573 = pneg %p131
      $region50: #{a_call__.2} parent=43 // pred_check_branch
        %575 = sbr.rel (%p573) target = $region52
      $region51: #{a_call__.2} parent=43 // pred_region
        %s576 = smul.u32 3, %s23
        %p577 = scmp.lt.s32.totalorder %s22, 1
        %s578 = scalar_select %p577, %s22, 1
        %p579 = scmp.lt.s32.totalorder %s576, 2
        %s580 = scalar_select %p579, %s576, 2
        %s581 = smul.addr %s578, 3
        %s582 = sadd.s32 %s580, %s581
        %s583 = smul.addr %s582, 4
        %s584 = scalar_lea.vmem %s3, %s583
      $region52: #{a_call__.2} parent=43 // pred_fallthru
        _
      // Predicated region
      $region53: #{a_call__.2} parent=43 // pred_check
        %p585 = pneg %p159
      $region54: #{a_call__.2} parent=43 // pred_check_branch
        %587 = sbr.rel (%p585) target = $region56
      $region55: #{a_call__.2} parent=43 // pred_region
        %s588 = smul.u32 3, %s23
        %p589 = scmp.lt.s32.totalorder %s22, 1
        %s590 = scalar_select %p589, %s22, 1
        %p591 = scmp.lt.s32.totalorder %s588, 2
        %s592 = scalar_select %p591, %s588, 2
        %s593 = smul.addr %s590, 3
        %s594 = sadd.s32 %s592, %s593
        %s595 = smul.addr %s594, 4
        %s596 = scalar_lea.vmem %s4, %s595
      $region56: #{a_call__.2} parent=43 // pred_fallthru
        _
    $region44: #{a_call__.2} parent=5 // pred_fallthru
      _
  $region6: #{a_call__.2} parent=0 // loop_footer
    %s15 = sadd.s32 1, %s11
  $region7: #{a_call__.2} parent=0 // loop_footer_branch
    %10 = sbr.rel target = $region3
  $region8: #{a_call__.2} parent=0 // loop_exit
    _

// kernel: a_call__.3
$region0: #{a_call__.3}
  #allocation0 [shape = 'u32[]', space=smem, size = 0x4, offset = 0x4, fixed_abs, tag = 'smem constant byte address 0x4 - core index']
  #allocation1 [shape = 'u32[144,128]{1,0:T(1,128)}', space=vmem, size = 0x12000, scoped, tag = 'internal scratch']
  %s0 = inlined_call_operand.vmem [shape: bf16[512,72], index: 0, kind: input, shape index: {}]
  %s1 = inlined_call_operand.vmem [shape: bf16[512,8], index: 1, kind: input, shape index: {}]
  %s2 = inlined_call_operand.vmem [shape: bf16[512,72], index: 2, kind: input, shape index: {}]
  %s3 = inlined_call_operand.vmem [shape: f32[8,72], index: 3, kind: input, shape index: {}]
  %s4 = inlined_call_operand.vmem [shape: f32[72,9], index: 4, kind: input, shape index: {}]
  %s5 = inlined_call_operand.vmem [shape: f32[9,72], index: 5, kind: input, shape index: {}]
  %s6 = inlined_call_operand.vmem [shape: f32[72,8], index: 6, kind: input, shape index: {}]
  %s7 = inlined_call_operand.vmem [shape: f32[512,8], index: 7, kind: output, shape index: {}]
  %s8 = sld [smem:[#allocation0]]
  $region38: #{a_call__.3} parent=0
    _
  %s10 = ssub.s32 1, %s8
  %s11 = scalar_select 0, %s10, %s8
  // Predicated region
  $region2: #{a_call__.3} parent=0 // pred_check
    _
  $region3: #{a_call__.3} parent=0 // pred_check_branch
    %13 = sbr.rel (0) target = $region5
  $region4: #{a_call__.3} parent=0 // pred_region
    _
  $region5: #{a_call__.3} parent=0 // pred_fallthru
    _
  // Predicated region
  $region6: #{a_call__.3} parent=0 // pred_check
    _
  $region7: #{a_call__.3} parent=0 // pred_check_branch
    %15 = sbr.rel (0) target = $region9
  $region8: #{a_call__.3} parent=0 // pred_region
    _
  $region9: #{a_call__.3} parent=0 // pred_fallthru
    _
  // Predicated region
  $region10: #{a_call__.3} parent=0 // pred_check
    _
  $region11: #{a_call__.3} parent=0 // pred_check_branch
    %17 = sbr.rel (0) target = $region13
  $region12: #{a_call__.3} parent=0 // pred_region
    _
  $region13: #{a_call__.3} parent=0 // pred_fallthru
    _
  // Predicated region
  $region14: #{a_call__.3} parent=0 // pred_check
    _
  $region15: #{a_call__.3} parent=0 // pred_check_branch
    %19 = sbr.rel (0) target = $region17
  $region16: #{a_call__.3} parent=0 // pred_region
    _
  $region17: #{a_call__.3} parent=0 // pred_fallthru
    _
  // Predicated region
  $region18: #{a_call__.3} parent=0 // pred_check
    _
  $region19: #{a_call__.3} parent=0 // pred_check_branch
    %21 = sbr.rel (0) target = $region21
  $region20: #{a_call__.3} parent=0 // pred_region
    _
  $region21: #{a_call__.3} parent=0 // pred_fallthru
    _
  // Predicated region
  $region22: #{a_call__.3} parent=0 // pred_check
    _
  $region23: #{a_call__.3} parent=0 // pred_check_branch
    %23 = sbr.rel (0) target = $region25
  $region24: #{a_call__.3} parent=0 // pred_region
    _
  $region25: #{a_call__.3} parent=0 // pred_fallthru
    _
  // Predicated region
  $region26: #{a_call__.3} parent=0 // pred_check
    _
  $region27: #{a_call__.3} parent=0 // pred_check_branch
    %25 = sbr.rel (0) target = $region29
  $region28: #{a_call__.3} parent=0 // pred_region
    _
  $region29: #{a_call__.3} parent=0 // pred_fallthru
    _
  %v26 = vld [vmem:[%s0] sm:$0xf]
  %v27 = vld [vmem:[%s0 + $0x4] sm:$0xf]
  %v28 = vld [vmem:[%s0 + $0x8] sm:$0xf]
  %v29 = vld [vmem:[%s0 + $0xc] sm:$0xf]
  %v30 = vld [vmem:[%s0 + $0x10] sm:$0xf]
  %v31 = vld [vmem:[%s0 + $0x14] sm:$0xf]
  %v32 = vld [vmem:[%s0 + $0x18] sm:$0xf]
  %v33 = vld [vmem:[%s0 + $0x1c] sm:$0xf]
  %v34 = vld [vmem:[%s0 + $0x20] sm:$0xf]
  %v35 = vld [vmem:[%s0 + $0x24] sm:$0xf]
  %v36 = vld [vmem:[%s0 + $0x28] sm:$0xf]
  %v37 = vld [vmem:[%s0 + $0x2c] sm:$0xf]
  %v38 = vld [vmem:[%s0 + $0x30] sm:$0xf]
  %v39 = vld [vmem:[%s0 + $0x34] sm:$0xf]
  %v40 = vld [vmem:[%s0 + $0x38] sm:$0xf]
  %v41 = vld [vmem:[%s0 + $0x3c] sm:$0xf]
  %v42 = vld [vmem:[%s0 + $0x40] sm:$0xf]
  %v43 = vld [vmem:[%s0 + $0x44] sm:$0xf]
  %v44 = vld [vmem:[%s0 + $0x48] sm:$0xf]
  %v45 = vld [vmem:[%s0 + $0x4c] sm:$0xf]
  %v46 = vld [vmem:[%s0 + $0x50] sm:$0xf]
  %v47 = vld [vmem:[%s0 + $0x54] sm:$0xf]
  %v48 = vld [vmem:[%s0 + $0x58] sm:$0xf]
  %v49 = vld [vmem:[%s0 + $0x5c] sm:$0xf]
  %v50 = vld [vmem:[%s0 + $0x60] sm:$0xf]
  %v51 = vld [vmem:[%s0 + $0x64] sm:$0xf]
  %v52 = vld [vmem:[%s0 + $0x68] sm:$0xf]
  %v53 = vld [vmem:[%s0 + $0x6c] sm:$0xf]
  %v54 = vld [vmem:[%s0 + $0x70] sm:$0xf]
  %v55 = vld [vmem:[%s0 + $0x74] sm:$0xf]
  %v56 = vld [vmem:[%s0 + $0x78] sm:$0xf]
  %v57 = vld [vmem:[%s0 + $0x7c] sm:$0xf]
  %v58 = vld [vmem:[%s0 + $0x80] sm:$0xf]
  %v59 = vld [vmem:[%s0 + $0x84] sm:$0xf]
  %v60 = vld [vmem:[%s0 + $0x88] sm:$0xf]
  %v61 = vld [vmem:[%s0 + $0x8c] sm:$0xf]
  %v62 = vld [vmem:[%s0 + $0x90] sm:$0xf]
  %v63 = vld [vmem:[%s0 + $0x94] sm:$0xf]
  %v64 = vld [vmem:[%s0 + $0x98] sm:$0xf]
  %v65 = vld [vmem:[%s0 + $0x9c] sm:$0xf]
  %v66 = vld [vmem:[%s0 + $0xa0] sm:$0xf]
  %v67 = vld [vmem:[%s0 + $0xa4] sm:$0xf]
  %v68 = vld [vmem:[%s0 + $0xa8] sm:$0xf]
  %v69 = vld [vmem:[%s0 + $0xac] sm:$0xf]
  %v70 = vld [vmem:[%s0 + $0xb0] sm:$0xf]
  %v71 = vld [vmem:[%s0 + $0xb4] sm:$0xf]
  %v72 = vld [vmem:[%s0 + $0xb8] sm:$0xf]
  %v73 = vld [vmem:[%s0 + $0xbc] sm:$0xf]
  %v74 = vld [vmem:[%s0 + $0xc0] sm:$0xf]
  %v75 = vld [vmem:[%s0 + $0xc4] sm:$0xf]
  %v76 = vld [vmem:[%s0 + $0xc8] sm:$0xf]
  %v77 = vld [vmem:[%s0 + $0xcc] sm:$0xf]
  %v78 = vld [vmem:[%s0 + $0xd0] sm:$0xf]
  %v79 = vld [vmem:[%s0 + $0xd4] sm:$0xf]
  %v80 = vld [vmem:[%s0 + $0xd8] sm:$0xf]
  %v81 = vld [vmem:[%s0 + $0xdc] sm:$0xf]
  %v82 = vld [vmem:[%s0 + $0xe0] sm:$0xf]
  %v83 = vld [vmem:[%s0 + $0xe4] sm:$0xf]
  %v84 = vld [vmem:[%s0 + $0xe8] sm:$0xf]
  %v85 = vld [vmem:[%s0 + $0xec] sm:$0xf]
  %v86 = vld [vmem:[%s0 + $0xf0] sm:$0xf]
  %v87 = vld [vmem:[%s0 + $0xf4] sm:$0xf]
  %v88 = vld [vmem:[%s0 + $0xf8] sm:$0xf]
  %v89 = vld [vmem:[%s0 + $0xfc] sm:$0xf]
  %v90 = vunpack.c.l.bf16 %v26
  %v91 = vunpack.c.l.bf16 %v27
  %v92 = vunpack.c.l.bf16 %v28
  %v93 = vunpack.c.l.bf16 %v29
  %v94 = vunpack.c.l.bf16 %v30
  %v95 = vunpack.c.l.bf16 %v31
  %v96 = vunpack.c.l.bf16 %v32
  %v97 = vunpack.c.l.bf16 %v33
  %v98 = vunpack.c.l.bf16 %v34
  %v99 = vunpack.c.l.bf16 %v35
  %v100 = vunpack.c.l.bf16 %v36
  %v101 = vunpack.c.l.bf16 %v37
  %v102 = vunpack.c.l.bf16 %v38
  %v103 = vunpack.c.l.bf16 %v39
  %v104 = vunpack.c.l.bf16 %v40
  %v105 = vunpack.c.l.bf16 %v41
  %v106 = vunpack.c.l.bf16 %v42
  %v107 = vunpack.c.l.bf16 %v43
  %v108 = vunpack.c.l.bf16 %v44
  %v109 = vunpack.c.l.bf16 %v45
  %v110 = vunpack.c.l.bf16 %v46
  %v111 = vunpack.c.l.bf16 %v47
  %v112 = vunpack.c.l.bf16 %v48
  %v113 = vunpack.c.l.bf16 %v49
  %v114 = vunpack.c.l.bf16 %v50
  %v115 = vunpack.c.l.bf16 %v51
  %v116 = vunpack.c.l.bf16 %v52
  %v117 = vunpack.c.l.bf16 %v53
  %v118 = vunpack.c.l.bf16 %v54
  %v119 = vunpack.c.l.bf16 %v55
  %v120 = vunpack.c.l.bf16 %v56
  %v121 = vunpack.c.l.bf16 %v57
  %v122 = vunpack.c.l.bf16 %v58
  %v123 = vunpack.c.l.bf16 %v59
  %v124 = vunpack.c.l.bf16 %v60
  %v125 = vunpack.c.l.bf16 %v61
  %v126 = vunpack.c.l.bf16 %v62
  %v127 = vunpack.c.l.bf16 %v63
  %v128 = vunpack.c.l.bf16 %v64
  %v129 = vunpack.c.l.bf16 %v65
  %v130 = vunpack.c.l.bf16 %v66
  %v131 = vunpack.c.l.bf16 %v67
  %v132 = vunpack.c.l.bf16 %v68
  %v133 = vunpack.c.l.bf16 %v69
  %v134 = vunpack.c.l.bf16 %v70
  %v135 = vunpack.c.l.bf16 %v71
  %v136 = vunpack.c.l.bf16 %v72
  %v137 = vunpack.c.l.bf16 %v73
  %v138 = vunpack.c.l.bf16 %v74
  %v139 = vunpack.c.l.bf16 %v75
  %v140 = vunpack.c.l.bf16 %v76
  %v141 = vunpack.c.l.bf16 %v77
  %v142 = vunpack.c.l.bf16 %v78
  %v143 = vunpack.c.l.bf16 %v79
  %v144 = vunpack.c.l.bf16 %v80
  %v145 = vunpack.c.l.bf16 %v81
  %v146 = vunpack.c.l.bf16 %v82
  %v147 = vunpack.c.l.bf16 %v83
  %v148 = vunpack.c.l.bf16 %v84
  %v149 = vunpack.c.l.bf16 %v85
  %v150 = vunpack.c.l.bf16 %v86
  %v151 = vunpack.c.l.bf16 %v87
  %v152 = vunpack.c.l.bf16 %v88
  %v153 = vunpack.c.l.bf16 %v89
  %v154 = vld [vmem:[%s1] sm:$0xf]
  %v155 = vld [vmem:[%s1 + $0x4] sm:$0xf]
  %v156 = vld [vmem:[%s1 + $0x8] sm:$0xf]
  %v157 = vld [vmem:[%s1 + $0xc] sm:$0xf]
  %v158 = vld [vmem:[%s1 + $0x10] sm:$0xf]
  %v159 = vld [vmem:[%s1 + $0x14] sm:$0xf]
  %v160 = vld [vmem:[%s1 + $0x18] sm:$0xf]
  %v161 = vld [vmem:[%s1 + $0x1c] sm:$0xf]
  %v162 = vld [vmem:[%s1 + $0x20] sm:$0xf]
  %v163 = vld [vmem:[%s1 + $0x24] sm:$0xf]
  %v164 = vld [vmem:[%s1 + $0x28] sm:$0xf]
  %v165 = vld [vmem:[%s1 + $0x2c] sm:$0xf]
  %v166 = vld [vmem:[%s1 + $0x30] sm:$0xf]
  %v167 = vld [vmem:[%s1 + $0x34] sm:$0xf]
  %v168 = vld [vmem:[%s1 + $0x38] sm:$0xf]
  %v169 = vld [vmem:[%s1 + $0x3c] sm:$0xf]
  %v170 = vld [vmem:[%s1 + $0x40] sm:$0xf]
  %v171 = vld [vmem:[%s1 + $0x44] sm:$0xf]
  %v172 = vld [vmem:[%s1 + $0x48] sm:$0xf]
  %v173 = vld [vmem:[%s1 + $0x4c] sm:$0xf]
  %v174 = vld [vmem:[%s1 + $0x50] sm:$0xf]
  %v175 = vld [vmem:[%s1 + $0x54] sm:$0xf]
  %v176 = vld [vmem:[%s1 + $0x58] sm:$0xf]
  %v177 = vld [vmem:[%s1 + $0x5c] sm:$0xf]
  %v178 = vld [vmem:[%s1 + $0x60] sm:$0xf]
  %v179 = vld [vmem:[%s1 + $0x64] sm:$0xf]
  %v180 = vld [vmem:[%s1 + $0x68] sm:$0xf]
  %v181 = vld [vmem:[%s1 + $0x6c] sm:$0xf]
  %v182 = vld [vmem:[%s1 + $0x70] sm:$0xf]
  %v183 = vld [vmem:[%s1 + $0x74] sm:$0xf]
  %v184 = vld [vmem:[%s1 + $0x78] sm:$0xf]
  %v185 = vld [vmem:[%s1 + $0x7c] sm:$0xf]
  %v186 = vld [vmem:[%s1 + $0x80] sm:$0xf]
  %v187 = vld [vmem:[%s1 + $0x84] sm:$0xf]
  %v188 = vld [vmem:[%s1 + $0x88] sm:$0xf]
  %v189 = vld [vmem:[%s1 + $0x8c] sm:$0xf]
  %v190 = vld [vmem:[%s1 + $0x90] sm:$0xf]
  %v191 = vld [vmem:[%s1 + $0x94] sm:$0xf]
  %v192 = vld [vmem:[%s1 + $0x98] sm:$0xf]
  %v193 = vld [vmem:[%s1 + $0x9c] sm:$0xf]
  %v194 = vld [vmem:[%s1 + $0xa0] sm:$0xf]
  %v195 = vld [vmem:[%s1 + $0xa4] sm:$0xf]
  %v196 = vld [vmem:[%s1 + $0xa8] sm:$0xf]
  %v197 = vld [vmem:[%s1 + $0xac] sm:$0xf]
  %v198 = vld [vmem:[%s1 + $0xb0] sm:$0xf]
  %v199 = vld [vmem:[%s1 + $0xb4] sm:$0xf]
  %v200 = vld [vmem:[%s1 + $0xb8] sm:$0xf]
  %v201 = vld [vmem:[%s1 + $0xbc] sm:$0xf]
  %v202 = vld [vmem:[%s1 + $0xc0] sm:$0xf]
  %v203 = vld [vmem:[%s1 + $0xc4] sm:$0xf]
  %v204 = vld [vmem:[%s1 + $0xc8] sm:$0xf]
  %v205 = vld [vmem:[%s1 + $0xcc] sm:$0xf]
  %v206 = vld [vmem:[%s1 + $0xd0] sm:$0xf]
  %v207 = vld [vmem:[%s1 + $0xd4] sm:$0xf]
  %v208 = vld [vmem:[%s1 + $0xd8] sm:$0xf]
  %v209 = vld [vmem:[%s1 + $0xdc] sm:$0xf]
  %v210 = vld [vmem:[%s1 + $0xe0] sm:$0xf]
  %v211 = vld [vmem:[%s1 + $0xe4] sm:$0xf]
  %v212 = vld [vmem:[%s1 + $0xe8] sm:$0xf]
  %v213 = vld [vmem:[%s1 + $0xec] sm:$0xf]
  %v214 = vld [vmem:[%s1 + $0xf0] sm:$0xf]
  %v215 = vld [vmem:[%s1 + $0xf4] sm:$0xf]
  %v216 = vld [vmem:[%s1 + $0xf8] sm:$0xf]
  %v217 = vld [vmem:[%s1 + $0xfc] sm:$0xf]
  %v218 = vunpack.c.l.bf16 %v154
  %v219 = vunpack.c.l.bf16 %v155
  %v220 = vunpack.c.l.bf16 %v156
  %v221 = vunpack.c.l.bf16 %v157
  %v222 = vunpack.c.l.bf16 %v158
  %v223 = vunpack.c.l.bf16 %v159
  %v224 = vunpack.c.l.bf16 %v160
  %v225 = vunpack.c.l.bf16 %v161
  %v226 = vunpack.c.l.bf16 %v162
  %v227 = vunpack.c.l.bf16 %v163
  %v228 = vunpack.c.l.bf16 %v164
  %v229 = vunpack.c.l.bf16 %v165
  %v230 = vunpack.c.l.bf16 %v166
  %v231 = vunpack.c.l.bf16 %v167
  %v232 = vunpack.c.l.bf16 %v168
  %v233 = vunpack.c.l.bf16 %v169
  %v234 = vunpack.c.l.bf16 %v170
  %v235 = vunpack.c.l.bf16 %v171
  %v236 = vunpack.c.l.bf16 %v172
  %v237 = vunpack.c.l.bf16 %v173
  %v238 = vunpack.c.l.bf16 %v174
  %v239 = vunpack.c.l.bf16 %v175
  %v240 = vunpack.c.l.bf16 %v176
  %v241 = vunpack.c.l.bf16 %v177
  %v242 = vunpack.c.l.bf16 %v178
  %v243 = vunpack.c.l.bf16 %v179
  %v244 = vunpack.c.l.bf16 %v180
  %v245 = vunpack.c.l.bf16 %v181
  %v246 = vunpack.c.l.bf16 %v182
  %v247 = vunpack.c.l.bf16 %v183
  %v248 = vunpack.c.l.bf16 %v184
  %v249 = vunpack.c.l.bf16 %v185
  %v250 = vunpack.c.l.bf16 %v186
  %v251 = vunpack.c.l.bf16 %v187
  %v252 = vunpack.c.l.bf16 %v188
  %v253 = vunpack.c.l.bf16 %v189
  %v254 = vunpack.c.l.bf16 %v190
  %v255 = vunpack.c.l.bf16 %v191
  %v256 = vunpack.c.l.bf16 %v192
  %v257 = vunpack.c.l.bf16 %v193
  %v258 = vunpack.c.l.bf16 %v194
  %v259 = vunpack.c.l.bf16 %v195
  %v260 = vunpack.c.l.bf16 %v196
  %v261 = vunpack.c.l.bf16 %v197
  %v262 = vunpack.c.l.bf16 %v198
  %v263 = vunpack.c.l.bf16 %v199
  %v264 = vunpack.c.l.bf16 %v200
  %v265 = vunpack.c.l.bf16 %v201
  %v266 = vunpack.c.l.bf16 %v202
  %v267 = vunpack.c.l.bf16 %v203
  %v268 = vunpack.c.l.bf16 %v204
  %v269 = vunpack.c.l.bf16 %v205
  %v270 = vunpack.c.l.bf16 %v206
  %v271 = vunpack.c.l.bf16 %v207
  %v272 = vunpack.c.l.bf16 %v208
  %v273 = vunpack.c.l.bf16 %v209
  %v274 = vunpack.c.l.bf16 %v210
  %v275 = vunpack.c.l.bf16 %v211
  %v276 = vunpack.c.l.bf16 %v212
  %v277 = vunpack.c.l.bf16 %v213
  %v278 = vunpack.c.l.bf16 %v214
  %v279 = vunpack.c.l.bf16 %v215
  %v280 = vunpack.c.l.bf16 %v216
  %v281 = vunpack.c.l.bf16 %v217
  %v282 = vld [vmem:[%s2] sm:$0xf]
  %v283 = vld [vmem:[%s2 + $0x4] sm:$0xf]
  %v284 = vld [vmem:[%s2 + $0x8] sm:$0xf]
  %v285 = vld [vmem:[%s2 + $0xc] sm:$0xf]
  %v286 = vld [vmem:[%s2 + $0x10] sm:$0xf]
  %v287 = vld [vmem:[%s2 + $0x14] sm:$0xf]
  %v288 = vld [vmem:[%s2 + $0x18] sm:$0xf]
  %v289 = vld [vmem:[%s2 + $0x1c] sm:$0xf]
  %v290 = vld [vmem:[%s2 + $0x20] sm:$0xf]
  %v291 = vld [vmem:[%s2 + $0x24] sm:$0xf]
  %v292 = vld [vmem:[%s2 + $0x28] sm:$0xf]
  %v293 = vld [vmem:[%s2 + $0x2c] sm:$0xf]
  %v294 = vld [vmem:[%s2 + $0x30] sm:$0xf]
  %v295 = vld [vmem:[%s2 + $0x34] sm:$0xf]
  %v296 = vld [vmem:[%s2 + $0x38] sm:$0xf]
  %v297 = vld [vmem:[%s2 + $0x3c] sm:$0xf]
  %v298 = vld [vmem:[%s2 + $0x40] sm:$0xf]
  %v299 = vld [vmem:[%s2 + $0x44] sm:$0xf]
  %v300 = vld [vmem:[%s2 + $0x48] sm:$0xf]
  %v301 = vld [vmem:[%s2 + $0x4c] sm:$0xf]
  %v302 = vld [vmem:[%s2 + $0x50] sm:$0xf]
  %v303 = vld [vmem:[%s2 + $0x54] sm:$0xf]
  %v304 = vld [vmem:[%s2 + $0x58] sm:$0xf]
  %v305 = vld [vmem:[%s2 + $0x5c] sm:$0xf]
  %v306 = vld [vmem:[%s2 + $0x60] sm:$0xf]
  %v307 = vld [vmem:[%s2 + $0x64] sm:$0xf]
  %v308 = vld [vmem:[%s2 + $0x68] sm:$0xf]
  %v309 = vld [vmem:[%s2 + $0x6c] sm:$0xf]
  %v310 = vld [vmem:[%s2 + $0x70] sm:$0xf]
  %v311 = vld [vmem:[%s2 + $0x74] sm:$0xf]
  %v312 = vld [vmem:[%s2 + $0x78] sm:$0xf]
  %v313 = vld [vmem:[%s2 + $0x7c] sm:$0xf]
  %v314 = vld [vmem:[%s2 + $0x80] sm:$0xf]
  %v315 = vld [vmem:[%s2 + $0x84] sm:$0xf]
  %v316 = vld [vmem:[%s2 + $0x88] sm:$0xf]
  %v317 = vld [vmem:[%s2 + $0x8c] sm:$0xf]
  %v318 = vld [vmem:[%s2 + $0x90] sm:$0xf]
  %v319 = vld [vmem:[%s2 + $0x94] sm:$0xf]
  %v320 = vld [vmem:[%s2 + $0x98] sm:$0xf]
  %v321 = vld [vmem:[%s2 + $0x9c] sm:$0xf]
  %v322 = vld [vmem:[%s2 + $0xa0] sm:$0xf]
  %v323 = vld [vmem:[%s2 + $0xa4] sm:$0xf]
  %v324 = vld [vmem:[%s2 + $0xa8] sm:$0xf]
  %v325 = vld [vmem:[%s2 + $0xac] sm:$0xf]
  %v326 = vld [vmem:[%s2 + $0xb0] sm:$0xf]
  %v327 = vld [vmem:[%s2 + $0xb4] sm:$0xf]
  %v328 = vld [vmem:[%s2 + $0xb8] sm:$0xf]
  %v329 = vld [vmem:[%s2 + $0xbc] sm:$0xf]
  %v330 = vld [vmem:[%s2 + $0xc0] sm:$0xf]
  %v331 = vld [vmem:[%s2 + $0xc4] sm:$0xf]
  %v332 = vld [vmem:[%s2 + $0xc8] sm:$0xf]
  %v333 = vld [vmem:[%s2 + $0xcc] sm:$0xf]
  %v334 = vld [vmem:[%s2 + $0xd0] sm:$0xf]
  %v335 = vld [vmem:[%s2 + $0xd4] sm:$0xf]
  %v336 = vld [vmem:[%s2 + $0xd8] sm:$0xf]
  %v337 = vld [vmem:[%s2 + $0xdc] sm:$0xf]
  %v338 = vld [vmem:[%s2 + $0xe0] sm:$0xf]
  %v339 = vld [vmem:[%s2 + $0xe4] sm:$0xf]
  %v340 = vld [vmem:[%s2 + $0xe8] sm:$0xf]
  %v341 = vld [vmem:[%s2 + $0xec] sm:$0xf]
  %v342 = vld [vmem:[%s2 + $0xf0] sm:$0xf]
  %v343 = vld [vmem:[%s2 + $0xf4] sm:$0xf]
  %v344 = vld [vmem:[%s2 + $0xf8] sm:$0xf]
  %v345 = vld [vmem:[%s2 + $0xfc] sm:$0xf]
  %v346 = vunpack.c.l.bf16 %v282
  %v347 = vunpack.c.l.bf16 %v283
  %v348 = vunpack.c.l.bf16 %v284
  %v349 = vunpack.c.l.bf16 %v285
  %v350 = vunpack.c.l.bf16 %v286
  %v351 = vunpack.c.l.bf16 %v287
  %v352 = vunpack.c.l.bf16 %v288
  %v353 = vunpack.c.l.bf16 %v289
  %v354 = vunpack.c.l.bf16 %v290
  %v355 = vunpack.c.l.bf16 %v291
  %v356 = vunpack.c.l.bf16 %v292
  %v357 = vunpack.c.l.bf16 %v293
  %v358 = vunpack.c.l.bf16 %v294
  %v359 = vunpack.c.l.bf16 %v295
  %v360 = vunpack.c.l.bf16 %v296
  %v361 = vunpack.c.l.bf16 %v297
  %v362 = vunpack.c.l.bf16 %v298
  %v363 = vunpack.c.l.bf16 %v299
  %v364 = vunpack.c.l.bf16 %v300
  %v365 = vunpack.c.l.bf16 %v301
  %v366 = vunpack.c.l.bf16 %v302
  %v367 = vunpack.c.l.bf16 %v303
  %v368 = vunpack.c.l.bf16 %v304
  %v369 = vunpack.c.l.bf16 %v305
  %v370 = vunpack.c.l.bf16 %v306
  %v371 = vunpack.c.l.bf16 %v307
  %v372 = vunpack.c.l.bf16 %v308
  %v373 = vunpack.c.l.bf16 %v309
  %v374 = vunpack.c.l.bf16 %v310
  %v375 = vunpack.c.l.bf16 %v311
  %v376 = vunpack.c.l.bf16 %v312
  %v377 = vunpack.c.l.bf16 %v313
  %v378 = vunpack.c.l.bf16 %v314
  %v379 = vunpack.c.l.bf16 %v315
  %v380 = vunpack.c.l.bf16 %v316
  %v381 = vunpack.c.l.bf16 %v317
  %v382 = vunpack.c.l.bf16 %v318
  %v383 = vunpack.c.l.bf16 %v319
  %v384 = vunpack.c.l.bf16 %v320
  %v385 = vunpack.c.l.bf16 %v321
  %v386 = vunpack.c.l.bf16 %v322
  %v387 = vunpack.c.l.bf16 %v323
  %v388 = vunpack.c.l.bf16 %v324
  %v389 = vunpack.c.l.bf16 %v325
  %v390 = vunpack.c.l.bf16 %v326
  %v391 = vunpack.c.l.bf16 %v327
  %v392 = vunpack.c.l.bf16 %v328
  %v393 = vunpack.c.l.bf16 %v329
  %v394 = vunpack.c.l.bf16 %v330
  %v395 = vunpack.c.l.bf16 %v331
  %v396 = vunpack.c.l.bf16 %v332
  %v397 = vunpack.c.l.bf16 %v333
  %v398 = vunpack.c.l.bf16 %v334
  %v399 = vunpack.c.l.bf16 %v335
  %v400 = vunpack.c.l.bf16 %v336
  %v401 = vunpack.c.l.bf16 %v337
  %v402 = vunpack.c.l.bf16 %v338
  %v403 = vunpack.c.l.bf16 %v339
  %v404 = vunpack.c.l.bf16 %v340
  %v405 = vunpack.c.l.bf16 %v341
  %v406 = vunpack.c.l.bf16 %v342
  %v407 = vunpack.c.l.bf16 %v343
  %v408 = vunpack.c.l.bf16 %v344
  %v409 = vunpack.c.l.bf16 %v345
  %v410 = vld [vmem:[%s3] sm:$0xff]
  %vm411 = vcmask 64512
  %v413 = vsel %vm411, %v218, 0
  %v416 = vsel %vm411, %v219, 0
  %v419 = vsel %vm411, %v220, 0
  %v422 = vsel %vm411, %v221, 0
  %v425 = vsel %vm411, %v222, 0
  %v428 = vsel %vm411, %v223, 0
  %v431 = vsel %vm411, %v224, 0
  %v434 = vsel %vm411, %v225, 0
  %v437 = vsel %vm411, %v226, 0
  %v440 = vsel %vm411, %v227, 0
  %v443 = vsel %vm411, %v228, 0
  %v446 = vsel %vm411, %v229, 0
  %v449 = vsel %vm411, %v230, 0
  %v452 = vsel %vm411, %v231, 0
  %v455 = vsel %vm411, %v232, 0
  %v458 = vsel %vm411, %v233, 0
  %v461 = vsel %vm411, %v234, 0
  %v464 = vsel %vm411, %v235, 0
  %v467 = vsel %vm411, %v236, 0
  %v470 = vsel %vm411, %v237, 0
  %v473 = vsel %vm411, %v238, 0
  %v476 = vsel %vm411, %v239, 0
  %v479 = vsel %vm411, %v240, 0
  %v482 = vsel %vm411, %v241, 0
  %v485 = vsel %vm411, %v242, 0
  %v488 = vsel %vm411, %v243, 0
  %v491 = vsel %vm411, %v244, 0
  %v494 = vsel %vm411, %v245, 0
  %v497 = vsel %vm411, %v246, 0
  %v500 = vsel %vm411, %v247, 0
  %v503 = vsel %vm411, %v248, 0
  %v506 = vsel %vm411, %v249, 0
  %v509 = vsel %vm411, %v250, 0
  %v512 = vsel %vm411, %v251, 0
  %v515 = vsel %vm411, %v252, 0
  %v518 = vsel %vm411, %v253, 0
  %v521 = vsel %vm411, %v254, 0
  %v524 = vsel %vm411, %v255, 0
  %v527 = vsel %vm411, %v256, 0
  %v530 = vsel %vm411, %v257, 0
  %v533 = vsel %vm411, %v258, 0
  %v536 = vsel %vm411, %v259, 0
  %v539 = vsel %vm411, %v260, 0
  %v542 = vsel %vm411, %v261, 0
  %v545 = vsel %vm411, %v262, 0
  %v548 = vsel %vm411, %v263, 0
  %v551 = vsel %vm411, %v264, 0
  %v554 = vsel %vm411, %v265, 0
  %v557 = vsel %vm411, %v266, 0
  %v560 = vsel %vm411, %v267, 0
  %v563 = vsel %vm411, %v268, 0
  %v566 = vsel %vm411, %v269, 0
  %v569 = vsel %vm411, %v270, 0
  %v572 = vsel %vm411, %v271, 0
  %v575 = vsel %vm411, %v272, 0
  %v578 = vsel %vm411, %v273, 0
  %v581 = vsel %vm411, %v274, 0
  %v584 = vsel %vm411, %v275, 0
  %v587 = vsel %vm411, %v276, 0
  %v590 = vsel %vm411, %v277, 0
  %v593 = vsel %vm411, %v278, 0
  %v596 = vsel %vm411, %v279, 0
  %v599 = vsel %vm411, %v280, 0
  %v602 = vsel %vm411, %v281, 0
  %604 = vmatprep.subr.mxu0 0.0
  %605 = vmatpush1.msra.mxu0 %v410
  %606 = vmatprep.subr.mxu0 0.0
  %607 = vmatpush1.msra.mxu0 0.0
  %608 = vmatprep.subr.mxu0 0.0
  %609 = vmatpush1.msra.mxu0 0.0
  %610 = vmatprep.subr.mxu0 0.0
  %611 = vmatpush1.msra.mxu0 0.0
  %612 = vmatprep.subr.mxu0 0.0
  %613 = vmatpush1.msra.mxu0 0.0
  %614 = vmatprep.subr.mxu0 0.0
  %615 = vmatpush1.msra.mxu0 0.0
  %616 = vmatprep.subr.mxu0 0.0
  %617 = vmatpush1.msra.mxu0 0.0
  %618 = vmatprep.subr.mxu0 0.0
  %619 = vmatpush1.msra.mxu0 0.0
  %620 = vmatprep.subr.mxu0 0.0
  %621 = vmatpush1.msra.mxu0 0.0
  %622 = vmatprep.subr.mxu0 0.0
  %623 = vmatpush1.msra.mxu0 0.0
  %624 = vmatprep.subr.mxu0 0.0
  %625 = vmatpush1.msra.mxu0 0.0
  %626 = vmatprep.subr.mxu0 0.0
  %627 = vmatpush1.msra.mxu0 0.0
  %628 = vmatprep.subr.mxu0 0.0
  %629 = vmatpush1.msra.mxu0 0.0
  %630 = vmatprep.subr.mxu0 0.0
  %631 = vmatpush1.msra.mxu0 0.0
  %632 = vmatprep.subr.mxu0 0.0
  %633 = vmatpush1.msra.mxu0 0.0
  %634 = vmatprep.subr.mxu0 0.0
  %635 = vmatpush1.msra.mxu0 0.0
  %636 = vmatprep.subr.mxu0 0.0
  %637 = vmatpush1.msra.mxu0 0.0
  %638 = vmatprep.subr.mxu0 0.0
  %639 = vmatpush1.msra.mxu0 0.0
  %640 = vmatprep.subr.mxu0 0.0
  %641 = vmatpush1.msra.mxu0 0.0
  %642 = vmatprep.subr.mxu0 0.0
  %643 = vmatpush1.msra.mxu0 0.0
  %644 = vmatprep.subr.mxu0 0.0
  %645 = vmatpush1.msra.mxu0 0.0
  %646 = vmatprep.subr.mxu0 0.0
  %647 = vmatpush1.msra.mxu0 0.0
  %648 = vmatprep.subr.mxu0 0.0
  %649 = vmatpush1.msra.mxu0 0.0
  %650 = vmatprep.subr.mxu0 0.0
  %651 = vmatpush1.msra.mxu0 0.0
  %652 = vmatprep.subr.mxu0 0.0
  %653 = vmatpush1.msra.mxu0 0.0
  %654 = vmatprep.subr.mxu0 0.0
  %655 = vmatpush1.msra.mxu0 0.0
  %656 = vmatprep.subr.mxu0 0.0
  %657 = vmatpush1.msra.mxu0 0.0
  %658 = vmatprep.subr.mxu0 0.0
  %659 = vmatpush1.msra.mxu0 0.0
  %660 = vmatprep.subr.mxu0 0.0
  %661 = vmatpush1.msra.mxu0 0.0
  %662 = vmatprep.subr.mxu0 0.0
  %663 = vmatpush1.msra.mxu0 0.0
  %664 = vmatprep.subr.mxu0 0.0
  %665 = vmatpush1.msra.mxu0 0.0
  %666 = vmatprep.subr.mxu0 0.0
  %667 = vmatpush1.msra.mxu0 0.0
  %668 = vmatprep.mubr.f32.mxu0 0.0
  %669 = vmatmul.mubr.f32.gmra.mrb[0].mxu0 %v413
  %v670 = vpop.f32.mrb[0].mxu0
  %v671 = vadd.f32 0.0, %v670
  %v672 = vpop.f32.mrb[0].mxu0
  %673 = vmatprep.mubr.f32.mxu0 0.0
  %674 = vmatmul.mubr.f32.gmra.mrb[0].mxu0 %v416
  %v675 = vpop.f32.mrb[0].mxu0
  %v676 = vadd.f32 0.0, %v675
  %v677 = vpop.f32.mrb[0].mxu0
  %678 = vmatprep.mubr.f32.mxu0 0.0
  %679 = vmatmul.mubr.f32.gmra.mrb[0].mxu0 %v419
  %v680 = vpop.f32.mrb[0].mxu0
  %v681 = vadd.f32 0.0, %v680
  %v682 = vpop.f32.mrb[0].mxu0
  %683 = vmatprep.mubr.f32.mxu0 0.0
  %684 = vmatmul.mubr.f32.gmra.mrb[0].mxu0 %v422
  %v685 = vpop.f32.mrb[0].mxu0
  %v686 = vadd.f32 0.0, %v685
  %v687 = vpop.f32.mrb[0].mxu0
  %688 = vmatprep.mubr.f32.mxu0 0.0
  %689 = vmatmul.mubr.f32.gmra.mrb[0].mxu0 %v425
  %v690 = vpop.f32.mrb[0].mxu0
  %v691 = vadd.f32 0.0, %v690
  %v692 = vpop.f32.mrb[0].mxu0
  %693 = vmatprep.mubr.f32.mxu0 0.0
  %694 = vmatmul.mubr.f32.gmra.mrb[0].mxu0 %v428
  %v695 = vpop.f32.mrb[0].mxu0
  %v696 = vadd.f32 0.0, %v695
  %v697 = vpop.f32.mrb[0].mxu0
  %698 = vmatprep.mubr.f32.mxu0 0.0
  %699 = vmatmul.mubr.f32.gmra.mrb[0].mxu0 %v431
  %v700 = vpop.f32.mrb[0].mxu0
  %v701 = vadd.f32 0.0, %v700
  %v702 = vpop.f32.mrb[0].mxu0
  %703 = vmatprep.mubr.f32.mxu0 0.0
  %704 = vmatmul.mubr.f32.gmra.mrb[0].mxu0 %v434
  %v705 = vpop.f32.mrb[0].mxu0
  %v706 = vadd.f32 0.0, %v705
  %v707 = vpop.f32.mrb[0].mxu0
  %708 = vmatprep.mubr.f32.mxu0 0.0
  %709 = vmatmul.mubr.f32.gmra.mrb[0].mxu0 %v437
  %v710 = vpop.f32.mrb[0].mxu0
  %v711 = vadd.f32 0.0, %v710
  %v712 = vpop.f32.mrb[0].mxu0
  %713 = vmatprep.mubr.f32.mxu0 0.0
  %714 = vmatmul.mubr.f32.gmra.mrb[0].mxu0 %v440
  %v715 = vpop.f32.mrb[0].mxu0
  %v716 = vadd.f32 0.0, %v715
  %v717 = vpop.f32.mrb[0].mxu0
  %718 = vmatprep.mubr.f32.mxu0 0.0
  %719 = vmatmul.mubr.f32.gmra.mrb[0].mxu0 %v443
  %v720 = vpop.f32.mrb[0].mxu0
  %v721 = vadd.f32 0.0, %v720
  %v722 = vpop.f32.mrb[0].mxu0
  %723 = vmatprep.mubr.f32.mxu0 0.0
  %724 = vmatmul.mubr.f32.gmra.mrb[0].mxu0 %v446
  %v725 = vpop.f32.mrb[0].mxu0
  %v726 = vadd.f32 0.0, %v725
  %v727 = vpop.f32.mrb[0].mxu0
  %728 = vmatprep.mubr.f32.mxu0 0.0
  %729 = vmatmul.mubr.f32.gmra.mrb[0].mxu0 %v449
  %v730 = vpop.f32.mrb[0].mxu0
  %v731 = vadd.f32 0.0, %v730
  %v732 = vpop.f32.mrb[0].mxu0
  %733 = vmatprep.mubr.f32.mxu0 0.0
  %734 = vmatmul.mubr.f32.gmra.mrb[0].mxu0 %v452
  %v735 = vpop.f32.mrb[0].mxu0
  %v736 = vadd.f32 0.0, %v735
  %v737 = vpop.f32.mrb[0].mxu0
  %738 = vmatprep.mubr.f32.mxu0 0.0
  %739 = vmatmul.mubr.f32.gmra.mrb[0].mxu0 %v455
  %v740 = vpop.f32.mrb[0].mxu0
  %v741 = vadd.f32 0.0, %v740
  %v742 = vpop.f32.mrb[0].mxu0
  %743 = vmatprep.mubr.f32.mxu0 0.0
  %744 = vmatmul.mubr.f32.gmra.mrb[0].mxu0 %v458
  %v745 = vpop.f32.mrb[0].mxu0
  %v746 = vadd.f32 0.0, %v745
  %v747 = vpop.f32.mrb[0].mxu0
  %748 = vmatprep.mubr.f32.mxu0 0.0
  %749 = vmatmul.mubr.f32.gmra.mrb[0].mxu0 %v461
  %v750 = vpop.f32.mrb[0].mxu0
  %v751 = vadd.f32 0.0, %v750
  %v752 = vpop.f32.mrb[0].mxu0
  %753 = vmatprep.mubr.f32.mxu0 0.0
  %754 = vmatmul.mubr.f32.gmra.mrb[0].mxu0 %v464
  %v755 = vpop.f32.mrb[0].mxu0
  %v756 = vadd.f32 0.0, %v755
  %v757 = vpop.f32.mrb[0].mxu0
  %758 = vmatprep.mubr.f32.mxu0 0.0
  %759 = vmatmul.mubr.f32.gmra.mrb[0].mxu0 %v467
  %v760 = vpop.f32.mrb[0].mxu0
  %v761 = vadd.f32 0.0, %v760
  %v762 = vpop.f32.mrb[0].mxu0
  %763 = vmatprep.mubr.f32.mxu0 0.0
  %764 = vmatmul.mubr.f32.gmra.mrb[0].mxu0 %v470
  %v765 = vpop.f32.mrb[0].mxu0
  %v766 = vadd.f32 0.0, %v765
  %v767 = vpop.f32.mrb[0].mxu0
  %768 = vmatprep.mubr.f32.mxu0 0.0
  %769 = vmatmul.mubr.f32.gmra.mrb[0].mxu0 %v473
  %v770 = vpop.f32.mrb[0].mxu0
  %v771 = vadd.f32 0.0, %v770
  %v772 = vpop.f32.mrb[0].mxu0
  %773 = vmatprep.mubr.f32.mxu0 0.0
  %774 = vmatmul.mubr.f32.gmra.mrb[0].mxu0 %v476
  %v775 = vpop.f32.mrb[0].mxu0
  %v776 = vadd.f32 0.0, %v775
  %v777 = vpop.f32.mrb[0].mxu0
  %778 = vmatprep.mubr.f32.mxu0 0.0
  %779 = vmatmul.mubr.f32.gmra.mrb[0].mxu0 %v479
  %v780 = vpop.f32.mrb[0].mxu0
  %v781 = vadd.f32 0.0, %v780
  %v782 = vpop.f32.mrb[0].mxu0
  %783 = vmatprep.mubr.f32.mxu0 0.0
  %784 = vmatmul.mubr.f32.gmra.mrb[0].mxu0 %v482
  %v785 = vpop.f32.mrb[0].mxu0
  %v786 = vadd.f32 0.0, %v785
  %v787 = vpop.f32.mrb[0].mxu0
  %788 = vmatprep.mubr.f32.mxu0 0.0
  %789 = vmatmul.mubr.f32.gmra.mrb[0].mxu0 %v485
  %v790 = vpop.f32.mrb[0].mxu0
  %v791 = vadd.f32 0.0, %v790
  %v792 = vpop.f32.mrb[0].mxu0
  %793 = vmatprep.mubr.f32.mxu0 0.0
  %794 = vmatmul.mubr.f32.gmra.mrb[0].mxu0 %v488
  %v795 = vpop.f32.mrb[0].mxu0
  %v796 = vadd.f32 0.0, %v795
  %v797 = vpop.f32.mrb[0].mxu0
  %798 = vmatprep.mubr.f32.mxu0 0.0
  %799 = vmatmul.mubr.f32.gmra.mrb[0].mxu0 %v491
  %v800 = vpop.f32.mrb[0].mxu0
  %v801 = vadd.f32 0.0, %v800
  %v802 = vpop.f32.mrb[0].mxu0
  %803 = vmatprep.mubr.f32.mxu0 0.0
  %804 = vmatmul.mubr.f32.gmra.mrb[0].mxu0 %v494
  %v805 = vpop.f32.mrb[0].mxu0
  %v806 = vadd.f32 0.0, %v805
  %v807 = vpop.f32.mrb[0].mxu0
  %808 = vmatprep.mubr.f32.mxu0 0.0
  %809 = vmatmul.mubr.f32.gmra.mrb[0].mxu0 %v497
  %v810 = vpop.f32.mrb[0].mxu0
  %v811 = vadd.f32 0.0, %v810
  %v812 = vpop.f32.mrb[0].mxu0
  %813 = vmatprep.mubr.f32.mxu0 0.0
  %814 = vmatmul.mubr.f32.gmra.mrb[0].mxu0 %v500
  %v815 = vpop.f32.mrb[0].mxu0
  %v816 = vadd.f32 0.0, %v815
  %v817 = vpop.f32.mrb[0].mxu0
  %818 = vmatprep.mubr.f32.mxu0 0.0
  %819 = vmatmul.mubr.f32.gmra.mrb[0].mxu0 %v503
  %v820 = vpop.f32.mrb[0].mxu0
  %v821 = vadd.f32 0.0, %v820
  %v822 = vpop.f32.mrb[0].mxu0
  %823 = vmatprep.mubr.f32.mxu0 0.0
  %824 = vmatmul.mubr.f32.gmra.mrb[0].mxu0 %v506
  %v825 = vpop.f32.mrb[0].mxu0
  %v826 = vadd.f32 0.0, %v825
  %v827 = vpop.f32.mrb[0].mxu0
  %828 = vmatprep.mubr.f32.mxu0 0.0
  %829 = vmatmul.mubr.f32.gmra.mrb[0].mxu0 %v509
  %v830 = vpop.f32.mrb[0].mxu0
  %v831 = vadd.f32 0.0, %v830
  %v832 = vpop.f32.mrb[0].mxu0
  %833 = vmatprep.mubr.f32.mxu0 0.0
  %834 = vmatmul.mubr.f32.gmra.mrb[0].mxu0 %v512
  %v835 = vpop.f32.mrb[0].mxu0
  %v836 = vadd.f32 0.0, %v835
  %v837 = vpop.f32.mrb[0].mxu0
  %838 = vmatprep.mubr.f32.mxu0 0.0
  %839 = vmatmul.mubr.f32.gmra.mrb[0].mxu0 %v515
  %v840 = vpop.f32.mrb[0].mxu0
  %v841 = vadd.f32 0.0, %v840
  %v842 = vpop.f32.mrb[0].mxu0
  %843 = vmatprep.mubr.f32.mxu0 0.0
  %844 = vmatmul.mubr.f32.gmra.mrb[0].mxu0 %v518
  %v845 = vpop.f32.mrb[0].mxu0
  %v846 = vadd.f32 0.0, %v845
  %v847 = vpop.f32.mrb[0].mxu0
  %848 = vmatprep.mubr.f32.mxu0 0.0
  %849 = vmatmul.mubr.f32.gmra.mrb[0].mxu0 %v521
  %v850 = vpop.f32.mrb[0].mxu0
  %v851 = vadd.f32 0.0, %v850
  %v852 = vpop.f32.mrb[0].mxu0
  %853 = vmatprep.mubr.f32.mxu0 0.0
  %854 = vmatmul.mubr.f32.gmra.mrb[0].mxu0 %v524
  %v855 = vpop.f32.mrb[0].mxu0
  %v856 = vadd.f32 0.0, %v855
  %v857 = vpop.f32.mrb[0].mxu0
  %858 = vmatprep.mubr.f32.mxu0 0.0
  %859 = vmatmul.mubr.f32.gmra.mrb[0].mxu0 %v527
  %v860 = vpop.f32.mrb[0].mxu0
  %v861 = vadd.f32 0.0, %v860
  %v862 = vpop.f32.mrb[0].mxu0
  %863 = vmatprep.mubr.f32.mxu0 0.0
  %864 = vmatmul.mubr.f32.gmra.mrb[0].mxu0 %v530
  %v865 = vpop.f32.mrb[0].mxu0
  %v866 = vadd.f32 0.0, %v865
  %v867 = vpop.f32.mrb[0].mxu0
  %868 = vmatprep.mubr.f32.mxu0 0.0
  %869 = vmatmul.mubr.f32.gmra.mrb[0].mxu0 %v533
  %v870 = vpop.f32.mrb[0].mxu0
  %v871 = vadd.f32 0.0, %v870
  %v872 = vpop.f32.mrb[0].mxu0
  %873 = vmatprep.mubr.f32.mxu0 0.0
  %874 = vmatmul.mubr.f32.gmra.mrb[0].mxu0 %v536
  %v875 = vpop.f32.mrb[0].mxu0
  %v876 = vadd.f32 0.0, %v875
  %v877 = vpop.f32.mrb[0].mxu0
  %878 = vmatprep.mubr.f32.mxu0 0.0
  %879 = vmatmul.mubr.f32.gmra.mrb[0].mxu0 %v539
  %v880 = vpop.f32.mrb[0].mxu0
  %v881 = vadd.f32 0.0, %v880
  %v882 = vpop.f32.mrb[0].mxu0
  %883 = vmatprep.mubr.f32.mxu0 0.0
  %884 = vmatmul.mubr.f32.gmra.mrb[0].mxu0 %v542
  %v885 = vpop.f32.mrb[0].mxu0
  %v886 = vadd.f32 0.0, %v885
  %v887 = vpop.f32.mrb[0].mxu0
  %888 = vmatprep.mubr.f32.mxu0 0.0
  %889 = vmatmul.mubr.f32.gmra.mrb[0].mxu0 %v545
  %v890 = vpop.f32.mrb[0].mxu0
  %v891 = vadd.f32 0.0, %v890
  %v892 = vpop.f32.mrb[0].mxu0
  %893 = vmatprep.mubr.f32.mxu0 0.0
  %894 = vmatmul.mubr.f32.gmra.mrb[0].mxu0 %v548
  %v895 = vpop.f32.mrb[0].mxu0
  %v896 = vadd.f32 0.0, %v895
  %v897 = vpop.f32.mrb[0].mxu0
  %898 = vmatprep.mubr.f32.mxu0 0.0
  %899 = vmatmul.mubr.f32.gmra.mrb[0].mxu0 %v551
  %v900 = vpop.f32.mrb[0].mxu0
  %v901 = vadd.f32 0.0, %v900
  %v902 = vpop.f32.mrb[0].mxu0
  %903 = vmatprep.mubr.f32.mxu0 0.0
  %904 = vmatmul.mubr.f32.gmra.mrb[0].mxu0 %v554
  %v905 = vpop.f32.mrb[0].mxu0
  %v906 = vadd.f32 0.0, %v905
  %v907 = vpop.f32.mrb[0].mxu0
  %908 = vmatprep.mubr.f32.mxu0 0.0
  %909 = vmatmul.mubr.f32.gmra.mrb[0].mxu0 %v557
  %v910 = vpop.f32.mrb[0].mxu0
  %v911 = vadd.f32 0.0, %v910
  %v912 = vpop.f32.mrb[0].mxu0
  %913 = vmatprep.mubr.f32.mxu0 0.0
  %914 = vmatmul.mubr.f32.gmra.mrb[0].mxu0 %v560
  %v915 = vpop.f32.mrb[0].mxu0
  %v916 = vadd.f32 0.0, %v915
  %v917 = vpop.f32.mrb[0].mxu0
  %918 = vmatprep.mubr.f32.mxu0 0.0
  %919 = vmatmul.mubr.f32.gmra.mrb[0].mxu0 %v563
  %v920 = vpop.f32.mrb[0].mxu0
  %v921 = vadd.f32 0.0, %v920
  %v922 = vpop.f32.mrb[0].mxu0
  %923 = vmatprep.mubr.f32.mxu0 0.0
  %924 = vmatmul.mubr.f32.gmra.mrb[0].mxu0 %v566
  %v925 = vpop.f32.mrb[0].mxu0
  %v926 = vadd.f32 0.0, %v925
  %v927 = vpop.f32.mrb[0].mxu0
  %928 = vmatprep.mubr.f32.mxu0 0.0
  %929 = vmatmul.mubr.f32.gmra.mrb[0].mxu0 %v569
  %v930 = vpop.f32.mrb[0].mxu0
  %v931 = vadd.f32 0.0, %v930
  %v932 = vpop.f32.mrb[0].mxu0
  %933 = vmatprep.mubr.f32.mxu0 0.0
  %934 = vmatmul.mubr.f32.gmra.mrb[0].mxu0 %v572
  %v935 = vpop.f32.mrb[0].mxu0
  %v936 = vadd.f32 0.0, %v935
  %v937 = vpop.f32.mrb[0].mxu0
  %938 = vmatprep.mubr.f32.mxu0 0.0
  %939 = vmatmul.mubr.f32.gmra.mrb[0].mxu0 %v575
  %v940 = vpop.f32.mrb[0].mxu0
  %v941 = vadd.f32 0.0, %v940
  %v942 = vpop.f32.mrb[0].mxu0
  %943 = vmatprep.mubr.f32.mxu0 0.0
  %944 = vmatmul.mubr.f32.gmra.mrb[0].mxu0 %v578
  %v945 = vpop.f32.mrb[0].mxu0
  %v946 = vadd.f32 0.0, %v945
  %v947 = vpop.f32.mrb[0].mxu0
  %948 = vmatprep.mubr.f32.mxu0 0.0
  %949 = vmatmul.mubr.f32.gmra.mrb[0].mxu0 %v581
  %v950 = vpop.f32.mrb[0].mxu0
  %v951 = vadd.f32 0.0, %v950
  %v952 = vpop.f32.mrb[0].mxu0
  %953 = vmatprep.mubr.f32.mxu0 0.0
  %954 = vmatmul.mubr.f32.gmra.mrb[0].mxu0 %v584
  %v955 = vpop.f32.mrb[0].mxu0
  %v956 = vadd.f32 0.0, %v955
  %v957 = vpop.f32.mrb[0].mxu0
  %958 = vmatprep.mubr.f32.mxu0 0.0
  %959 = vmatmul.mubr.f32.gmra.mrb[0].mxu0 %v587
  %v960 = vpop.f32.mrb[0].mxu0
  %v961 = vadd.f32 0.0, %v960
  %v962 = vpop.f32.mrb[0].mxu0
  %963 = vmatprep.mubr.f32.mxu0 0.0
  %964 = vmatmul.mubr.f32.gmra.mrb[0].mxu0 %v590
  %v965 = vpop.f32.mrb[0].mxu0
  %v966 = vadd.f32 0.0, %v965
  %v967 = vpop.f32.mrb[0].mxu0
  %968 = vmatprep.mubr.f32.mxu0 0.0
  %969 = vmatmul.mubr.f32.gmra.mrb[0].mxu0 %v593
  %v970 = vpop.f32.mrb[0].mxu0
  %v971 = vadd.f32 0.0, %v970
  %v972 = vpop.f32.mrb[0].mxu0
  %973 = vmatprep.mubr.f32.mxu0 0.0
  %974 = vmatmul.mubr.f32.gmra.mrb[0].mxu0 %v596
  %v975 = vpop.f32.mrb[0].mxu0
  %v976 = vadd.f32 0.0, %v975
  %v977 = vpop.f32.mrb[0].mxu0
  %978 = vmatprep.mubr.f32.mxu0 0.0
  %979 = vmatmul.mubr.f32.gmra.mrb[0].mxu0 %v599
  %v980 = vpop.f32.mrb[0].mxu0
  %v981 = vadd.f32 0.0, %v980
  %v982 = vpop.f32.mrb[0].mxu0
  %983 = vmatprep.mubr.f32.mxu0 0.0
  %984 = vmatmul.mubr.f32.gmra.mrb[0].mxu0 %v602
  %v985 = vpop.f32.mrb[0].mxu0
  %v986 = vadd.f32 0.0, %v985
  %v987 = vpop.f32.mrb[0].mxu0
  %988 = vdwg.mxu0
  %v989 = vmul.f32 %v90, %v671
  %v990 = vmul.f32 %v91, %v676
  %v991 = vmul.f32 %v92, %v681
  %v992 = vmul.f32 %v93, %v686
  %v993 = vmul.f32 %v94, %v691
  %v994 = vmul.f32 %v95, %v696
  %v995 = vmul.f32 %v96, %v701
  %v996 = vmul.f32 %v97, %v706
  %v997 = vmul.f32 %v98, %v711
  %v998 = vmul.f32 %v99, %v716
  %v999 = vmul.f32 %v100, %v721
  %v1000 = vmul.f32 %v101, %v726
  %v1001 = vmul.f32 %v102, %v731
  %v1002 = vmul.f32 %v103, %v736
  %v1003 = vmul.f32 %v104, %v741
  %v1004 = vmul.f32 %v105, %v746
  %v1005 = vmul.f32 %v106, %v751
  %v1006 = vmul.f32 %v107, %v756
  %v1007 = vmul.f32 %v108, %v761
  %v1008 = vmul.f32 %v109, %v766
  %v1009 = vmul.f32 %v110, %v771
  %v1010 = vmul.f32 %v111, %v776
  %v1011 = vmul.f32 %v112, %v781
  %v1012 = vmul.f32 %v113, %v786
  %v1013 = vmul.f32 %v114, %v791
  %v1014 = vmul.f32 %v115, %v796
  %v1015 = vmul.f32 %v116, %v801
  %v1016 = vmul.f32 %v117, %v806
  %v1017 = vmul.f32 %v118, %v811
  %v1018 = vmul.f32 %v119, %v816
  %v1019 = vmul.f32 %v120, %v821
  %v1020 = vmul.f32 %v121, %v826
  %v1021 = vmul.f32 %v122, %v831
  %v1022 = vmul.f32 %v123, %v836
  %v1023 = vmul.f32 %v124, %v841
  %v1024 = vmul.f32 %v125, %v846
  %v1025 = vmul.f32 %v126, %v851
  %v1026 = vmul.f32 %v127, %v856
  %v1027 = vmul.f32 %v128, %v861
  %v1028 = vmul.f32 %v129, %v866
  %v1029 = vmul.f32 %v130, %v871
  %v1030 = vmul.f32 %v131, %v876
  %v1031 = vmul.f32 %v132, %v881
  %v1032 = vmul.f32 %v133, %v886
  %v1033 = vmul.f32 %v134, %v891
  %v1034 = vmul.f32 %v135, %v896
  %v1035 = vmul.f32 %v136, %v901
  %v1036 = vmul.f32 %v137, %v906
  %v1037 = vmul.f32 %v138, %v911
  %v1038 = vmul.f32 %v139, %v916
  %v1039 = vmul.f32 %v140, %v921
  %v1040 = vmul.f32 %v141, %v926
  %v1041 = vmul.f32 %v142, %v931
  %v1042 = vmul.f32 %v143, %v936
  %v1043 = vmul.f32 %v144, %v941
  %v1044 = vmul.f32 %v145, %v946
  %v1045 = vmul.f32 %v146, %v951
  %v1046 = vmul.f32 %v147, %v956
  %v1047 = vmul.f32 %v148, %v961
  %v1048 = vmul.f32 %v149, %v966
  %v1049 = vmul.f32 %v150, %v971
  %v1050 = vmul.f32 %v151, %v976
  %v1051 = vmul.f32 %v152, %v981
  %v1052 = vmul.f32 %v153, %v986
  %v1053 = vld [vmem:[%s4] sm:$0xff]
  %v1054 = vld [vmem:[%s4 + $0x8] sm:$0xff]
  %v1055 = vld [vmem:[%s4 + $0x10] sm:$0xff]
  %v1056 = vld [vmem:[%s4 + $0x18] sm:$0xff]
  %v1057 = vld [vmem:[%s4 + $0x20] sm:$0xff]
  %v1058 = vld [vmem:[%s4 + $0x28] sm:$0xff]
  %v1059 = vld [vmem:[%s4 + $0x30] sm:$0xff]
  %v1060 = vld [vmem:[%s4 + $0x38] sm:$0xff]
  %v1061 = vld [vmem:[%s4 + $0x40] sm:$0xff]
  %vm1062 = vcmask 588800
  %v1064 = vsel %vm1062, %v989, 0
  %v1067 = vsel %vm1062, %v990, 0
  %v1070 = vsel %vm1062, %v991, 0
  %v1073 = vsel %vm1062, %v992, 0
  %v1076 = vsel %vm1062, %v993, 0
  %v1079 = vsel %vm1062, %v994, 0
  %v1082 = vsel %vm1062, %v995, 0
  %v1085 = vsel %vm1062, %v996, 0
  %v1088 = vsel %vm1062, %v997, 0
  %v1091 = vsel %vm1062, %v998, 0
  %v1094 = vsel %vm1062, %v999, 0
  %v1097 = vsel %vm1062, %v1000, 0
  %v1100 = vsel %vm1062, %v1001, 0
  %v1103 = vsel %vm1062, %v1002, 0
  %v1106 = vsel %vm1062, %v1003, 0
  %v1109 = vsel %vm1062, %v1004, 0
  %v1112 = vsel %vm1062, %v1005, 0
  %v1115 = vsel %vm1062, %v1006, 0
  %v1118 = vsel %vm1062, %v1007, 0
  %v1121 = vsel %vm1062, %v1008, 0
  %v1124 = vsel %vm1062, %v1009, 0
  %v1127 = vsel %vm1062, %v1010, 0
  %v1130 = vsel %vm1062, %v1011, 0
  %v1133 = vsel %vm1062, %v1012, 0
  %v1136 = vsel %vm1062, %v1013, 0
  %v1139 = vsel %vm1062, %v1014, 0
  %v1142 = vsel %vm1062, %v1015, 0
  %v1145 = vsel %vm1062, %v1016, 0
  %v1148 = vsel %vm1062, %v1017, 0
  %v1151 = vsel %vm1062, %v1018, 0
  %v1154 = vsel %vm1062, %v1019, 0
  %v1157 = vsel %vm1062, %v1020, 0
  %v1160 = vsel %vm1062, %v1021, 0
  %v1163 = vsel %vm1062, %v1022, 0
  %v1166 = vsel %vm1062, %v1023, 0
  %v1169 = vsel %vm1062, %v1024, 0
  %v1172 = vsel %vm1062, %v1025, 0
  %v1175 = vsel %vm1062, %v1026, 0
  %v1178 = vsel %vm1062, %v1027, 0
  %v1181 = vsel %vm1062, %v1028, 0
  %v1184 = vsel %vm1062, %v1029, 0
  %v1187 = vsel %vm1062, %v1030, 0
  %v1190 = vsel %vm1062, %v1031, 0
  %v1193 = vsel %vm1062, %v1032, 0
  %v1196 = vsel %vm1062, %v1033, 0
  %v1199 = vsel %vm1062, %v1034, 0
  %v1202 = vsel %vm1062, %v1035, 0
  %v1205 = vsel %vm1062, %v1036, 0
  %v1208 = vsel %vm1062, %v1037, 0
  %v1211 = vsel %vm1062, %v1038, 0
  %v1214 = vsel %vm1062, %v1039, 0
  %v1217 = vsel %vm1062, %v1040, 0
  %v1220 = vsel %vm1062, %v1041, 0
  %v1223 = vsel %vm1062, %v1042, 0
  %v1226 = vsel %vm1062, %v1043, 0
  %v1229 = vsel %vm1062, %v1044, 0
  %v1232 = vsel %vm1062, %v1045, 0
  %v1235 = vsel %vm1062, %v1046, 0
  %v1238 = vsel %vm1062, %v1047, 0
  %v1241 = vsel %vm1062, %v1048, 0
  %v1244 = vsel %vm1062, %v1049, 0
  %v1247 = vsel %vm1062, %v1050, 0
  %v1250 = vsel %vm1062, %v1051, 0
  %v1253 = vsel %vm1062, %v1052, 0
  %1255 = vmatprep.subr.mxu0 0.0
  %1256 = vmatpush1.msra.mxu0 %v1053
  %1257 = vmatprep.subr.mxu0 0.0
  %1258 = vmatpush1.msra.mxu0 %v1054
  %1259 = vmatprep.subr.mxu0 0.0
  %1260 = vmatpush1.msra.mxu0 %v1055
  %1261 = vmatprep.subr.mxu0 0.0
  %1262 = vmatpush1.msra.mxu0 %v1056
  %1263 = vmatprep.subr.mxu0 0.0
  %1264 = vmatpush1.msra.mxu0 %v1057
  %1265 = vmatprep.subr.mxu0 0.0
  %1266 = vmatpush1.msra.mxu0 %v1058
  %1267 = vmatprep.subr.mxu0 0.0
  %1268 = vmatpush1.msra.mxu0 %v1059
  %1269 = vmatprep.subr.mxu0 0.0
  %1270 = vmatpush1.msra.mxu0 %v1060
  %1271 = vmatprep.subr.mxu0 0.0
  %1272 = vmatpush1.msra.mxu0 %v1061
  %1273 = vmatprep.subr.mxu0 0.0
  %1274 = vmatpush1.msra.mxu0 0.0
  %1275 = vmatprep.subr.mxu0 0.0
  %1276 = vmatpush1.msra.mxu0 0.0
  %1277 = vmatprep.subr.mxu0 0.0
  %1278 = vmatpush1.msra.mxu0 0.0
  %1279 = vmatprep.subr.mxu0 0.0
  %1280 = vmatpush1.msra.mxu0 0.0
  %1281 = vmatprep.subr.mxu0 0.0
  %1282 = vmatpush1.msra.mxu0 0.0
  %1283 = vmatprep.subr.mxu0 0.0
  %1284 = vmatpush1.msra.mxu0 0.0
  %1285 = vmatprep.subr.mxu0 0.0
  %1286 = vmatpush1.msra.mxu0 0.0
  %1287 = vmatprep.subr.mxu0 0.0
  %1288 = vmatpush1.msra.mxu0 0.0
  %1289 = vmatprep.subr.mxu0 0.0
  %1290 = vmatpush1.msra.mxu0 0.0
  %1291 = vmatprep.subr.mxu0 0.0
  %1292 = vmatpush1.msra.mxu0 0.0
  %1293 = vmatprep.subr.mxu0 0.0
  %1294 = vmatpush1.msra.mxu0 0.0
  %1295 = vmatprep.subr.mxu0 0.0
  %1296 = vmatpush1.msra.mxu0 0.0
  %1297 = vmatprep.subr.mxu0 0.0
  %1298 = vmatpush1.msra.mxu0 0.0
  %1299 = vmatprep.subr.mxu0 0.0
  %1300 = vmatpush1.msra.mxu0 0.0
  %1301 = vmatprep.subr.mxu0 0.0
  %1302 = vmatpush1.msra.mxu0 0.0
  %1303 = vmatprep.subr.mxu0 0.0
  %1304 = vmatpush1.msra.mxu0 0.0
  %1305 = vmatprep.subr.mxu0 0.0
  %1306 = vmatpush1.msra.mxu0 0.0
  %1307 = vmatprep.subr.mxu0 0.0
  %1308 = vmatpush1.msra.mxu0 0.0
  %1309 = vmatprep.subr.mxu0 0.0
  %1310 = vmatpush1.msra.mxu0 0.0
  %1311 = vmatprep.subr.mxu0 0.0
  %1312 = vmatpush1.msra.mxu0 0.0
  %1313 = vmatprep.subr.mxu0 0.0
  %1314 = vmatpush1.msra.mxu0 0.0
  %1315 = vmatprep.subr.mxu0 0.0
  %1316 = vmatpush1.msra.mxu0 0.0
  %1317 = vmatprep.subr.mxu0 0.0
  %1318 = vmatpush1.msra.mxu0 0.0
  %1319 = vmatprep.mubr.f32.mxu0 0.0
  %1320 = vmatmul.mubr.f32.gmra.mrb[0].mxu0 %v1064
  %v1321 = vpop.f32.mrb[0].mxu0
  %v1322 = vadd.f32 0.0, %v1321
  %v1323 = vpop.f32.mrb[0].mxu0
  %1324 = vmatprep.mubr.f32.mxu0 0.0
  %1325 = vmatmul.mubr.f32.gmra.mrb[0].mxu0 %v1067
  %v1326 = vpop.f32.mrb[0].mxu0
  %v1327 = vadd.f32 0.0, %v1326
  %v1328 = vpop.f32.mrb[0].mxu0
  %1329 = vmatprep.mubr.f32.mxu0 0.0
  %1330 = vmatmul.mubr.f32.gmra.mrb[0].mxu0 %v1070
  %v1331 = vpop.f32.mrb[0].mxu0
  %v1332 = vadd.f32 0.0, %v1331
  %v1333 = vpop.f32.mrb[0].mxu0
  %1334 = vmatprep.mubr.f32.mxu0 0.0
  %1335 = vmatmul.mubr.f32.gmra.mrb[0].mxu0 %v1073
  %v1336 = vpop.f32.mrb[0].mxu0
  %v1337 = vadd.f32 0.0, %v1336
  %v1338 = vpop.f32.mrb[0].mxu0
  %1339 = vmatprep.mubr.f32.mxu0 0.0
  %1340 = vmatmul.mubr.f32.gmra.mrb[0].mxu0 %v1076
  %v1341 = vpop.f32.mrb[0].mxu0
  %v1342 = vadd.f32 0.0, %v1341
  %v1343 = vpop.f32.mrb[0].mxu0
  %1344 = vmatprep.mubr.f32.mxu0 0.0
  %1345 = vmatmul.mubr.f32.gmra.mrb[0].mxu0 %v1079
  %v1346 = vpop.f32.mrb[0].mxu0
  %v1347 = vadd.f32 0.0, %v1346
  %v1348 = vpop.f32.mrb[0].mxu0
  %1349 = vmatprep.mubr.f32.mxu0 0.0
  %1350 = vmatmul.mubr.f32.gmra.mrb[0].mxu0 %v1082
  %v1351 = vpop.f32.mrb[0].mxu0
  %v1352 = vadd.f32 0.0, %v1351
  %v1353 = vpop.f32.mrb[0].mxu0
  %1354 = vmatprep.mubr.f32.mxu0 0.0
  %1355 = vmatmul.mubr.f32.gmra.mrb[0].mxu0 %v1085
  %v1356 = vpop.f32.mrb[0].mxu0
  %v1357 = vadd.f32 0.0, %v1356
  %v1358 = vpop.f32.mrb[0].mxu0
  %1359 = vmatprep.mubr.f32.mxu0 0.0
  %1360 = vmatmul.mubr.f32.gmra.mrb[0].mxu0 %v1088
  %v1361 = vpop.f32.mrb[0].mxu0
  %v1362 = vadd.f32 0.0, %v1361
  %v1363 = vpop.f32.mrb[0].mxu0
  %1364 = vmatprep.mubr.f32.mxu0 0.0
  %1365 = vmatmul.mubr.f32.gmra.mrb[0].mxu0 %v1091
  %v1366 = vpop.f32.mrb[0].mxu0
  %v1367 = vadd.f32 0.0, %v1366
  %v1368 = vpop.f32.mrb[0].mxu0
  %1369 = vmatprep.mubr.f32.mxu0 0.0
  %1370 = vmatmul.mubr.f32.gmra.mrb[0].mxu0 %v1094
  %v1371 = vpop.f32.mrb[0].mxu0
  %v1372 = vadd.f32 0.0, %v1371
  %v1373 = vpop.f32.mrb[0].mxu0
  %1374 = vmatprep.mubr.f32.mxu0 0.0
  %1375 = vmatmul.mubr.f32.gmra.mrb[0].mxu0 %v1097
  %v1376 = vpop.f32.mrb[0].mxu0
  %v1377 = vadd.f32 0.0, %v1376
  %v1378 = vpop.f32.mrb[0].mxu0
  %1379 = vmatprep.mubr.f32.mxu0 0.0
  %1380 = vmatmul.mubr.f32.gmra.mrb[0].mxu0 %v1100
  %v1381 = vpop.f32.mrb[0].mxu0
  %v1382 = vadd.f32 0.0, %v1381
  %v1383 = vpop.f32.mrb[0].mxu0
  %1384 = vmatprep.mubr.f32.mxu0 0.0
  %1385 = vmatmul.mubr.f32.gmra.mrb[0].mxu0 %v1103
  %v1386 = vpop.f32.mrb[0].mxu0
  %v1387 = vadd.f32 0.0, %v1386
  %v1388 = vpop.f32.mrb[0].mxu0
  %1389 = vmatprep.mubr.f32.mxu0 0.0
  %1390 = vmatmul.mubr.f32.gmra.mrb[0].mxu0 %v1106
  %v1391 = vpop.f32.mrb[0].mxu0
  %v1392 = vadd.f32 0.0, %v1391
  %v1393 = vpop.f32.mrb[0].mxu0
  %1394 = vmatprep.mubr.f32.mxu0 0.0
  %1395 = vmatmul.mubr.f32.gmra.mrb[0].mxu0 %v1109
  %v1396 = vpop.f32.mrb[0].mxu0
  %v1397 = vadd.f32 0.0, %v1396
  %v1398 = vpop.f32.mrb[0].mxu0
  %1399 = vmatprep.mubr.f32.mxu0 0.0
  %1400 = vmatmul.mubr.f32.gmra.mrb[0].mxu0 %v1112
  %v1401 = vpop.f32.mrb[0].mxu0
  %v1402 = vadd.f32 0.0, %v1401
  %v1403 = vpop.f32.mrb[0].mxu0
  %1404 = vmatprep.mubr.f32.mxu0 0.0
  %1405 = vmatmul.mubr.f32.gmra.mrb[0].mxu0 %v1115
  %v1406 = vpop.f32.mrb[0].mxu0
  %v1407 = vadd.f32 0.0, %v1406
  %v1408 = vpop.f32.mrb[0].mxu0
  %1409 = vmatprep.mubr.f32.mxu0 0.0
  %1410 = vmatmul.mubr.f32.gmra.mrb[0].mxu0 %v1118
  %v1411 = vpop.f32.mrb[0].mxu0
  %v1412 = vadd.f32 0.0, %v1411
  %v1413 = vpop.f32.mrb[0].mxu0
  %1414 = vmatprep.mubr.f32.mxu0 0.0
  %1415 = vmatmul.mubr.f32.gmra.mrb[0].mxu0 %v1121
  %v1416 = vpop.f32.mrb[0].mxu0
  %v1417 = vadd.f32 0.0, %v1416
  %v1418 = vpop.f32.mrb[0].mxu0
  %1419 = vmatprep.mubr.f32.mxu0 0.0
  %1420 = vmatmul.mubr.f32.gmra.mrb[0].mxu0 %v1124
  %v1421 = vpop.f32.mrb[0].mxu0
  %v1422 = vadd.f32 0.0, %v1421
  %v1423 = vpop.f32.mrb[0].mxu0
  %1424 = vmatprep.mubr.f32.mxu0 0.0
  %1425 = vmatmul.mubr.f32.gmra.mrb[0].mxu0 %v1127
  %v1426 = vpop.f32.mrb[0].mxu0
  %v1427 = vadd.f32 0.0, %v1426
  %v1428 = vpop.f32.mrb[0].mxu0
  %1429 = vmatprep.mubr.f32.mxu0 0.0
  %1430 = vmatmul.mubr.f32.gmra.mrb[0].mxu0 %v1130
  %v1431 = vpop.f32.mrb[0].mxu0
  %v1432 = vadd.f32 0.0, %v1431
  %v1433 = vpop.f32.mrb[0].mxu0
  %1434 = vmatprep.mubr.f32.mxu0 0.0
  %1435 = vmatmul.mubr.f32.gmra.mrb[0].mxu0 %v1133
  %v1436 = vpop.f32.mrb[0].mxu0
  %v1437 = vadd.f32 0.0, %v1436
  %v1438 = vpop.f32.mrb[0].mxu0
  %1439 = vmatprep.mubr.f32.mxu0 0.0
  %1440 = vmatmul.mubr.f32.gmra.mrb[0].mxu0 %v1136
  %v1441 = vpop.f32.mrb[0].mxu0
  %v1442 = vadd.f32 0.0, %v1441
  %v1443 = vpop.f32.mrb[0].mxu0
  %1444 = vmatprep.mubr.f32.mxu0 0.0
  %1445 = vmatmul.mubr.f32.gmra.mrb[0].mxu0 %v1139
  %v1446 = vpop.f32.mrb[0].mxu0
  %v1447 = vadd.f32 0.0, %v1446
  %v1448 = vpop.f32.mrb[0].mxu0
  %1449 = vmatprep.mubr.f32.mxu0 0.0
  %1450 = vmatmul.mubr.f32.gmra.mrb[0].mxu0 %v1142
  %v1451 = vpop.f32.mrb[0].mxu0
  %v1452 = vadd.f32 0.0, %v1451
  %v1453 = vpop.f32.mrb[0].mxu0
  %1454 = vmatprep.mubr.f32.mxu0 0.0
  %1455 = vmatmul.mubr.f32.gmra.mrb[0].mxu0 %v1145
  %v1456 = vpop.f32.mrb[0].mxu0
  %v1457 = vadd.f32 0.0, %v1456
  %v1458 = vpop.f32.mrb[0].mxu0
  %1459 = vmatprep.mubr.f32.mxu0 0.0
  %1460 = vmatmul.mubr.f32.gmra.mrb[0].mxu0 %v1148
  %v1461 = vpop.f32.mrb[0].mxu0
  %v1462 = vadd.f32 0.0, %v1461
  %v1463 = vpop.f32.mrb[0].mxu0
  %1464 = vmatprep.mubr.f32.mxu0 0.0
  %1465 = vmatmul.mubr.f32.gmra.mrb[0].mxu0 %v1151
  %v1466 = vpop.f32.mrb[0].mxu0
  %v1467 = vadd.f32 0.0, %v1466
  %v1468 = vpop.f32.mrb[0].mxu0
  %1469 = vmatprep.mubr.f32.mxu0 0.0
  %1470 = vmatmul.mubr.f32.gmra.mrb[0].mxu0 %v1154
  %v1471 = vpop.f32.mrb[0].mxu0
  %v1472 = vadd.f32 0.0, %v1471
  %v1473 = vpop.f32.mrb[0].mxu0
  %1474 = vmatprep.mubr.f32.mxu0 0.0
  %1475 = vmatmul.mubr.f32.gmra.mrb[0].mxu0 %v1157
  %v1476 = vpop.f32.mrb[0].mxu0
  %v1477 = vadd.f32 0.0, %v1476
  %v1478 = vpop.f32.mrb[0].mxu0
  %1479 = vmatprep.mubr.f32.mxu0 0.0
  %1480 = vmatmul.mubr.f32.gmra.mrb[0].mxu0 %v1160
  %v1481 = vpop.f32.mrb[0].mxu0
  %v1482 = vadd.f32 0.0, %v1481
  %v1483 = vpop.f32.mrb[0].mxu0
  %1484 = vmatprep.mubr.f32.mxu0 0.0
  %1485 = vmatmul.mubr.f32.gmra.mrb[0].mxu0 %v1163
  %v1486 = vpop.f32.mrb[0].mxu0
  %v1487 = vadd.f32 0.0, %v1486
  %v1488 = vpop.f32.mrb[0].mxu0
  %1489 = vmatprep.mubr.f32.mxu0 0.0
  %1490 = vmatmul.mubr.f32.gmra.mrb[0].mxu0 %v1166
  %v1491 = vpop.f32.mrb[0].mxu0
  %v1492 = vadd.f32 0.0, %v1491
  %v1493 = vpop.f32.mrb[0].mxu0
  %1494 = vmatprep.mubr.f32.mxu0 0.0
  %1495 = vmatmul.mubr.f32.gmra.mrb[0].mxu0 %v1169
  %v1496 = vpop.f32.mrb[0].mxu0
  %v1497 = vadd.f32 0.0, %v1496
  %v1498 = vpop.f32.mrb[0].mxu0
  %1499 = vmatprep.mubr.f32.mxu0 0.0
  %1500 = vmatmul.mubr.f32.gmra.mrb[0].mxu0 %v1172
  %v1501 = vpop.f32.mrb[0].mxu0
  %v1502 = vadd.f32 0.0, %v1501
  %v1503 = vpop.f32.mrb[0].mxu0
  %1504 = vmatprep.mubr.f32.mxu0 0.0
  %1505 = vmatmul.mubr.f32.gmra.mrb[0].mxu0 %v1175
  %v1506 = vpop.f32.mrb[0].mxu0
  %v1507 = vadd.f32 0.0, %v1506
  %v1508 = vpop.f32.mrb[0].mxu0
  %1509 = vmatprep.mubr.f32.mxu0 0.0
  %1510 = vmatmul.mubr.f32.gmra.mrb[0].mxu0 %v1178
  %v1511 = vpop.f32.mrb[0].mxu0
  %v1512 = vadd.f32 0.0, %v1511
  %v1513 = vpop.f32.mrb[0].mxu0
  %1514 = vmatprep.mubr.f32.mxu0 0.0
  %1515 = vmatmul.mubr.f32.gmra.mrb[0].mxu0 %v1181
  %v1516 = vpop.f32.mrb[0].mxu0
  %v1517 = vadd.f32 0.0, %v1516
  %v1518 = vpop.f32.mrb[0].mxu0
  %1519 = vmatprep.mubr.f32.mxu0 0.0
  %1520 = vmatmul.mubr.f32.gmra.mrb[0].mxu0 %v1184
  %v1521 = vpop.f32.mrb[0].mxu0
  %v1522 = vadd.f32 0.0, %v1521
  %v1523 = vpop.f32.mrb[0].mxu0
  %1524 = vmatprep.mubr.f32.mxu0 0.0
  %1525 = vmatmul.mubr.f32.gmra.mrb[0].mxu0 %v1187
  %v1526 = vpop.f32.mrb[0].mxu0
  %v1527 = vadd.f32 0.0, %v1526
  %v1528 = vpop.f32.mrb[0].mxu0
  %1529 = vmatprep.mubr.f32.mxu0 0.0
  %1530 = vmatmul.mubr.f32.gmra.mrb[0].mxu0 %v1190
  %v1531 = vpop.f32.mrb[0].mxu0
  %v1532 = vadd.f32 0.0, %v1531
  %v1533 = vpop.f32.mrb[0].mxu0
  %1534 = vmatprep.mubr.f32.mxu0 0.0
  %1535 = vmatmul.mubr.f32.gmra.mrb[0].mxu0 %v1193
  %v1536 = vpop.f32.mrb[0].mxu0
  %v1537 = vadd.f32 0.0, %v1536
  %v1538 = vpop.f32.mrb[0].mxu0
  %1539 = vmatprep.mubr.f32.mxu0 0.0
  %1540 = vmatmul.mubr.f32.gmra.mrb[0].mxu0 %v1196
  %v1541 = vpop.f32.mrb[0].mxu0
  %v1542 = vadd.f32 0.0, %v1541
  %v1543 = vpop.f32.mrb[0].mxu0
  %1544 = vmatprep.mubr.f32.mxu0 0.0
  %1545 = vmatmul.mubr.f32.gmra.mrb[0].mxu0 %v1199
  %v1546 = vpop.f32.mrb[0].mxu0
  %v1547 = vadd.f32 0.0, %v1546
  %v1548 = vpop.f32.mrb[0].mxu0
  %1549 = vmatprep.mubr.f32.mxu0 0.0
  %1550 = vmatmul.mubr.f32.gmra.mrb[0].mxu0 %v1202
  %v1551 = vpop.f32.mrb[0].mxu0
  %v1552 = vadd.f32 0.0, %v1551
  %v1553 = vpop.f32.mrb[0].mxu0
  %1554 = vmatprep.mubr.f32.mxu0 0.0
  %1555 = vmatmul.mubr.f32.gmra.mrb[0].mxu0 %v1205
  %v1556 = vpop.f32.mrb[0].mxu0
  %v1557 = vadd.f32 0.0, %v1556
  %v1558 = vpop.f32.mrb[0].mxu0
  %1559 = vmatprep.mubr.f32.mxu0 0.0
  %1560 = vmatmul.mubr.f32.gmra.mrb[0].mxu0 %v1208
  %v1561 = vpop.f32.mrb[0].mxu0
  %v1562 = vadd.f32 0.0, %v1561
  %v1563 = vpop.f32.mrb[0].mxu0
  %1564 = vmatprep.mubr.f32.mxu0 0.0
  %1565 = vmatmul.mubr.f32.gmra.mrb[0].mxu0 %v1211
  %v1566 = vpop.f32.mrb[0].mxu0
  %v1567 = vadd.f32 0.0, %v1566
  %v1568 = vpop.f32.mrb[0].mxu0
  %1569 = vmatprep.mubr.f32.mxu0 0.0
  %1570 = vmatmul.mubr.f32.gmra.mrb[0].mxu0 %v1214
  %v1571 = vpop.f32.mrb[0].mxu0
  %v1572 = vadd.f32 0.0, %v1571
  %v1573 = vpop.f32.mrb[0].mxu0
  %1574 = vmatprep.mubr.f32.mxu0 0.0
  %1575 = vmatmul.mubr.f32.gmra.mrb[0].mxu0 %v1217
  %v1576 = vpop.f32.mrb[0].mxu0
  %v1577 = vadd.f32 0.0, %v1576
  %v1578 = vpop.f32.mrb[0].mxu0
  %1579 = vmatprep.mubr.f32.mxu0 0.0
  %1580 = vmatmul.mubr.f32.gmra.mrb[0].mxu0 %v1220
  %v1581 = vpop.f32.mrb[0].mxu0
  %v1582 = vadd.f32 0.0, %v1581
  %v1583 = vpop.f32.mrb[0].mxu0
  %1584 = vmatprep.mubr.f32.mxu0 0.0
  %1585 = vmatmul.mubr.f32.gmra.mrb[0].mxu0 %v1223
  %v1586 = vpop.f32.mrb[0].mxu0
  %v1587 = vadd.f32 0.0, %v1586
  %v1588 = vpop.f32.mrb[0].mxu0
  %1589 = vmatprep.mubr.f32.mxu0 0.0
  %1590 = vmatmul.mubr.f32.gmra.mrb[0].mxu0 %v1226
  %v1591 = vpop.f32.mrb[0].mxu0
  %v1592 = vadd.f32 0.0, %v1591
  %v1593 = vpop.f32.mrb[0].mxu0
  %1594 = vmatprep.mubr.f32.mxu0 0.0
  %1595 = vmatmul.mubr.f32.gmra.mrb[0].mxu0 %v1229
  %v1596 = vpop.f32.mrb[0].mxu0
  %v1597 = vadd.f32 0.0, %v1596
  %v1598 = vpop.f32.mrb[0].mxu0
  %1599 = vmatprep.mubr.f32.mxu0 0.0
  %1600 = vmatmul.mubr.f32.gmra.mrb[0].mxu0 %v1232
  %v1601 = vpop.f32.mrb[0].mxu0
  %v1602 = vadd.f32 0.0, %v1601
  %v1603 = vpop.f32.mrb[0].mxu0
  %1604 = vmatprep.mubr.f32.mxu0 0.0
  %1605 = vmatmul.mubr.f32.gmra.mrb[0].mxu0 %v1235
  %v1606 = vpop.f32.mrb[0].mxu0
  %v1607 = vadd.f32 0.0, %v1606
  %v1608 = vpop.f32.mrb[0].mxu0
  %1609 = vmatprep.mubr.f32.mxu0 0.0
  %1610 = vmatmul.mubr.f32.gmra.mrb[0].mxu0 %v1238
  %v1611 = vpop.f32.mrb[0].mxu0
  %v1612 = vadd.f32 0.0, %v1611
  %v1613 = vpop.f32.mrb[0].mxu0
  %1614 = vmatprep.mubr.f32.mxu0 0.0
  %1615 = vmatmul.mubr.f32.gmra.mrb[0].mxu0 %v1241
  %v1616 = vpop.f32.mrb[0].mxu0
  %v1617 = vadd.f32 0.0, %v1616
  %v1618 = vpop.f32.mrb[0].mxu0
  %1619 = vmatprep.mubr.f32.mxu0 0.0
  %1620 = vmatmul.mubr.f32.gmra.mrb[0].mxu0 %v1244
  %v1621 = vpop.f32.mrb[0].mxu0
  %v1622 = vadd.f32 0.0, %v1621
  %v1623 = vpop.f32.mrb[0].mxu0
  %1624 = vmatprep.mubr.f32.mxu0 0.0
  %1625 = vmatmul.mubr.f32.gmra.mrb[0].mxu0 %v1247
  %v1626 = vpop.f32.mrb[0].mxu0
  %v1627 = vadd.f32 0.0, %v1626
  %v1628 = vpop.f32.mrb[0].mxu0
  %1629 = vmatprep.mubr.f32.mxu0 0.0
  %1630 = vmatmul.mubr.f32.gmra.mrb[0].mxu0 %v1250
  %v1631 = vpop.f32.mrb[0].mxu0
  %v1632 = vadd.f32 0.0, %v1631
  %v1633 = vpop.f32.mrb[0].mxu0
  %1634 = vmatprep.mubr.f32.mxu0 0.0
  %1635 = vmatmul.mubr.f32.gmra.mrb[0].mxu0 %v1253
  %v1636 = vpop.f32.mrb[0].mxu0
  %v1637 = vadd.f32 0.0, %v1636
  %v1638 = vpop.f32.mrb[0].mxu0
  %1639 = vdwg.mxu0
  %vm1640 = vcmask 72704
  %v1641 = vsel %vm1640, %v1322, -inf
  %1642 = vmax.xlane.f32.xlu0 %v1641
  %v1643 = vpop.xlane.xlu0 %1642
  %v1644 = vsel %vm1640, %v1327, -inf
  %1645 = vmax.xlane.f32.xlu0 %v1644
  %v1646 = vpop.xlane.xlu0 %1645
  %v1647 = vsel %vm1640, %v1332, -inf
  %1648 = vmax.xlane.f32.xlu0 %v1647
  %v1649 = vpop.xlane.xlu0 %1648
  %v1650 = vsel %vm1640, %v1337, -inf
  %1651 = vmax.xlane.f32.xlu0 %v1650
  %v1652 = vpop.xlane.xlu0 %1651
  %v1653 = vsel %vm1640, %v1342, -inf
  %1654 = vmax.xlane.f32.xlu0 %v1653
  %v1655 = vpop.xlane.xlu0 %1654
  %v1656 = vsel %vm1640, %v1347, -inf
  %1657 = vmax.xlane.f32.xlu0 %v1656
  %v1658 = vpop.xlane.xlu0 %1657
  %v1659 = vsel %vm1640, %v1352, -inf
  %1660 = vmax.xlane.f32.xlu0 %v1659
  %v1661 = vpop.xlane.xlu0 %1660
  %v1662 = vsel %vm1640, %v1357, -inf
  %1663 = vmax.xlane.f32.xlu0 %v1662
  %v1664 = vpop.xlane.xlu0 %1663
  %v1665 = vsel %vm1640, %v1362, -inf
  %1666 = vmax.xlane.f32.xlu0 %v1665
  %v1667 = vpop.xlane.xlu0 %1666
  %v1668 = vsel %vm1640, %v1367, -inf
  %1669 = vmax.xlane.f32.xlu0 %v1668
  %v1670 = vpop.xlane.xlu0 %1669
  %v1671 = vsel %vm1640, %v1372, -inf
  %1672 = vmax.xlane.f32.xlu0 %v1671
  %v1673 = vpop.xlane.xlu0 %1672
  %v1674 = vsel %vm1640, %v1377, -inf
  %1675 = vmax.xlane.f32.xlu0 %v1674
  %v1676 = vpop.xlane.xlu0 %1675
  %v1677 = vsel %vm1640, %v1382, -inf
  %1678 = vmax.xlane.f32.xlu0 %v1677
  %v1679 = vpop.xlane.xlu0 %1678
  %v1680 = vsel %vm1640, %v1387, -inf
  %1681 = vmax.xlane.f32.xlu0 %v1680
  %v1682 = vpop.xlane.xlu0 %1681
  %v1683 = vsel %vm1640, %v1392, -inf
  %1684 = vmax.xlane.f32.xlu0 %v1683
  %v1685 = vpop.xlane.xlu0 %1684
  %v1686 = vsel %vm1640, %v1397, -inf
  %1687 = vmax.xlane.f32.xlu0 %v1686
  %v1688 = vpop.xlane.xlu0 %1687
  %v1689 = vsel %vm1640, %v1402, -inf
  %1690 = vmax.xlane.f32.xlu0 %v1689
  %v1691 = vpop.xlane.xlu0 %1690
  %v1692 = vsel %vm1640, %v1407, -inf
  %1693 = vmax.xlane.f32.xlu0 %v1692
  %v1694 = vpop.xlane.xlu0 %1693
  %v1695 = vsel %vm1640, %v1412, -inf
  %1696 = vmax.xlane.f32.xlu0 %v1695
  %v1697 = vpop.xlane.xlu0 %1696
  %v1698 = vsel %vm1640, %v1417, -inf
  %1699 = vmax.xlane.f32.xlu0 %v1698
  %v1700 = vpop.xlane.xlu0 %1699
  %v1701 = vsel %vm1640, %v1422, -inf
  %1702 = vmax.xlane.f32.xlu0 %v1701
  %v1703 = vpop.xlane.xlu0 %1702
  %v1704 = vsel %vm1640, %v1427, -inf
  %1705 = vmax.xlane.f32.xlu0 %v1704
  %v1706 = vpop.xlane.xlu0 %1705
  %v1707 = vsel %vm1640, %v1432, -inf
  %1708 = vmax.xlane.f32.xlu0 %v1707
  %v1709 = vpop.xlane.xlu0 %1708
  %v1710 = vsel %vm1640, %v1437, -inf
  %1711 = vmax.xlane.f32.xlu0 %v1710
  %v1712 = vpop.xlane.xlu0 %1711
  %v1713 = vsel %vm1640, %v1442, -inf
  %1714 = vmax.xlane.f32.xlu0 %v1713
  %v1715 = vpop.xlane.xlu0 %1714
  %v1716 = vsel %vm1640, %v1447, -inf
  %1717 = vmax.xlane.f32.xlu0 %v1716
  %v1718 = vpop.xlane.xlu0 %1717
  %v1719 = vsel %vm1640, %v1452, -inf
  %1720 = vmax.xlane.f32.xlu0 %v1719
  %v1721 = vpop.xlane.xlu0 %1720
  %v1722 = vsel %vm1640, %v1457, -inf
  %1723 = vmax.xlane.f32.xlu0 %v1722
  %v1724 = vpop.xlane.xlu0 %1723
  %v1725 = vsel %vm1640, %v1462, -inf
  %1726 = vmax.xlane.f32.xlu0 %v1725
  %v1727 = vpop.xlane.xlu0 %1726
  %v1728 = vsel %vm1640, %v1467, -inf
  %1729 = vmax.xlane.f32.xlu0 %v1728
  %v1730 = vpop.xlane.xlu0 %1729
  %v1731 = vsel %vm1640, %v1472, -inf
  %1732 = vmax.xlane.f32.xlu0 %v1731
  %v1733 = vpop.xlane.xlu0 %1732
  %v1734 = vsel %vm1640, %v1477, -inf
  %1735 = vmax.xlane.f32.xlu0 %v1734
  %v1736 = vpop.xlane.xlu0 %1735
  %v1737 = vsel %vm1640, %v1482, -inf
  %1738 = vmax.xlane.f32.xlu0 %v1737
  %v1739 = vpop.xlane.xlu0 %1738
  %v1740 = vsel %vm1640, %v1487, -inf
  %1741 = vmax.xlane.f32.xlu0 %v1740
  %v1742 = vpop.xlane.xlu0 %1741
  %v1743 = vsel %vm1640, %v1492, -inf
  %1744 = vmax.xlane.f32.xlu0 %v1743
  %v1745 = vpop.xlane.xlu0 %1744
  %v1746 = vsel %vm1640, %v1497, -inf
  %1747 = vmax.xlane.f32.xlu0 %v1746
  %v1748 = vpop.xlane.xlu0 %1747
  %v1749 = vsel %vm1640, %v1502, -inf
  %1750 = vmax.xlane.f32.xlu0 %v1749
  %v1751 = vpop.xlane.xlu0 %1750
  %v1752 = vsel %vm1640, %v1507, -inf
  %1753 = vmax.xlane.f32.xlu0 %v1752
  %v1754 = vpop.xlane.xlu0 %1753
  %v1755 = vsel %vm1640, %v1512, -inf
  %1756 = vmax.xlane.f32.xlu0 %v1755
  %v1757 = vpop.xlane.xlu0 %1756
  %v1758 = vsel %vm1640, %v1517, -inf
  %1759 = vmax.xlane.f32.xlu0 %v1758
  %v1760 = vpop.xlane.xlu0 %1759
  %v1761 = vsel %vm1640, %v1522, -inf
  %1762 = vmax.xlane.f32.xlu0 %v1761
  %v1763 = vpop.xlane.xlu0 %1762
  %v1764 = vsel %vm1640, %v1527, -inf
  %1765 = vmax.xlane.f32.xlu0 %v1764
  %v1766 = vpop.xlane.xlu0 %1765
  %v1767 = vsel %vm1640, %v1532, -inf
  %1768 = vmax.xlane.f32.xlu0 %v1767
  %v1769 = vpop.xlane.xlu0 %1768
  %v1770 = vsel %vm1640, %v1537, -inf
  %1771 = vmax.xlane.f32.xlu0 %v1770
  %v1772 = vpop.xlane.xlu0 %1771
  %v1773 = vsel %vm1640, %v1542, -inf
  %1774 = vmax.xlane.f32.xlu0 %v1773
  %v1775 = vpop.xlane.xlu0 %1774
  %v1776 = vsel %vm1640, %v1547, -inf
  %1777 = vmax.xlane.f32.xlu0 %v1776
  %v1778 = vpop.xlane.xlu0 %1777
  %v1779 = vsel %vm1640, %v1552, -inf
  %1780 = vmax.xlane.f32.xlu0 %v1779
  %v1781 = vpop.xlane.xlu0 %1780
  %v1782 = vsel %vm1640, %v1557, -inf
  %1783 = vmax.xlane.f32.xlu0 %v1782
  %v1784 = vpop.xlane.xlu0 %1783
  %v1785 = vsel %vm1640, %v1562, -inf
  %1786 = vmax.xlane.f32.xlu0 %v1785
  %v1787 = vpop.xlane.xlu0 %1786
  %v1788 = vsel %vm1640, %v1567, -inf
  %1789 = vmax.xlane.f32.xlu0 %v1788
  %v1790 = vpop.xlane.xlu0 %1789
  %v1791 = vsel %vm1640, %v1572, -inf
  %1792 = vmax.xlane.f32.xlu0 %v1791
  %v1793 = vpop.xlane.xlu0 %1792
  %v1794 = vsel %vm1640, %v1577, -inf
  %1795 = vmax.xlane.f32.xlu0 %v1794
  %v1796 = vpop.xlane.xlu0 %1795
  %v1797 = vsel %vm1640, %v1582, -inf
  %1798 = vmax.xlane.f32.xlu0 %v1797
  %v1799 = vpop.xlane.xlu0 %1798
  %v1800 = vsel %vm1640, %v1587, -inf
  %1801 = vmax.xlane.f32.xlu0 %v1800
  %v1802 = vpop.xlane.xlu0 %1801
  %v1803 = vsel %vm1640, %v1592, -inf
  %1804 = vmax.xlane.f32.xlu0 %v1803
  %v1805 = vpop.xlane.xlu0 %1804
  %v1806 = vsel %vm1640, %v1597, -inf
  %1807 = vmax.xlane.f32.xlu0 %v1806
  %v1808 = vpop.xlane.xlu0 %1807
  %v1809 = vsel %vm1640, %v1602, -inf
  %1810 = vmax.xlane.f32.xlu0 %v1809
  %v1811 = vpop.xlane.xlu0 %1810
  %v1812 = vsel %vm1640, %v1607, -inf
  %1813 = vmax.xlane.f32.xlu0 %v1812
  %v1814 = vpop.xlane.xlu0 %1813
  %v1815 = vsel %vm1640, %v1612, -inf
  %1816 = vmax.xlane.f32.xlu0 %v1815
  %v1817 = vpop.xlane.xlu0 %1816
  %v1818 = vsel %vm1640, %v1617, -inf
  %1819 = vmax.xlane.f32.xlu0 %v1818
  %v1820 = vpop.xlane.xlu0 %1819
  %v1821 = vsel %vm1640, %v1622, -inf
  %1822 = vmax.xlane.f32.xlu0 %v1821
  %v1823 = vpop.xlane.xlu0 %1822
  %v1824 = vsel %vm1640, %v1627, -inf
  %1825 = vmax.xlane.f32.xlu0 %v1824
  %v1826 = vpop.xlane.xlu0 %1825
  %v1827 = vsel %vm1640, %v1632, -inf
  %1828 = vmax.xlane.f32.xlu0 %v1827
  %v1829 = vpop.xlane.xlu0 %1828
  %v1830 = vsel %vm1640, %v1637, -inf
  %1831 = vmax.xlane.f32.xlu0 %v1830
  %v1832 = vpop.xlane.xlu0 %1831
  %v1833 = vsub.f32 %v1322, %v1643
  %v1834 = vsub.f32 %v1327, %v1646
  %v1835 = vsub.f32 %v1332, %v1649
  %v1836 = vsub.f32 %v1337, %v1652
  %v1837 = vsub.f32 %v1342, %v1655
  %v1838 = vsub.f32 %v1347, %v1658
  %v1839 = vsub.f32 %v1352, %v1661
  %v1840 = vsub.f32 %v1357, %v1664
  %v1841 = vsub.f32 %v1362, %v1667
  %v1842 = vsub.f32 %v1367, %v1670
  %v1843 = vsub.f32 %v1372, %v1673
  %v1844 = vsub.f32 %v1377, %v1676
  %v1845 = vsub.f32 %v1382, %v1679
  %v1846 = vsub.f32 %v1387, %v1682
  %v1847 = vsub.f32 %v1392, %v1685
  %v1848 = vsub.f32 %v1397, %v1688
  %v1849 = vsub.f32 %v1402, %v1691
  %v1850 = vsub.f32 %v1407, %v1694
  %v1851 = vsub.f32 %v1412, %v1697
  %v1852 = vsub.f32 %v1417, %v1700
  %v1853 = vsub.f32 %v1422, %v1703
  %v1854 = vsub.f32 %v1427, %v1706
  %v1855 = vsub.f32 %v1432, %v1709
  %v1856 = vsub.f32 %v1437, %v1712
  %v1857 = vsub.f32 %v1442, %v1715
  %v1858 = vsub.f32 %v1447, %v1718
  %v1859 = vsub.f32 %v1452, %v1721
  %v1860 = vsub.f32 %v1457, %v1724
  %v1861 = vsub.f32 %v1462, %v1727
  %v1862 = vsub.f32 %v1467, %v1730
  %v1863 = vsub.f32 %v1472, %v1733
  %v1864 = vsub.f32 %v1477, %v1736
  %v1865 = vsub.f32 %v1482, %v1739
  %v1866 = vsub.f32 %v1487, %v1742
  %v1867 = vsub.f32 %v1492, %v1745
  %v1868 = vsub.f32 %v1497, %v1748
  %v1869 = vsub.f32 %v1502, %v1751
  %v1870 = vsub.f32 %v1507, %v1754
  %v1871 = vsub.f32 %v1512, %v1757
  %v1872 = vsub.f32 %v1517, %v1760
  %v1873 = vsub.f32 %v1522, %v1763
  %v1874 = vsub.f32 %v1527, %v1766
  %v1875 = vsub.f32 %v1532, %v1769
  %v1876 = vsub.f32 %v1537, %v1772
  %v1877 = vsub.f32 %v1542, %v1775
  %v1878 = vsub.f32 %v1547, %v1778
  %v1879 = vsub.f32 %v1552, %v1781
  %v1880 = vsub.f32 %v1557, %v1784
  %v1881 = vsub.f32 %v1562, %v1787
  %v1882 = vsub.f32 %v1567, %v1790
  %v1883 = vsub.f32 %v1572, %v1793
  %v1884 = vsub.f32 %v1577, %v1796
  %v1885 = vsub.f32 %v1582, %v1799
  %v1886 = vsub.f32 %v1587, %v1802
  %v1887 = vsub.f32 %v1592, %v1805
  %v1888 = vsub.f32 %v1597, %v1808
  %v1889 = vsub.f32 %v1602, %v1811
  %v1890 = vsub.f32 %v1607, %v1814
  %v1891 = vsub.f32 %v1612, %v1817
  %v1892 = vsub.f32 %v1617, %v1820
  %v1893 = vsub.f32 %v1622, %v1823
  %v1894 = vsub.f32 %v1627, %v1826
  %v1895 = vsub.f32 %v1632, %v1829
  %v1896 = vsub.f32 %v1637, %v1832
  %v1897 = vmul.f32 %v1833, 1.442695
  %v1898 = vpow.pop %v1897
  %v1899 = vmul.f32 %v1834, 1.442695
  %v1900 = vpow.pop %v1899
  %v1901 = vmul.f32 %v1835, 1.442695
  %v1902 = vpow.pop %v1901
  %v1903 = vmul.f32 %v1836, 1.442695
  %v1904 = vpow.pop %v1903
  %v1905 = vmul.f32 %v1837, 1.442695
  %v1906 = vpow.pop %v1905
  %v1907 = vmul.f32 %v1838, 1.442695
  %v1908 = vpow.pop %v1907
  %v1909 = vmul.f32 %v1839, 1.442695
  %v1910 = vpow.pop %v1909
  %v1911 = vmul.f32 %v1840, 1.442695
  %v1912 = vpow.pop %v1911
  %v1913 = vmul.f32 %v1841, 1.442695
  %v1914 = vpow.pop %v1913
  %v1915 = vmul.f32 %v1842, 1.442695
  %v1916 = vpow.pop %v1915
  %v1917 = vmul.f32 %v1843, 1.442695
  %v1918 = vpow.pop %v1917
  %v1919 = vmul.f32 %v1844, 1.442695
  %v1920 = vpow.pop %v1919
  %v1921 = vmul.f32 %v1845, 1.442695
  %v1922 = vpow.pop %v1921
  %v1923 = vmul.f32 %v1846, 1.442695
  %v1924 = vpow.pop %v1923
  %v1925 = vmul.f32 %v1847, 1.442695
  %v1926 = vpow.pop %v1925
  %v1927 = vmul.f32 %v1848, 1.442695
  %v1928 = vpow.pop %v1927
  %v1929 = vmul.f32 %v1849, 1.442695
  %v1930 = vpow.pop %v1929
  %v1931 = vmul.f32 %v1850, 1.442695
  %v1932 = vpow.pop %v1931
  %v1933 = vmul.f32 %v1851, 1.442695
  %v1934 = vpow.pop %v1933
  %v1935 = vmul.f32 %v1852, 1.442695
  %v1936 = vpow.pop %v1935
  %v1937 = vmul.f32 %v1853, 1.442695
  %v1938 = vpow.pop %v1937
  %v1939 = vmul.f32 %v1854, 1.442695
  %v1940 = vpow.pop %v1939
  %v1941 = vmul.f32 %v1855, 1.442695
  %v1942 = vpow.pop %v1941
  %v1943 = vmul.f32 %v1856, 1.442695
  %v1944 = vpow.pop %v1943
  %v1945 = vmul.f32 %v1857, 1.442695
  %v1946 = vpow.pop %v1945
  %v1947 = vmul.f32 %v1858, 1.442695
  %v1948 = vpow.pop %v1947
  %v1949 = vmul.f32 %v1859, 1.442695
  %v1950 = vpow.pop %v1949
  %v1951 = vmul.f32 %v1860, 1.442695
  %v1952 = vpow.pop %v1951
  %v1953 = vmul.f32 %v1861, 1.442695
  %v1954 = vpow.pop %v1953
  %v1955 = vmul.f32 %v1862, 1.442695
  %v1956 = vpow.pop %v1955
  %v1957 = vmul.f32 %v1863, 1.442695
  %v1958 = vpow.pop %v1957
  %v1959 = vmul.f32 %v1864, 1.442695
  %v1960 = vpow.pop %v1959
  %v1961 = vmul.f32 %v1865, 1.442695
  %v1962 = vpow.pop %v1961
  %v1963 = vmul.f32 %v1866, 1.442695
  %v1964 = vpow.pop %v1963
  %v1965 = vmul.f32 %v1867, 1.442695
  %v1966 = vpow.pop %v1965
  %v1967 = vmul.f32 %v1868, 1.442695
  %v1968 = vpow.pop %v1967
  %v1969 = vmul.f32 %v1869, 1.442695
  %v1970 = vpow.pop %v1969
  %v1971 = vmul.f32 %v1870, 1.442695
  %v1972 = vpow.pop %v1971
  %v1973 = vmul.f32 %v1871, 1.442695
  %v1974 = vpow.pop %v1973
  %v1975 = vmul.f32 %v1872, 1.442695
  %v1976 = vpow.pop %v1975
  %v1977 = vmul.f32 %v1873, 1.442695
  %v1978 = vpow.pop %v1977
  %v1979 = vmul.f32 %v1874, 1.442695
  %v1980 = vpow.pop %v1979
  %v1981 = vmul.f32 %v1875, 1.442695
  %v1982 = vpow.pop %v1981
  %v1983 = vmul.f32 %v1876, 1.442695
  %v1984 = vpow.pop %v1983
  %v1985 = vmul.f32 %v1877, 1.442695
  %v1986 = vpow.pop %v1985
  %v1987 = vmul.f32 %v1878, 1.442695
  %v1988 = vpow.pop %v1987
  %v1989 = vmul.f32 %v1879, 1.442695
  %v1990 = vpow.pop %v1989
  %v1991 = vmul.f32 %v1880, 1.442695
  %v1992 = vpow.pop %v1991
  %v1993 = vmul.f32 %v1881, 1.442695
  %v1994 = vpow.pop %v1993
  %v1995 = vmul.f32 %v1882, 1.442695
  %v1996 = vpow.pop %v1995
  %v1997 = vmul.f32 %v1883, 1.442695
  %v1998 = vpow.pop %v1997
  %v1999 = vmul.f32 %v1884, 1.442695
  %v2000 = vpow.pop %v1999
  %v2001 = vmul.f32 %v1885, 1.442695
  %v2002 = vpow.pop %v2001
  %v2003 = vmul.f32 %v1886, 1.442695
  %v2004 = vpow.pop %v2003
  %v2005 = vmul.f32 %v1887, 1.442695
  %v2006 = vpow.pop %v2005
  %v2007 = vmul.f32 %v1888, 1.442695
  %v2008 = vpow.pop %v2007
  %v2009 = vmul.f32 %v1889, 1.442695
  %v2010 = vpow.pop %v2009
  %v2011 = vmul.f32 %v1890, 1.442695
  %v2012 = vpow.pop %v2011
  %v2013 = vmul.f32 %v1891, 1.442695
  %v2014 = vpow.pop %v2013
  %v2015 = vmul.f32 %v1892, 1.442695
  %v2016 = vpow.pop %v2015
  %v2017 = vmul.f32 %v1893, 1.442695
  %v2018 = vpow.pop %v2017
  %v2019 = vmul.f32 %v1894, 1.442695
  %v2020 = vpow.pop %v2019
  %v2021 = vmul.f32 %v1895, 1.442695
  %v2022 = vpow.pop %v2021
  %v2023 = vmul.f32 %v1896, 1.442695
  %v2024 = vpow.pop %v2023
  %v2025 = vsel %vm1640, %v1898, 0.0
  %2026 = vadd.xlane.f32.xlu0 %v2025
  %v2027 = vpop.xlane.xlu0 %2026
  %v2028 = vsel %vm1640, %v1900, 0.0
  %2029 = vadd.xlane.f32.xlu0 %v2028
  %v2030 = vpop.xlane.xlu0 %2029
  %v2031 = vsel %vm1640, %v1902, 0.0
  %2032 = vadd.xlane.f32.xlu0 %v2031
  %v2033 = vpop.xlane.xlu0 %2032
  %v2034 = vsel %vm1640, %v1904, 0.0
  %2035 = vadd.xlane.f32.xlu0 %v2034
  %v2036 = vpop.xlane.xlu0 %2035
  %v2037 = vsel %vm1640, %v1906, 0.0
  %2038 = vadd.xlane.f32.xlu0 %v2037
  %v2039 = vpop.xlane.xlu0 %2038
  %v2040 = vsel %vm1640, %v1908, 0.0
  %2041 = vadd.xlane.f32.xlu0 %v2040
  %v2042 = vpop.xlane.xlu0 %2041
  %v2043 = vsel %vm1640, %v1910, 0.0
  %2044 = vadd.xlane.f32.xlu0 %v2043
  %v2045 = vpop.xlane.xlu0 %2044
  %v2046 = vsel %vm1640, %v1912, 0.0
  %2047 = vadd.xlane.f32.xlu0 %v2046
  %v2048 = vpop.xlane.xlu0 %2047
  %v2049 = vsel %vm1640, %v1914, 0.0
  %2050 = vadd.xlane.f32.xlu0 %v2049
  %v2051 = vpop.xlane.xlu0 %2050
  %v2052 = vsel %vm1640, %v1916, 0.0
  %2053 = vadd.xlane.f32.xlu0 %v2052
  %v2054 = vpop.xlane.xlu0 %2053
  %v2055 = vsel %vm1640, %v1918, 0.0
  %2056 = vadd.xlane.f32.xlu0 %v2055
  %v2057 = vpop.xlane.xlu0 %2056
  %v2058 = vsel %vm1640, %v1920, 0.0
  %2059 = vadd.xlane.f32.xlu0 %v2058
  %v2060 = vpop.xlane.xlu0 %2059
  %v2061 = vsel %vm1640, %v1922, 0.0
  %2062 = vadd.xlane.f32.xlu0 %v2061
  %v2063 = vpop.xlane.xlu0 %2062
  %v2064 = vsel %vm1640, %v1924, 0.0
  %2065 = vadd.xlane.f32.xlu0 %v2064
  %v2066 = vpop.xlane.xlu0 %2065
  %v2067 = vsel %vm1640, %v1926, 0.0
  %2068 = vadd.xlane.f32.xlu0 %v2067
  %v2069 = vpop.xlane.xlu0 %2068
  %v2070 = vsel %vm1640, %v1928, 0.0
  %2071 = vadd.xlane.f32.xlu0 %v2070
  %v2072 = vpop.xlane.xlu0 %2071
  %v2073 = vsel %vm1640, %v1930, 0.0
  %2074 = vadd.xlane.f32.xlu0 %v2073
  %v2075 = vpop.xlane.xlu0 %2074
  %v2076 = vsel %vm1640, %v1932, 0.0
  %2077 = vadd.xlane.f32.xlu0 %v2076
  %v2078 = vpop.xlane.xlu0 %2077
  %v2079 = vsel %vm1640, %v1934, 0.0
  %2080 = vadd.xlane.f32.xlu0 %v2079
  %v2081 = vpop.xlane.xlu0 %2080
  %v2082 = vsel %vm1640, %v1936, 0.0
  %2083 = vadd.xlane.f32.xlu0 %v2082
  %v2084 = vpop.xlane.xlu0 %2083
  %v2085 = vsel %vm1640, %v1938, 0.0
  %2086 = vadd.xlane.f32.xlu0 %v2085
  %v2087 = vpop.xlane.xlu0 %2086
  %v2088 = vsel %vm1640, %v1940, 0.0
  %2089 = vadd.xlane.f32.xlu0 %v2088
  %v2090 = vpop.xlane.xlu0 %2089
  %v2091 = vsel %vm1640, %v1942, 0.0
  %2092 = vadd.xlane.f32.xlu0 %v2091
  %v2093 = vpop.xlane.xlu0 %2092
  %v2094 = vsel %vm1640, %v1944, 0.0
  %2095 = vadd.xlane.f32.xlu0 %v2094
  %v2096 = vpop.xlane.xlu0 %2095
  %v2097 = vsel %vm1640, %v1946, 0.0
  %2098 = vadd.xlane.f32.xlu0 %v2097
  %v2099 = vpop.xlane.xlu0 %2098
  %v2100 = vsel %vm1640, %v1948, 0.0
  %2101 = vadd.xlane.f32.xlu0 %v2100
  %v2102 = vpop.xlane.xlu0 %2101
  %v2103 = vsel %vm1640, %v1950, 0.0
  %2104 = vadd.xlane.f32.xlu0 %v2103
  %v2105 = vpop.xlane.xlu0 %2104
  %v2106 = vsel %vm1640, %v1952, 0.0
  %2107 = vadd.xlane.f32.xlu0 %v2106
  %v2108 = vpop.xlane.xlu0 %2107
  %v2109 = vsel %vm1640, %v1954, 0.0
  %2110 = vadd.xlane.f32.xlu0 %v2109
  %v2111 = vpop.xlane.xlu0 %2110
  %v2112 = vsel %vm1640, %v1956, 0.0
  %2113 = vadd.xlane.f32.xlu0 %v2112
  %v2114 = vpop.xlane.xlu0 %2113
  %v2115 = vsel %vm1640, %v1958, 0.0
  %2116 = vadd.xlane.f32.xlu0 %v2115
  %v2117 = vpop.xlane.xlu0 %2116
  %v2118 = vsel %vm1640, %v1960, 0.0
  %2119 = vadd.xlane.f32.xlu0 %v2118
  %v2120 = vpop.xlane.xlu0 %2119
  %v2121 = vsel %vm1640, %v1962, 0.0
  %2122 = vadd.xlane.f32.xlu0 %v2121
  %v2123 = vpop.xlane.xlu0 %2122
  %v2124 = vsel %vm1640, %v1964, 0.0
  %2125 = vadd.xlane.f32.xlu0 %v2124
  %v2126 = vpop.xlane.xlu0 %2125
  %v2127 = vsel %vm1640, %v1966, 0.0
  %2128 = vadd.xlane.f32.xlu0 %v2127
  %v2129 = vpop.xlane.xlu0 %2128
  %v2130 = vsel %vm1640, %v1968, 0.0
  %2131 = vadd.xlane.f32.xlu0 %v2130
  %v2132 = vpop.xlane.xlu0 %2131
  %v2133 = vsel %vm1640, %v1970, 0.0
  %2134 = vadd.xlane.f32.xlu0 %v2133
  %v2135 = vpop.xlane.xlu0 %2134
  %v2136 = vsel %vm1640, %v1972, 0.0
  %2137 = vadd.xlane.f32.xlu0 %v2136
  %v2138 = vpop.xlane.xlu0 %2137
  %v2139 = vsel %vm1640, %v1974, 0.0
  %2140 = vadd.xlane.f32.xlu0 %v2139
  %v2141 = vpop.xlane.xlu0 %2140
  %v2142 = vsel %vm1640, %v1976, 0.0
  %2143 = vadd.xlane.f32.xlu0 %v2142
  %v2144 = vpop.xlane.xlu0 %2143
  %v2145 = vsel %vm1640, %v1978, 0.0
  %2146 = vadd.xlane.f32.xlu0 %v2145
  %v2147 = vpop.xlane.xlu0 %2146
  %v2148 = vsel %vm1640, %v1980, 0.0
  %2149 = vadd.xlane.f32.xlu0 %v2148
  %v2150 = vpop.xlane.xlu0 %2149
  %v2151 = vsel %vm1640, %v1982, 0.0
  %2152 = vadd.xlane.f32.xlu0 %v2151
  %v2153 = vpop.xlane.xlu0 %2152
  %v2154 = vsel %vm1640, %v1984, 0.0
  %2155 = vadd.xlane.f32.xlu0 %v2154
  %v2156 = vpop.xlane.xlu0 %2155
  %v2157 = vsel %vm1640, %v1986, 0.0
  %2158 = vadd.xlane.f32.xlu0 %v2157
  %v2159 = vpop.xlane.xlu0 %2158
  %v2160 = vsel %vm1640, %v1988, 0.0
  %2161 = vadd.xlane.f32.xlu0 %v2160
  %v2162 = vpop.xlane.xlu0 %2161
  %v2163 = vsel %vm1640, %v1990, 0.0
  %2164 = vadd.xlane.f32.xlu0 %v2163
  %v2165 = vpop.xlane.xlu0 %2164
  %v2166 = vsel %vm1640, %v1992, 0.0
  %2167 = vadd.xlane.f32.xlu0 %v2166
  %v2168 = vpop.xlane.xlu0 %2167
  %v2169 = vsel %vm1640, %v1994, 0.0
  %2170 = vadd.xlane.f32.xlu0 %v2169
  %v2171 = vpop.xlane.xlu0 %2170
  %v2172 = vsel %vm1640, %v1996, 0.0
  %2173 = vadd.xlane.f32.xlu0 %v2172
  %v2174 = vpop.xlane.xlu0 %2173
  %v2175 = vsel %vm1640, %v1998, 0.0
  %2176 = vadd.xlane.f32.xlu0 %v2175
  %v2177 = vpop.xlane.xlu0 %2176
  %v2178 = vsel %vm1640, %v2000, 0.0
  %2179 = vadd.xlane.f32.xlu0 %v2178
  %v2180 = vpop.xlane.xlu0 %2179
  %v2181 = vsel %vm1640, %v2002, 0.0
  %2182 = vadd.xlane.f32.xlu0 %v2181
  %v2183 = vpop.xlane.xlu0 %2182
  %v2184 = vsel %vm1640, %v2004, 0.0
  %2185 = vadd.xlane.f32.xlu0 %v2184
  %v2186 = vpop.xlane.xlu0 %2185
  %v2187 = vsel %vm1640, %v2006, 0.0
  %2188 = vadd.xlane.f32.xlu0 %v2187
  %v2189 = vpop.xlane.xlu0 %2188
  %v2190 = vsel %vm1640, %v2008, 0.0
  %2191 = vadd.xlane.f32.xlu0 %v2190
  %v2192 = vpop.xlane.xlu0 %2191
  %v2193 = vsel %vm1640, %v2010, 0.0
  %2194 = vadd.xlane.f32.xlu0 %v2193
  %v2195 = vpop.xlane.xlu0 %2194
  %v2196 = vsel %vm1640, %v2012, 0.0
  %2197 = vadd.xlane.f32.xlu0 %v2196
  %v2198 = vpop.xlane.xlu0 %2197
  %v2199 = vsel %vm1640, %v2014, 0.0
  %2200 = vadd.xlane.f32.xlu0 %v2199
  %v2201 = vpop.xlane.xlu0 %2200
  %v2202 = vsel %vm1640, %v2016, 0.0
  %2203 = vadd.xlane.f32.xlu0 %v2202
  %v2204 = vpop.xlane.xlu0 %2203
  %v2205 = vsel %vm1640, %v2018, 0.0
  %2206 = vadd.xlane.f32.xlu0 %v2205
  %v2207 = vpop.xlane.xlu0 %2206
  %v2208 = vsel %vm1640, %v2020, 0.0
  %2209 = vadd.xlane.f32.xlu0 %v2208
  %v2210 = vpop.xlane.xlu0 %2209
  %v2211 = vsel %vm1640, %v2022, 0.0
  %2212 = vadd.xlane.f32.xlu0 %v2211
  %v2213 = vpop.xlane.xlu0 %2212
  %v2214 = vsel %vm1640, %v2024, 0.0
  %2215 = vadd.xlane.f32.xlu0 %v2214
  %v2216 = vpop.xlane.xlu0 %2215
  %v2217 = vrcp.pop %v2027
  %v2218 = vrcp.pop %v2030
  %v2219 = vrcp.pop %v2033
  %v2220 = vrcp.pop %v2036
  %v2221 = vrcp.pop %v2039
  %v2222 = vrcp.pop %v2042
  %v2223 = vrcp.pop %v2045
  %v2224 = vrcp.pop %v2048
  %v2225 = vrcp.pop %v2051
  %v2226 = vrcp.pop %v2054
  %v2227 = vrcp.pop %v2057
  %v2228 = vrcp.pop %v2060
  %v2229 = vrcp.pop %v2063
  %v2230 = vrcp.pop %v2066
  %v2231 = vrcp.pop %v2069
  %v2232 = vrcp.pop %v2072
  %v2233 = vrcp.pop %v2075
  %v2234 = vrcp.pop %v2078
  %v2235 = vrcp.pop %v2081
  %v2236 = vrcp.pop %v2084
  %v2237 = vrcp.pop %v2087
  %v2238 = vrcp.pop %v2090
  %v2239 = vrcp.pop %v2093
  %v2240 = vrcp.pop %v2096
  %v2241 = vrcp.pop %v2099
  %v2242 = vrcp.pop %v2102
  %v2243 = vrcp.pop %v2105
  %v2244 = vrcp.pop %v2108
  %v2245 = vrcp.pop %v2111
  %v2246 = vrcp.pop %v2114
  %v2247 = vrcp.pop %v2117
  %v2248 = vrcp.pop %v2120
  %v2249 = vrcp.pop %v2123
  %v2250 = vrcp.pop %v2126
  %v2251 = vrcp.pop %v2129
  %v2252 = vrcp.pop %v2132
  %v2253 = vrcp.pop %v2135
  %v2254 = vrcp.pop %v2138
  %v2255 = vrcp.pop %v2141
  %v2256 = vrcp.pop %v2144
  %v2257 = vrcp.pop %v2147
  %v2258 = vrcp.pop %v2150
  %v2259 = vrcp.pop %v2153
  %v2260 = vrcp.pop %v2156
  %v2261 = vrcp.pop %v2159
  %v2262 = vrcp.pop %v2162
  %v2263 = vrcp.pop %v2165
  %v2264 = vrcp.pop %v2168
  %v2265 = vrcp.pop %v2171
  %v2266 = vrcp.pop %v2174
  %v2267 = vrcp.pop %v2177
  %v2268 = vrcp.pop %v2180
  %v2269 = vrcp.pop %v2183
  %v2270 = vrcp.pop %v2186
  %v2271 = vrcp.pop %v2189
  %v2272 = vrcp.pop %v2192
  %v2273 = vrcp.pop %v2195
  %v2274 = vrcp.pop %v2198
  %v2275 = vrcp.pop %v2201
  %v2276 = vrcp.pop %v2204
  %v2277 = vrcp.pop %v2207
  %v2278 = vrcp.pop %v2210
  %v2279 = vrcp.pop %v2213
  %v2280 = vrcp.pop %v2216
  %v2281 = vmul.f32 %v1898, %v2217
  %v2282 = vmul.f32 %v1900, %v2218
  %v2283 = vmul.f32 %v1902, %v2219
  %v2284 = vmul.f32 %v1904, %v2220
  %v2285 = vmul.f32 %v1906, %v2221
  %v2286 = vmul.f32 %v1908, %v2222
  %v2287 = vmul.f32 %v1910, %v2223
  %v2288 = vmul.f32 %v1912, %v2224
  %v2289 = vmul.f32 %v1914, %v2225
  %v2290 = vmul.f32 %v1916, %v2226
  %v2291 = vmul.f32 %v1918, %v2227
  %v2292 = vmul.f32 %v1920, %v2228
  %v2293 = vmul.f32 %v1922, %v2229
  %v2294 = vmul.f32 %v1924, %v2230
  %v2295 = vmul.f32 %v1926, %v2231
  %v2296 = vmul.f32 %v1928, %v2232
  %v2297 = vmul.f32 %v1930, %v2233
  %v2298 = vmul.f32 %v1932, %v2234
  %v2299 = vmul.f32 %v1934, %v2235
  %v2300 = vmul.f32 %v1936, %v2236
  %v2301 = vmul.f32 %v1938, %v2237
  %v2302 = vmul.f32 %v1940, %v2238
  %v2303 = vmul.f32 %v1942, %v2239
  %v2304 = vmul.f32 %v1944, %v2240
  %v2305 = vmul.f32 %v1946, %v2241
  %v2306 = vmul.f32 %v1948, %v2242
  %v2307 = vmul.f32 %v1950, %v2243
  %v2308 = vmul.f32 %v1952, %v2244
  %v2309 = vmul.f32 %v1954, %v2245
  %v2310 = vmul.f32 %v1956, %v2246
  %v2311 = vmul.f32 %v1958, %v2247
  %v2312 = vmul.f32 %v1960, %v2248
  %v2313 = vmul.f32 %v1962, %v2249
  %v2314 = vmul.f32 %v1964, %v2250
  %v2315 = vmul.f32 %v1966, %v2251
  %v2316 = vmul.f32 %v1968, %v2252
  %v2317 = vmul.f32 %v1970, %v2253
  %v2318 = vmul.f32 %v1972, %v2254
  %v2319 = vmul.f32 %v1974, %v2255
  %v2320 = vmul.f32 %v1976, %v2256
  %v2321 = vmul.f32 %v1978, %v2257
  %v2322 = vmul.f32 %v1980, %v2258
  %v2323 = vmul.f32 %v1982, %v2259
  %v2324 = vmul.f32 %v1984, %v2260
  %v2325 = vmul.f32 %v1986, %v2261
  %v2326 = vmul.f32 %v1988, %v2262
  %v2327 = vmul.f32 %v1990, %v2263
  %v2328 = vmul.f32 %v1992, %v2264
  %v2329 = vmul.f32 %v1994, %v2265
  %v2330 = vmul.f32 %v1996, %v2266
  %v2331 = vmul.f32 %v1998, %v2267
  %v2332 = vmul.f32 %v2000, %v2268
  %v2333 = vmul.f32 %v2002, %v2269
  %v2334 = vmul.f32 %v2004, %v2270
  %v2335 = vmul.f32 %v2006, %v2271
  %v2336 = vmul.f32 %v2008, %v2272
  %v2337 = vmul.f32 %v2010, %v2273
  %v2338 = vmul.f32 %v2012, %v2274
  %v2339 = vmul.f32 %v2014, %v2275
  %v2340 = vmul.f32 %v2016, %v2276
  %v2341 = vmul.f32 %v2018, %v2277
  %v2342 = vmul.f32 %v2020, %v2278
  %v2343 = vmul.f32 %v2022, %v2279
  %v2344 = vmul.f32 %v2024, %v2280
  %v2345 = vld [vmem:[%s5] sm:$0xff]
  %v2346 = vld [vmem:[%s5 + $0x8] sm:$0x1]
  %v2348 = vsel %vm1640, %v2281, 0
  %v2351 = vsel %vm1640, %v2282, 0
  %v2354 = vsel %vm1640, %v2283, 0
  %v2357 = vsel %vm1640, %v2284, 0
  %v2360 = vsel %vm1640, %v2285, 0
  %v2363 = vsel %vm1640, %v2286, 0
  %v2366 = vsel %vm1640, %v2287, 0
  %v2369 = vsel %vm1640, %v2288, 0
  %v2372 = vsel %vm1640, %v2289, 0
  %v2375 = vsel %vm1640, %v2290, 0
  %v2378 = vsel %vm1640, %v2291, 0
  %v2381 = vsel %vm1640, %v2292, 0
  %v2384 = vsel %vm1640, %v2293, 0
  %v2387 = vsel %vm1640, %v2294, 0
  %v2390 = vsel %vm1640, %v2295, 0
  %v2393 = vsel %vm1640, %v2296, 0
  %v2396 = vsel %vm1640, %v2297, 0
  %v2399 = vsel %vm1640, %v2298, 0
  %v2402 = vsel %vm1640, %v2299, 0
  %v2405 = vsel %vm1640, %v2300, 0
  %v2408 = vsel %vm1640, %v2301, 0
  %v2411 = vsel %vm1640, %v2302, 0
  %v2414 = vsel %vm1640, %v2303, 0
  %v2417 = vsel %vm1640, %v2304, 0
  %v2420 = vsel %vm1640, %v2305, 0
  %v2423 = vsel %vm1640, %v2306, 0
  %v2426 = vsel %vm1640, %v2307, 0
  %v2429 = vsel %vm1640, %v2308, 0
  %v2432 = vsel %vm1640, %v2309, 0
  %v2435 = vsel %vm1640, %v2310, 0
  %v2438 = vsel %vm1640, %v2311, 0
  %v2441 = vsel %vm1640, %v2312, 0
  %v2444 = vsel %vm1640, %v2313, 0
  %v2447 = vsel %vm1640, %v2314, 0
  %v2450 = vsel %vm1640, %v2315, 0
  %v2453 = vsel %vm1640, %v2316, 0
  %v2456 = vsel %vm1640, %v2317, 0
  %v2459 = vsel %vm1640, %v2318, 0
  %v2462 = vsel %vm1640, %v2319, 0
  %v2465 = vsel %vm1640, %v2320, 0
  %v2468 = vsel %vm1640, %v2321, 0
  %v2471 = vsel %vm1640, %v2322, 0
  %v2474 = vsel %vm1640, %v2323, 0
  %v2477 = vsel %vm1640, %v2324, 0
  %v2480 = vsel %vm1640, %v2325, 0
  %v2483 = vsel %vm1640, %v2326, 0
  %v2486 = vsel %vm1640, %v2327, 0
  %v2489 = vsel %vm1640, %v2328, 0
  %v2492 = vsel %vm1640, %v2329, 0
  %v2495 = vsel %vm1640, %v2330, 0
  %v2498 = vsel %vm1640, %v2331, 0
  %v2501 = vsel %vm1640, %v2332, 0
  %v2504 = vsel %vm1640, %v2333, 0
  %v2507 = vsel %vm1640, %v2334, 0
  %v2510 = vsel %vm1640, %v2335, 0
  %v2513 = vsel %vm1640, %v2336, 0
  %v2516 = vsel %vm1640, %v2337, 0
  %v2519 = vsel %vm1640, %v2338, 0
  %v2522 = vsel %vm1640, %v2339, 0
  %v2525 = vsel %vm1640, %v2340, 0
  %v2528 = vsel %vm1640, %v2341, 0
  %v2531 = vsel %vm1640, %v2342, 0
  %v2534 = vsel %vm1640, %v2343, 0
  %v2537 = vsel %vm1640, %v2344, 0
  %vm2539 = vcmask 1040384
  %v2541 = vsel %vm2539, %v2346, 0
  %2543 = vmatprep.subr.mxu0 0.0
  %2544 = vmatpush1.msra.mxu0 %v2345
  %2545 = vmatprep.subr.mxu0 0.0
  %2546 = vmatpush1.msra.mxu0 %v2541
  %2547 = vmatprep.subr.mxu0 0.0
  %2548 = vmatpush1.msra.mxu0 0.0
  %2549 = vmatprep.subr.mxu0 0.0
  %2550 = vmatpush1.msra.mxu0 0.0
  %2551 = vmatprep.subr.mxu0 0.0
  %2552 = vmatpush1.msra.mxu0 0.0
  %2553 = vmatprep.subr.mxu0 0.0
  %2554 = vmatpush1.msra.mxu0 0.0
  %2555 = vmatprep.subr.mxu0 0.0
  %2556 = vmatpush1.msra.mxu0 0.0
  %2557 = vmatprep.subr.mxu0 0.0
  %2558 = vmatpush1.msra.mxu0 0.0
  %2559 = vmatprep.subr.mxu0 0.0
  %2560 = vmatpush1.msra.mxu0 0.0
  %2561 = vmatprep.subr.mxu0 0.0
  %2562 = vmatpush1.msra.mxu0 0.0
  %2563 = vmatprep.subr.mxu0 0.0
  %2564 = vmatpush1.msra.mxu0 0.0
  %2565 = vmatprep.subr.mxu0 0.0
  %2566 = vmatpush1.msra.mxu0 0.0
  %2567 = vmatprep.subr.mxu0 0.0
  %2568 = vmatpush1.msra.mxu0 0.0
  %2569 = vmatprep.subr.mxu0 0.0
  %2570 = vmatpush1.msra.mxu0 0.0
  %2571 = vmatprep.subr.mxu0 0.0
  %2572 = vmatpush1.msra.mxu0 0.0
  %2573 = vmatprep.subr.mxu0 0.0
  %2574 = vmatpush1.msra.mxu0 0.0
  %2575 = vmatprep.subr.mxu0 0.0
  %2576 = vmatpush1.msra.mxu0 0.0
  %2577 = vmatprep.subr.mxu0 0.0
  %2578 = vmatpush1.msra.mxu0 0.0
  %2579 = vmatprep.subr.mxu0 0.0
  %2580 = vmatpush1.msra.mxu0 0.0
  %2581 = vmatprep.subr.mxu0 0.0
  %2582 = vmatpush1.msra.mxu0 0.0
  %2583 = vmatprep.subr.mxu0 0.0
  %2584 = vmatpush1.msra.mxu0 0.0
  %2585 = vmatprep.subr.mxu0 0.0
  %2586 = vmatpush1.msra.mxu0 0.0
  %2587 = vmatprep.subr.mxu0 0.0
  %2588 = vmatpush1.msra.mxu0 0.0
  %2589 = vmatprep.subr.mxu0 0.0
  %2590 = vmatpush1.msra.mxu0 0.0
  %2591 = vmatprep.subr.mxu0 0.0
  %2592 = vmatpush1.msra.mxu0 0.0
  %2593 = vmatprep.subr.mxu0 0.0
  %2594 = vmatpush1.msra.mxu0 0.0
  %2595 = vmatprep.subr.mxu0 0.0
  %2596 = vmatpush1.msra.mxu0 0.0
  %2597 = vmatprep.subr.mxu0 0.0
  %2598 = vmatpush1.msra.mxu0 0.0
  %2599 = vmatprep.subr.mxu0 0.0
  %2600 = vmatpush1.msra.mxu0 0.0
  %2601 = vmatprep.subr.mxu0 0.0
  %2602 = vmatpush1.msra.mxu0 0.0
  %2603 = vmatprep.subr.mxu0 0.0
  %2604 = vmatpush1.msra.mxu0 0.0
  %2605 = vmatprep.subr.mxu0 0.0
  %2606 = vmatpush1.msra.mxu0 0.0
  %2607 = vmatprep.mubr.f32.mxu0 0.0
  %2608 = vmatmul.mubr.f32.gmra.mrb[0].mxu0 %v2348
  %v2609 = vpop.f32.mrb[0].mxu0
  %v2610 = vadd.f32 0.0, %v2609
  %v2611 = vpop.f32.mrb[0].mxu0
  %2612 = vmatprep.mubr.f32.mxu0 0.0
  %2613 = vmatmul.mubr.f32.gmra.mrb[0].mxu0 %v2351
  %v2614 = vpop.f32.mrb[0].mxu0
  %v2615 = vadd.f32 0.0, %v2614
  %v2616 = vpop.f32.mrb[0].mxu0
  %2617 = vmatprep.mubr.f32.mxu0 0.0
  %2618 = vmatmul.mubr.f32.gmra.mrb[0].mxu0 %v2354
  %v2619 = vpop.f32.mrb[0].mxu0
  %v2620 = vadd.f32 0.0, %v2619
  %v2621 = vpop.f32.mrb[0].mxu0
  %2622 = vmatprep.mubr.f32.mxu0 0.0
  %2623 = vmatmul.mubr.f32.gmra.mrb[0].mxu0 %v2357
  %v2624 = vpop.f32.mrb[0].mxu0
  %v2625 = vadd.f32 0.0, %v2624
  %v2626 = vpop.f32.mrb[0].mxu0
  %2627 = vmatprep.mubr.f32.mxu0 0.0
  %2628 = vmatmul.mubr.f32.gmra.mrb[0].mxu0 %v2360
  %v2629 = vpop.f32.mrb[0].mxu0
  %v2630 = vadd.f32 0.0, %v2629
  %v2631 = vpop.f32.mrb[0].mxu0
  %2632 = vmatprep.mubr.f32.mxu0 0.0
  %2633 = vmatmul.mubr.f32.gmra.mrb[0].mxu0 %v2363
  %v2634 = vpop.f32.mrb[0].mxu0
  %v2635 = vadd.f32 0.0, %v2634
  %v2636 = vpop.f32.mrb[0].mxu0
  %2637 = vmatprep.mubr.f32.mxu0 0.0
  %2638 = vmatmul.mubr.f32.gmra.mrb[0].mxu0 %v2366
  %v2639 = vpop.f32.mrb[0].mxu0
  %v2640 = vadd.f32 0.0, %v2639
  %v2641 = vpop.f32.mrb[0].mxu0
  %2642 = vmatprep.mubr.f32.mxu0 0.0
  %2643 = vmatmul.mubr.f32.gmra.mrb[0].mxu0 %v2369
  %v2644 = vpop.f32.mrb[0].mxu0
  %v2645 = vadd.f32 0.0, %v2644
  %v2646 = vpop.f32.mrb[0].mxu0
  %2647 = vmatprep.mubr.f32.mxu0 0.0
  %2648 = vmatmul.mubr.f32.gmra.mrb[0].mxu0 %v2372
  %v2649 = vpop.f32.mrb[0].mxu0
  %v2650 = vadd.f32 0.0, %v2649
  %v2651 = vpop.f32.mrb[0].mxu0
  %2652 = vmatprep.mubr.f32.mxu0 0.0
  %2653 = vmatmul.mubr.f32.gmra.mrb[0].mxu0 %v2375
  %v2654 = vpop.f32.mrb[0].mxu0
  %v2655 = vadd.f32 0.0, %v2654
  %v2656 = vpop.f32.mrb[0].mxu0
  %2657 = vmatprep.mubr.f32.mxu0 0.0
  %2658 = vmatmul.mubr.f32.gmra.mrb[0].mxu0 %v2378
  %v2659 = vpop.f32.mrb[0].mxu0
  %v2660 = vadd.f32 0.0, %v2659
  %v2661 = vpop.f32.mrb[0].mxu0
  %2662 = vmatprep.mubr.f32.mxu0 0.0
  %2663 = vmatmul.mubr.f32.gmra.mrb[0].mxu0 %v2381
  %v2664 = vpop.f32.mrb[0].mxu0
  %v2665 = vadd.f32 0.0, %v2664
  %v2666 = vpop.f32.mrb[0].mxu0
  %2667 = vmatprep.mubr.f32.mxu0 0.0
  %2668 = vmatmul.mubr.f32.gmra.mrb[0].mxu0 %v2384
  %v2669 = vpop.f32.mrb[0].mxu0
  %v2670 = vadd.f32 0.0, %v2669
  %v2671 = vpop.f32.mrb[0].mxu0
  %2672 = vmatprep.mubr.f32.mxu0 0.0
  %2673 = vmatmul.mubr.f32.gmra.mrb[0].mxu0 %v2387
  %v2674 = vpop.f32.mrb[0].mxu0
  %v2675 = vadd.f32 0.0, %v2674
  %v2676 = vpop.f32.mrb[0].mxu0
  %2677 = vmatprep.mubr.f32.mxu0 0.0
  %2678 = vmatmul.mubr.f32.gmra.mrb[0].mxu0 %v2390
  %v2679 = vpop.f32.mrb[0].mxu0
  %v2680 = vadd.f32 0.0, %v2679
  %v2681 = vpop.f32.mrb[0].mxu0
  %2682 = vmatprep.mubr.f32.mxu0 0.0
  %2683 = vmatmul.mubr.f32.gmra.mrb[0].mxu0 %v2393
  %v2684 = vpop.f32.mrb[0].mxu0
  %v2685 = vadd.f32 0.0, %v2684
  %v2686 = vpop.f32.mrb[0].mxu0
  %2687 = vmatprep.mubr.f32.mxu0 0.0
  %2688 = vmatmul.mubr.f32.gmra.mrb[0].mxu0 %v2396
  %v2689 = vpop.f32.mrb[0].mxu0
  %v2690 = vadd.f32 0.0, %v2689
  %v2691 = vpop.f32.mrb[0].mxu0
  %2692 = vmatprep.mubr.f32.mxu0 0.0
  %2693 = vmatmul.mubr.f32.gmra.mrb[0].mxu0 %v2399
  %v2694 = vpop.f32.mrb[0].mxu0
  %v2695 = vadd.f32 0.0, %v2694
  %v2696 = vpop.f32.mrb[0].mxu0
  %2697 = vmatprep.mubr.f32.mxu0 0.0
  %2698 = vmatmul.mubr.f32.gmra.mrb[0].mxu0 %v2402
  %v2699 = vpop.f32.mrb[0].mxu0
  %v2700 = vadd.f32 0.0, %v2699
  %v2701 = vpop.f32.mrb[0].mxu0
  %2702 = vmatprep.mubr.f32.mxu0 0.0
  %2703 = vmatmul.mubr.f32.gmra.mrb[0].mxu0 %v2405
  %v2704 = vpop.f32.mrb[0].mxu0
  %v2705 = vadd.f32 0.0, %v2704
  %v2706 = vpop.f32.mrb[0].mxu0
  %2707 = vmatprep.mubr.f32.mxu0 0.0
  %2708 = vmatmul.mubr.f32.gmra.mrb[0].mxu0 %v2408
  %v2709 = vpop.f32.mrb[0].mxu0
  %v2710 = vadd.f32 0.0, %v2709
  %v2711 = vpop.f32.mrb[0].mxu0
  %2712 = vmatprep.mubr.f32.mxu0 0.0
  %2713 = vmatmul.mubr.f32.gmra.mrb[0].mxu0 %v2411
  %v2714 = vpop.f32.mrb[0].mxu0
  %v2715 = vadd.f32 0.0, %v2714
  %v2716 = vpop.f32.mrb[0].mxu0
  %2717 = vmatprep.mubr.f32.mxu0 0.0
  %2718 = vmatmul.mubr.f32.gmra.mrb[0].mxu0 %v2414
  %v2719 = vpop.f32.mrb[0].mxu0
  %v2720 = vadd.f32 0.0, %v2719
  %v2721 = vpop.f32.mrb[0].mxu0
  %2722 = vmatprep.mubr.f32.mxu0 0.0
  %2723 = vmatmul.mubr.f32.gmra.mrb[0].mxu0 %v2417
  %v2724 = vpop.f32.mrb[0].mxu0
  %v2725 = vadd.f32 0.0, %v2724
  %v2726 = vpop.f32.mrb[0].mxu0
  %2727 = vmatprep.mubr.f32.mxu0 0.0
  %2728 = vmatmul.mubr.f32.gmra.mrb[0].mxu0 %v2420
  %v2729 = vpop.f32.mrb[0].mxu0
  %v2730 = vadd.f32 0.0, %v2729
  %v2731 = vpop.f32.mrb[0].mxu0
  %2732 = vmatprep.mubr.f32.mxu0 0.0
  %2733 = vmatmul.mubr.f32.gmra.mrb[0].mxu0 %v2423
  %v2734 = vpop.f32.mrb[0].mxu0
  %v2735 = vadd.f32 0.0, %v2734
  %v2736 = vpop.f32.mrb[0].mxu0
  %2737 = vmatprep.mubr.f32.mxu0 0.0
  %2738 = vmatmul.mubr.f32.gmra.mrb[0].mxu0 %v2426
  %v2739 = vpop.f32.mrb[0].mxu0
  %v2740 = vadd.f32 0.0, %v2739
  %v2741 = vpop.f32.mrb[0].mxu0
  %2742 = vmatprep.mubr.f32.mxu0 0.0
  %2743 = vmatmul.mubr.f32.gmra.mrb[0].mxu0 %v2429
  %v2744 = vpop.f32.mrb[0].mxu0
  %v2745 = vadd.f32 0.0, %v2744
  %v2746 = vpop.f32.mrb[0].mxu0
  %2747 = vmatprep.mubr.f32.mxu0 0.0
  %2748 = vmatmul.mubr.f32.gmra.mrb[0].mxu0 %v2432
  %v2749 = vpop.f32.mrb[0].mxu0
  %v2750 = vadd.f32 0.0, %v2749
  %v2751 = vpop.f32.mrb[0].mxu0
  %2752 = vmatprep.mubr.f32.mxu0 0.0
  %2753 = vmatmul.mubr.f32.gmra.mrb[0].mxu0 %v2435
  %v2754 = vpop.f32.mrb[0].mxu0
  %v2755 = vadd.f32 0.0, %v2754
  %v2756 = vpop.f32.mrb[0].mxu0
  %2757 = vmatprep.mubr.f32.mxu0 0.0
  %2758 = vmatmul.mubr.f32.gmra.mrb[0].mxu0 %v2438
  %v2759 = vpop.f32.mrb[0].mxu0
  %v2760 = vadd.f32 0.0, %v2759
  %v2761 = vpop.f32.mrb[0].mxu0
  %2762 = vmatprep.mubr.f32.mxu0 0.0
  %2763 = vmatmul.mubr.f32.gmra.mrb[0].mxu0 %v2441
  %v2764 = vpop.f32.mrb[0].mxu0
  %v2765 = vadd.f32 0.0, %v2764
  %v2766 = vpop.f32.mrb[0].mxu0
  %2767 = vmatprep.mubr.f32.mxu0 0.0
  %2768 = vmatmul.mubr.f32.gmra.mrb[0].mxu0 %v2444
  %v2769 = vpop.f32.mrb[0].mxu0
  %v2770 = vadd.f32 0.0, %v2769
  %v2771 = vpop.f32.mrb[0].mxu0
  %2772 = vmatprep.mubr.f32.mxu0 0.0
  %2773 = vmatmul.mubr.f32.gmra.mrb[0].mxu0 %v2447
  %v2774 = vpop.f32.mrb[0].mxu0
  %v2775 = vadd.f32 0.0, %v2774
  %v2776 = vpop.f32.mrb[0].mxu0
  %2777 = vmatprep.mubr.f32.mxu0 0.0
  %2778 = vmatmul.mubr.f32.gmra.mrb[0].mxu0 %v2450
  %v2779 = vpop.f32.mrb[0].mxu0
  %v2780 = vadd.f32 0.0, %v2779
  %v2781 = vpop.f32.mrb[0].mxu0
  %2782 = vmatprep.mubr.f32.mxu0 0.0
  %2783 = vmatmul.mubr.f32.gmra.mrb[0].mxu0 %v2453
  %v2784 = vpop.f32.mrb[0].mxu0
  %v2785 = vadd.f32 0.0, %v2784
  %v2786 = vpop.f32.mrb[0].mxu0
  %2787 = vmatprep.mubr.f32.mxu0 0.0
  %2788 = vmatmul.mubr.f32.gmra.mrb[0].mxu0 %v2456
  %v2789 = vpop.f32.mrb[0].mxu0
  %v2790 = vadd.f32 0.0, %v2789
  %v2791 = vpop.f32.mrb[0].mxu0
  %2792 = vmatprep.mubr.f32.mxu0 0.0
  %2793 = vmatmul.mubr.f32.gmra.mrb[0].mxu0 %v2459
  %v2794 = vpop.f32.mrb[0].mxu0
  %v2795 = vadd.f32 0.0, %v2794
  %v2796 = vpop.f32.mrb[0].mxu0
  %2797 = vmatprep.mubr.f32.mxu0 0.0
  %2798 = vmatmul.mubr.f32.gmra.mrb[0].mxu0 %v2462
  %v2799 = vpop.f32.mrb[0].mxu0
  %v2800 = vadd.f32 0.0, %v2799
  %v2801 = vpop.f32.mrb[0].mxu0
  %2802 = vmatprep.mubr.f32.mxu0 0.0
  %2803 = vmatmul.mubr.f32.gmra.mrb[0].mxu0 %v2465
  %v2804 = vpop.f32.mrb[0].mxu0
  %v2805 = vadd.f32 0.0, %v2804
  %v2806 = vpop.f32.mrb[0].mxu0
  %2807 = vmatprep.mubr.f32.mxu0 0.0
  %2808 = vmatmul.mubr.f32.gmra.mrb[0].mxu0 %v2468
  %v2809 = vpop.f32.mrb[0].mxu0
  %v2810 = vadd.f32 0.0, %v2809
  %v2811 = vpop.f32.mrb[0].mxu0
  %2812 = vmatprep.mubr.f32.mxu0 0.0
  %2813 = vmatmul.mubr.f32.gmra.mrb[0].mxu0 %v2471
  %v2814 = vpop.f32.mrb[0].mxu0
  %v2815 = vadd.f32 0.0, %v2814
  %v2816 = vpop.f32.mrb[0].mxu0
  %2817 = vmatprep.mubr.f32.mxu0 0.0
  %2818 = vmatmul.mubr.f32.gmra.mrb[0].mxu0 %v2474
  %v2819 = vpop.f32.mrb[0].mxu0
  %v2820 = vadd.f32 0.0, %v2819
  %v2821 = vpop.f32.mrb[0].mxu0
  %2822 = vmatprep.mubr.f32.mxu0 0.0
  %2823 = vmatmul.mubr.f32.gmra.mrb[0].mxu0 %v2477
  %v2824 = vpop.f32.mrb[0].mxu0
  %v2825 = vadd.f32 0.0, %v2824
  %v2826 = vpop.f32.mrb[0].mxu0
  %2827 = vmatprep.mubr.f32.mxu0 0.0
  %2828 = vmatmul.mubr.f32.gmra.mrb[0].mxu0 %v2480
  %v2829 = vpop.f32.mrb[0].mxu0
  %v2830 = vadd.f32 0.0, %v2829
  %v2831 = vpop.f32.mrb[0].mxu0
  %2832 = vmatprep.mubr.f32.mxu0 0.0
  %2833 = vmatmul.mubr.f32.gmra.mrb[0].mxu0 %v2483
  %v2834 = vpop.f32.mrb[0].mxu0
  %v2835 = vadd.f32 0.0, %v2834
  %v2836 = vpop.f32.mrb[0].mxu0
  %2837 = vmatprep.mubr.f32.mxu0 0.0
  %2838 = vmatmul.mubr.f32.gmra.mrb[0].mxu0 %v2486
  %v2839 = vpop.f32.mrb[0].mxu0
  %v2840 = vadd.f32 0.0, %v2839
  %v2841 = vpop.f32.mrb[0].mxu0
  %2842 = vmatprep.mubr.f32.mxu0 0.0
  %2843 = vmatmul.mubr.f32.gmra.mrb[0].mxu0 %v2489
  %v2844 = vpop.f32.mrb[0].mxu0
  %v2845 = vadd.f32 0.0, %v2844
  %v2846 = vpop.f32.mrb[0].mxu0
  %2847 = vmatprep.mubr.f32.mxu0 0.0
  %2848 = vmatmul.mubr.f32.gmra.mrb[0].mxu0 %v2492
  %v2849 = vpop.f32.mrb[0].mxu0
  %v2850 = vadd.f32 0.0, %v2849
  %v2851 = vpop.f32.mrb[0].mxu0
  %2852 = vmatprep.mubr.f32.mxu0 0.0
  %2853 = vmatmul.mubr.f32.gmra.mrb[0].mxu0 %v2495
  %v2854 = vpop.f32.mrb[0].mxu0
  %v2855 = vadd.f32 0.0, %v2854
  %v2856 = vpop.f32.mrb[0].mxu0
  %2857 = vmatprep.mubr.f32.mxu0 0.0
  %2858 = vmatmul.mubr.f32.gmra.mrb[0].mxu0 %v2498
  %v2859 = vpop.f32.mrb[0].mxu0
  %v2860 = vadd.f32 0.0, %v2859
  %v2861 = vpop.f32.mrb[0].mxu0
  %2862 = vmatprep.mubr.f32.mxu0 0.0
  %2863 = vmatmul.mubr.f32.gmra.mrb[0].mxu0 %v2501
  %v2864 = vpop.f32.mrb[0].mxu0
  %v2865 = vadd.f32 0.0, %v2864
  %v2866 = vpop.f32.mrb[0].mxu0
  %2867 = vmatprep.mubr.f32.mxu0 0.0
  %2868 = vmatmul.mubr.f32.gmra.mrb[0].mxu0 %v2504
  %v2869 = vpop.f32.mrb[0].mxu0
  %v2870 = vadd.f32 0.0, %v2869
  %v2871 = vpop.f32.mrb[0].mxu0
  %2872 = vmatprep.mubr.f32.mxu0 0.0
  %2873 = vmatmul.mubr.f32.gmra.mrb[0].mxu0 %v2507
  %v2874 = vpop.f32.mrb[0].mxu0
  %v2875 = vadd.f32 0.0, %v2874
  %v2876 = vpop.f32.mrb[0].mxu0
  %2877 = vmatprep.mubr.f32.mxu0 0.0
  %2878 = vmatmul.mubr.f32.gmra.mrb[0].mxu0 %v2510
  %v2879 = vpop.f32.mrb[0].mxu0
  %v2880 = vadd.f32 0.0, %v2879
  %v2881 = vpop.f32.mrb[0].mxu0
  %2882 = vmatprep.mubr.f32.mxu0 0.0
  %2883 = vmatmul.mubr.f32.gmra.mrb[0].mxu0 %v2513
  %v2884 = vpop.f32.mrb[0].mxu0
  %v2885 = vadd.f32 0.0, %v2884
  %v2886 = vpop.f32.mrb[0].mxu0
  %2887 = vmatprep.mubr.f32.mxu0 0.0
  %2888 = vmatmul.mubr.f32.gmra.mrb[0].mxu0 %v2516
  %v2889 = vpop.f32.mrb[0].mxu0
  %v2890 = vadd.f32 0.0, %v2889
  %v2891 = vpop.f32.mrb[0].mxu0
  %2892 = vmatprep.mubr.f32.mxu0 0.0
  %2893 = vmatmul.mubr.f32.gmra.mrb[0].mxu0 %v2519
  %v2894 = vpop.f32.mrb[0].mxu0
  %v2895 = vadd.f32 0.0, %v2894
  %v2896 = vpop.f32.mrb[0].mxu0
  %2897 = vmatprep.mubr.f32.mxu0 0.0
  %2898 = vmatmul.mubr.f32.gmra.mrb[0].mxu0 %v2522
  %v2899 = vpop.f32.mrb[0].mxu0
  %v2900 = vadd.f32 0.0, %v2899
  %v2901 = vpop.f32.mrb[0].mxu0
  %2902 = vmatprep.mubr.f32.mxu0 0.0
  %2903 = vmatmul.mubr.f32.gmra.mrb[0].mxu0 %v2525
  %v2904 = vpop.f32.mrb[0].mxu0
  %v2905 = vadd.f32 0.0, %v2904
  %v2906 = vpop.f32.mrb[0].mxu0
  %2907 = vmatprep.mubr.f32.mxu0 0.0
  %2908 = vmatmul.mubr.f32.gmra.mrb[0].mxu0 %v2528
  %v2909 = vpop.f32.mrb[0].mxu0
  %v2910 = vadd.f32 0.0, %v2909
  %v2911 = vpop.f32.mrb[0].mxu0
  %2912 = vmatprep.mubr.f32.mxu0 0.0
  %2913 = vmatmul.mubr.f32.gmra.mrb[0].mxu0 %v2531
  %v2914 = vpop.f32.mrb[0].mxu0
  %v2915 = vadd.f32 0.0, %v2914
  %v2916 = vpop.f32.mrb[0].mxu0
  %2917 = vmatprep.mubr.f32.mxu0 0.0
  %2918 = vmatmul.mubr.f32.gmra.mrb[0].mxu0 %v2534
  %v2919 = vpop.f32.mrb[0].mxu0
  %v2920 = vadd.f32 0.0, %v2919
  %v2921 = vpop.f32.mrb[0].mxu0
  %2922 = vmatprep.mubr.f32.mxu0 0.0
  %2923 = vmatmul.mubr.f32.gmra.mrb[0].mxu0 %v2537
  %v2924 = vpop.f32.mrb[0].mxu0
  %v2925 = vadd.f32 0.0, %v2924
  %v2926 = vpop.f32.mrb[0].mxu0
  %2927 = vdwg.mxu0
  %v2928 = vmul.f32 %v2610, %v346
  %v2929 = vmul.f32 %v2615, %v347
  %v2930 = vmul.f32 %v2620, %v348
  %v2931 = vmul.f32 %v2625, %v349
  %v2932 = vmul.f32 %v2630, %v350
  %v2933 = vmul.f32 %v2635, %v351
  %v2934 = vmul.f32 %v2640, %v352
  %v2935 = vmul.f32 %v2645, %v353
  %v2936 = vmul.f32 %v2650, %v354
  %v2937 = vmul.f32 %v2655, %v355
  %v2938 = vmul.f32 %v2660, %v356
  %v2939 = vmul.f32 %v2665, %v357
  %v2940 = vmul.f32 %v2670, %v358
  %v2941 = vmul.f32 %v2675, %v359
  %v2942 = vmul.f32 %v2680, %v360
  %v2943 = vmul.f32 %v2685, %v361
  %v2944 = vmul.f32 %v2690, %v362
  %v2945 = vmul.f32 %v2695, %v363
  %v2946 = vmul.f32 %v2700, %v364
  %v2947 = vmul.f32 %v2705, %v365
  %v2948 = vmul.f32 %v2710, %v366
  %v2949 = vmul.f32 %v2715, %v367
  %v2950 = vmul.f32 %v2720, %v368
  %v2951 = vmul.f32 %v2725, %v369
  %v2952 = vmul.f32 %v2730, %v370
  %v2953 = vmul.f32 %v2735, %v371
  %v2954 = vmul.f32 %v2740, %v372
  %v2955 = vmul.f32 %v2745, %v373
  %v2956 = vmul.f32 %v2750, %v374
  %v2957 = vmul.f32 %v2755, %v375
  %v2958 = vmul.f32 %v2760, %v376
  %v2959 = vmul.f32 %v2765, %v377
  %v2960 = vmul.f32 %v2770, %v378
  %v2961 = vmul.f32 %v2775, %v379
  %v2962 = vmul.f32 %v2780, %v380
  %v2963 = vmul.f32 %v2785, %v381
  %v2964 = vmul.f32 %v2790, %v382
  %v2965 = vmul.f32 %v2795, %v383
  %v2966 = vmul.f32 %v2800, %v384
  %v2967 = vmul.f32 %v2805, %v385
  %v2968 = vmul.f32 %v2810, %v386
  %v2969 = vmul.f32 %v2815, %v387
  %v2970 = vmul.f32 %v2820, %v388
  %v2971 = vmul.f32 %v2825, %v389
  %v2972 = vmul.f32 %v2830, %v390
  %v2973 = vmul.f32 %v2835, %v391
  %v2974 = vmul.f32 %v2840, %v392
  %v2975 = vmul.f32 %v2845, %v393
  %v2976 = vmul.f32 %v2850, %v394
  %v2977 = vmul.f32 %v2855, %v395
  %v2978 = vmul.f32 %v2860, %v396
  %v2979 = vmul.f32 %v2865, %v397
  %v2980 = vmul.f32 %v2870, %v398
  %v2981 = vmul.f32 %v2875, %v399
  %v2982 = vmul.f32 %v2880, %v400
  %v2983 = vmul.f32 %v2885, %v401
  %v2984 = vmul.f32 %v2890, %v402
  %v2985 = vmul.f32 %v2895, %v403
  %v2986 = vmul.f32 %v2900, %v404
  %v2987 = vmul.f32 %v2905, %v405
  %v2988 = vmul.f32 %v2910, %v406
  %v2989 = vmul.f32 %v2915, %v407
  %v2990 = vmul.f32 %v2920, %v408
  %v2991 = vmul.f32 %v2925, %v409
  %v2992 = vld [vmem:[%s6] sm:$0xff]
  %v2993 = vld [vmem:[%s6 + $0x8] sm:$0xff]
  %v2994 = vld [vmem:[%s6 + $0x10] sm:$0xff]
  %v2995 = vld [vmem:[%s6 + $0x18] sm:$0xff]
  %v2996 = vld [vmem:[%s6 + $0x20] sm:$0xff]
  %v2997 = vld [vmem:[%s6 + $0x28] sm:$0xff]
  %v2998 = vld [vmem:[%s6 + $0x30] sm:$0xff]
  %v2999 = vld [vmem:[%s6 + $0x38] sm:$0xff]
  %v3000 = vld [vmem:[%s6 + $0x40] sm:$0xff]
  %v3002 = vsel %vm1062, %v2928, 0
  %v3005 = vsel %vm1062, %v2929, 0
  %v3008 = vsel %vm1062, %v2930, 0
  %v3011 = vsel %vm1062, %v2931, 0
  %v3014 = vsel %vm1062, %v2932, 0
  %v3017 = vsel %vm1062, %v2933, 0
  %v3020 = vsel %vm1062, %v2934, 0
  %v3023 = vsel %vm1062, %v2935, 0
  %v3026 = vsel %vm1062, %v2936, 0
  %v3029 = vsel %vm1062, %v2937, 0
  %v3032 = vsel %vm1062, %v2938, 0
  %v3035 = vsel %vm1062, %v2939, 0
  %v3038 = vsel %vm1062, %v2940, 0
  %v3041 = vsel %vm1062, %v2941, 0
  %v3044 = vsel %vm1062, %v2942, 0
  %v3047 = vsel %vm1062, %v2943, 0
  %v3050 = vsel %vm1062, %v2944, 0
  %v3053 = vsel %vm1062, %v2945, 0
  %v3056 = vsel %vm1062, %v2946, 0
  %v3059 = vsel %vm1062, %v2947, 0
  %v3062 = vsel %vm1062, %v2948, 0
  %v3065 = vsel %vm1062, %v2949, 0
  %v3068 = vsel %vm1062, %v2950, 0
  %v3071 = vsel %vm1062, %v2951, 0
  %v3074 = vsel %vm1062, %v2952, 0
  %v3077 = vsel %vm1062, %v2953, 0
  %v3080 = vsel %vm1062, %v2954, 0
  %v3083 = vsel %vm1062, %v2955, 0
  %v3086 = vsel %vm1062, %v2956, 0
  %v3089 = vsel %vm1062, %v2957, 0
  %v3092 = vsel %vm1062, %v2958, 0
  %v3095 = vsel %vm1062, %v2959, 0
  %v3098 = vsel %vm1062, %v2960, 0
  %v3101 = vsel %vm1062, %v2961, 0
  %v3104 = vsel %vm1062, %v2962, 0
  %v3107 = vsel %vm1062, %v2963, 0
  %v3110 = vsel %vm1062, %v2964, 0
  %v3113 = vsel %vm1062, %v2965, 0
  %v3116 = vsel %vm1062, %v2966, 0
  %v3119 = vsel %vm1062, %v2967, 0
  %v3122 = vsel %vm1062, %v2968, 0
  %v3125 = vsel %vm1062, %v2969, 0
  %v3128 = vsel %vm1062, %v2970, 0
  %v3131 = vsel %vm1062, %v2971, 0
  %v3134 = vsel %vm1062, %v2972, 0
  %v3137 = vsel %vm1062, %v2973, 0
  %v3140 = vsel %vm1062, %v2974, 0
  %v3143 = vsel %vm1062, %v2975, 0
  %v3146 = vsel %vm1062, %v2976, 0
  %v3149 = vsel %vm1062, %v2977, 0
  %v3152 = vsel %vm1062, %v2978, 0
  %v3155 = vsel %vm1062, %v2979, 0
  %v3158 = vsel %vm1062, %v2980, 0
  %v3161 = vsel %vm1062, %v2981, 0
  %v3164 = vsel %vm1062, %v2982, 0
  %v3167 = vsel %vm1062, %v2983, 0
  %v3170 = vsel %vm1062, %v2984, 0
  %v3173 = vsel %vm1062, %v2985, 0
  %v3176 = vsel %vm1062, %v2986, 0
  %v3179 = vsel %vm1062, %v2987, 0
  %v3182 = vsel %vm1062, %v2988, 0
  %v3185 = vsel %vm1062, %v2989, 0
  %v3188 = vsel %vm1062, %v2990, 0
  %v3191 = vsel %vm1062, %v2991, 0
  %3193 = vmatprep.subr.mxu0 0.0
  %3194 = vmatpush1.msra.mxu0 %v2992
  %3195 = vmatprep.subr.mxu0 0.0
  %3196 = vmatpush1.msra.mxu0 %v2993
  %3197 = vmatprep.subr.mxu0 0.0
  %3198 = vmatpush1.msra.mxu0 %v2994
  %3199 = vmatprep.subr.mxu0 0.0
  %3200 = vmatpush1.msra.mxu0 %v2995
  %3201 = vmatprep.subr.mxu0 0.0
  %3202 = vmatpush1.msra.mxu0 %v2996
  %3203 = vmatprep.subr.mxu0 0.0
  %3204 = vmatpush1.msra.mxu0 %v2997
  %3205 = vmatprep.subr.mxu0 0.0
  %3206 = vmatpush1.msra.mxu0 %v2998
  %3207 = vmatprep.subr.mxu0 0.0
  %3208 = vmatpush1.msra.mxu0 %v2999
  %3209 = vmatprep.subr.mxu0 0.0
  %3210 = vmatpush1.msra.mxu0 %v3000
  %3211 = vmatprep.subr.mxu0 0.0
  %3212 = vmatpush1.msra.mxu0 0.0
  %3213 = vmatprep.subr.mxu0 0.0
  %3214 = vmatpush1.msra.mxu0 0.0
  %3215 = vmatprep.subr.mxu0 0.0
  %3216 = vmatpush1.msra.mxu0 0.0
  %3217 = vmatprep.subr.mxu0 0.0
  %3218 = vmatpush1.msra.mxu0 0.0
  %3219 = vmatprep.subr.mxu0 0.0
  %3220 = vmatpush1.msra.mxu0 0.0
  %3221 = vmatprep.subr.mxu0 0.0
  %3222 = vmatpush1.msra.mxu0 0.0
  %3223 = vmatprep.subr.mxu0 0.0
  %3224 = vmatpush1.msra.mxu0 0.0
  %3225 = vmatprep.subr.mxu0 0.0
  %3226 = vmatpush1.msra.mxu0 0.0
  %3227 = vmatprep.subr.mxu0 0.0
  %3228 = vmatpush1.msra.mxu0 0.0
  %3229 = vmatprep.subr.mxu0 0.0
  %3230 = vmatpush1.msra.mxu0 0.0
  %3231 = vmatprep.subr.mxu0 0.0
  %3232 = vmatpush1.msra.mxu0 0.0
  %3233 = vmatprep.subr.mxu0 0.0
  %3234 = vmatpush1.msra.mxu0 0.0
  %3235 = vmatprep.subr.mxu0 0.0
  %3236 = vmatpush1.msra.mxu0 0.0
  %3237 = vmatprep.subr.mxu0 0.0
  %3238 = vmatpush1.msra.mxu0 0.0
  %3239 = vmatprep.subr.mxu0 0.0
  %3240 = vmatpush1.msra.mxu0 0.0
  %3241 = vmatprep.subr.mxu0 0.0
  %3242 = vmatpush1.msra.mxu0 0.0
  %3243 = vmatprep.subr.mxu0 0.0
  %3244 = vmatpush1.msra.mxu0 0.0
  %3245 = vmatprep.subr.mxu0 0.0
  %3246 = vmatpush1.msra.mxu0 0.0
  %3247 = vmatprep.subr.mxu0 0.0
  %3248 = vmatpush1.msra.mxu0 0.0
  %3249 = vmatprep.subr.mxu0 0.0
  %3250 = vmatpush1.msra.mxu0 0.0
  %3251 = vmatprep.subr.mxu0 0.0
  %3252 = vmatpush1.msra.mxu0 0.0
  %3253 = vmatprep.subr.mxu0 0.0
  %3254 = vmatpush1.msra.mxu0 0.0
  %3255 = vmatprep.subr.mxu0 0.0
  %3256 = vmatpush1.msra.mxu0 0.0
  %3257 = vmatprep.mubr.f32.mxu0 0.0
  %3258 = vmatmul.mubr.f32.gmra.mrb[0].mxu0 %v3002
  %v3259 = vpop.f32.mrb[0].mxu0
  %v3260 = vadd.f32 0.0, %v3259
  %v3261 = vpop.f32.mrb[0].mxu0
  %3262 = vmatprep.mubr.f32.mxu0 0.0
  %3263 = vmatmul.mubr.f32.gmra.mrb[0].mxu0 %v3005
  %v3264 = vpop.f32.mrb[0].mxu0
  %v3265 = vadd.f32 0.0, %v3264
  %v3266 = vpop.f32.mrb[0].mxu0
  %3267 = vmatprep.mubr.f32.mxu0 0.0
  %3268 = vmatmul.mubr.f32.gmra.mrb[0].mxu0 %v3008
  %v3269 = vpop.f32.mrb[0].mxu0
  %v3270 = vadd.f32 0.0, %v3269
  %v3271 = vpop.f32.mrb[0].mxu0
  %3272 = vmatprep.mubr.f32.mxu0 0.0
  %3273 = vmatmul.mubr.f32.gmra.mrb[0].mxu0 %v3011
  %v3274 = vpop.f32.mrb[0].mxu0
  %v3275 = vadd.f32 0.0, %v3274
  %v3276 = vpop.f32.mrb[0].mxu0
  %3277 = vmatprep.mubr.f32.mxu0 0.0
  %3278 = vmatmul.mubr.f32.gmra.mrb[0].mxu0 %v3014
  %v3279 = vpop.f32.mrb[0].mxu0
  %v3280 = vadd.f32 0.0, %v3279
  %v3281 = vpop.f32.mrb[0].mxu0
  %3282 = vmatprep.mubr.f32.mxu0 0.0
  %3283 = vmatmul.mubr.f32.gmra.mrb[0].mxu0 %v3017
  %v3284 = vpop.f32.mrb[0].mxu0
  %v3285 = vadd.f32 0.0, %v3284
  %v3286 = vpop.f32.mrb[0].mxu0
  %3287 = vmatprep.mubr.f32.mxu0 0.0
  %3288 = vmatmul.mubr.f32.gmra.mrb[0].mxu0 %v3020
  %v3289 = vpop.f32.mrb[0].mxu0
  %v3290 = vadd.f32 0.0, %v3289
  %v3291 = vpop.f32.mrb[0].mxu0
  %3292 = vmatprep.mubr.f32.mxu0 0.0
  %3293 = vmatmul.mubr.f32.gmra.mrb[0].mxu0 %v3023
  %v3294 = vpop.f32.mrb[0].mxu0
  %v3295 = vadd.f32 0.0, %v3294
  %v3296 = vpop.f32.mrb[0].mxu0
  %3297 = vmatprep.mubr.f32.mxu0 0.0
  %3298 = vmatmul.mubr.f32.gmra.mrb[0].mxu0 %v3026
  %v3299 = vpop.f32.mrb[0].mxu0
  %v3300 = vadd.f32 0.0, %v3299
  %v3301 = vpop.f32.mrb[0].mxu0
  %3302 = vmatprep.mubr.f32.mxu0 0.0
  %3303 = vmatmul.mubr.f32.gmra.mrb[0].mxu0 %v3029
  %v3304 = vpop.f32.mrb[0].mxu0
  %v3305 = vadd.f32 0.0, %v3304
  %v3306 = vpop.f32.mrb[0].mxu0
  %3307 = vmatprep.mubr.f32.mxu0 0.0
  %3308 = vmatmul.mubr.f32.gmra.mrb[0].mxu0 %v3032
  %v3309 = vpop.f32.mrb[0].mxu0
  %v3310 = vadd.f32 0.0, %v3309
  %v3311 = vpop.f32.mrb[0].mxu0
  %3312 = vmatprep.mubr.f32.mxu0 0.0
  %3313 = vmatmul.mubr.f32.gmra.mrb[0].mxu0 %v3035
  %v3314 = vpop.f32.mrb[0].mxu0
  %v3315 = vadd.f32 0.0, %v3314
  %v3316 = vpop.f32.mrb[0].mxu0
  %3317 = vmatprep.mubr.f32.mxu0 0.0
  %3318 = vmatmul.mubr.f32.gmra.mrb[0].mxu0 %v3038
  %v3319 = vpop.f32.mrb[0].mxu0
  %v3320 = vadd.f32 0.0, %v3319
  %v3321 = vpop.f32.mrb[0].mxu0
  %3322 = vmatprep.mubr.f32.mxu0 0.0
  %3323 = vmatmul.mubr.f32.gmra.mrb[0].mxu0 %v3041
  %v3324 = vpop.f32.mrb[0].mxu0
  %v3325 = vadd.f32 0.0, %v3324
  %v3326 = vpop.f32.mrb[0].mxu0
  %3327 = vmatprep.mubr.f32.mxu0 0.0
  %3328 = vmatmul.mubr.f32.gmra.mrb[0].mxu0 %v3044
  %v3329 = vpop.f32.mrb[0].mxu0
  %v3330 = vadd.f32 0.0, %v3329
  %v3331 = vpop.f32.mrb[0].mxu0
  %3332 = vmatprep.mubr.f32.mxu0 0.0
  %3333 = vmatmul.mubr.f32.gmra.mrb[0].mxu0 %v3047
  %v3334 = vpop.f32.mrb[0].mxu0
  %v3335 = vadd.f32 0.0, %v3334
  %v3336 = vpop.f32.mrb[0].mxu0
  %3337 = vmatprep.mubr.f32.mxu0 0.0
  %3338 = vmatmul.mubr.f32.gmra.mrb[0].mxu0 %v3050
  %v3339 = vpop.f32.mrb[0].mxu0
  %v3340 = vadd.f32 0.0, %v3339
  %v3341 = vpop.f32.mrb[0].mxu0
  %3342 = vmatprep.mubr.f32.mxu0 0.0
  %3343 = vmatmul.mubr.f32.gmra.mrb[0].mxu0 %v3053
  %v3344 = vpop.f32.mrb[0].mxu0
  %v3345 = vadd.f32 0.0, %v3344
  %v3346 = vpop.f32.mrb[0].mxu0
  %3347 = vmatprep.mubr.f32.mxu0 0.0
  %3348 = vmatmul.mubr.f32.gmra.mrb[0].mxu0 %v3056
  %v3349 = vpop.f32.mrb[0].mxu0
  %v3350 = vadd.f32 0.0, %v3349
  %v3351 = vpop.f32.mrb[0].mxu0
  %3352 = vmatprep.mubr.f32.mxu0 0.0
  %3353 = vmatmul.mubr.f32.gmra.mrb[0].mxu0 %v3059
  %v3354 = vpop.f32.mrb[0].mxu0
  %v3355 = vadd.f32 0.0, %v3354
  %v3356 = vpop.f32.mrb[0].mxu0
  %3357 = vmatprep.mubr.f32.mxu0 0.0
  %3358 = vmatmul.mubr.f32.gmra.mrb[0].mxu0 %v3062
  %v3359 = vpop.f32.mrb[0].mxu0
  %v3360 = vadd.f32 0.0, %v3359
  %v3361 = vpop.f32.mrb[0].mxu0
  %3362 = vmatprep.mubr.f32.mxu0 0.0
  %3363 = vmatmul.mubr.f32.gmra.mrb[0].mxu0 %v3065
  %v3364 = vpop.f32.mrb[0].mxu0
  %v3365 = vadd.f32 0.0, %v3364
  %v3366 = vpop.f32.mrb[0].mxu0
  %3367 = vmatprep.mubr.f32.mxu0 0.0
  %3368 = vmatmul.mubr.f32.gmra.mrb[0].mxu0 %v3068
  %v3369 = vpop.f32.mrb[0].mxu0
  %v3370 = vadd.f32 0.0, %v3369
  %v3371 = vpop.f32.mrb[0].mxu0
  %3372 = vmatprep.mubr.f32.mxu0 0.0
  %3373 = vmatmul.mubr.f32.gmra.mrb[0].mxu0 %v3071
  %v3374 = vpop.f32.mrb[0].mxu0
  %v3375 = vadd.f32 0.0, %v3374
  %v3376 = vpop.f32.mrb[0].mxu0
  %3377 = vmatprep.mubr.f32.mxu0 0.0
  %3378 = vmatmul.mubr.f32.gmra.mrb[0].mxu0 %v3074
  %v3379 = vpop.f32.mrb[0].mxu0
  %v3380 = vadd.f32 0.0, %v3379
  %v3381 = vpop.f32.mrb[0].mxu0
  %3382 = vmatprep.mubr.f32.mxu0 0.0
  %3383 = vmatmul.mubr.f32.gmra.mrb[0].mxu0 %v3077
  %v3384 = vpop.f32.mrb[0].mxu0
  %v3385 = vadd.f32 0.0, %v3384
  %v3386 = vpop.f32.mrb[0].mxu0
  %3387 = vmatprep.mubr.f32.mxu0 0.0
  %3388 = vmatmul.mubr.f32.gmra.mrb[0].mxu0 %v3080
  %v3389 = vpop.f32.mrb[0].mxu0
  %v3390 = vadd.f32 0.0, %v3389
  %v3391 = vpop.f32.mrb[0].mxu0
  %3392 = vmatprep.mubr.f32.mxu0 0.0
  %3393 = vmatmul.mubr.f32.gmra.mrb[0].mxu0 %v3083
  %v3394 = vpop.f32.mrb[0].mxu0
  %v3395 = vadd.f32 0.0, %v3394
  %v3396 = vpop.f32.mrb[0].mxu0
  %3397 = vmatprep.mubr.f32.mxu0 0.0
  %3398 = vmatmul.mubr.f32.gmra.mrb[0].mxu0 %v3086
  %v3399 = vpop.f32.mrb[0].mxu0
  %v3400 = vadd.f32 0.0, %v3399
  %v3401 = vpop.f32.mrb[0].mxu0
  %3402 = vmatprep.mubr.f32.mxu0 0.0
  %3403 = vmatmul.mubr.f32.gmra.mrb[0].mxu0 %v3089
  %v3404 = vpop.f32.mrb[0].mxu0
  %v3405 = vadd.f32 0.0, %v3404
  %v3406 = vpop.f32.mrb[0].mxu0
  %3407 = vmatprep.mubr.f32.mxu0 0.0
  %3408 = vmatmul.mubr.f32.gmra.mrb[0].mxu0 %v3092
  %v3409 = vpop.f32.mrb[0].mxu0
  %v3410 = vadd.f32 0.0, %v3409
  %v3411 = vpop.f32.mrb[0].mxu0
  %3412 = vmatprep.mubr.f32.mxu0 0.0
  %3413 = vmatmul.mubr.f32.gmra.mrb[0].mxu0 %v3095
  %v3414 = vpop.f32.mrb[0].mxu0
  %v3415 = vadd.f32 0.0, %v3414
  %v3416 = vpop.f32.mrb[0].mxu0
  %3417 = vmatprep.mubr.f32.mxu0 0.0
  %3418 = vmatmul.mubr.f32.gmra.mrb[0].mxu0 %v3098
  %v3419 = vpop.f32.mrb[0].mxu0
  %v3420 = vadd.f32 0.0, %v3419
  %v3421 = vpop.f32.mrb[0].mxu0
  %3422 = vmatprep.mubr.f32.mxu0 0.0
  %3423 = vmatmul.mubr.f32.gmra.mrb[0].mxu0 %v3101
  %v3424 = vpop.f32.mrb[0].mxu0
  %v3425 = vadd.f32 0.0, %v3424
  %v3426 = vpop.f32.mrb[0].mxu0
  %3427 = vmatprep.mubr.f32.mxu0 0.0
  %3428 = vmatmul.mubr.f32.gmra.mrb[0].mxu0 %v3104
  %v3429 = vpop.f32.mrb[0].mxu0
  %v3430 = vadd.f32 0.0, %v3429
  %v3431 = vpop.f32.mrb[0].mxu0
  %3432 = vmatprep.mubr.f32.mxu0 0.0
  %3433 = vmatmul.mubr.f32.gmra.mrb[0].mxu0 %v3107
  %v3434 = vpop.f32.mrb[0].mxu0
  %v3435 = vadd.f32 0.0, %v3434
  %v3436 = vpop.f32.mrb[0].mxu0
  %3437 = vmatprep.mubr.f32.mxu0 0.0
  %3438 = vmatmul.mubr.f32.gmra.mrb[0].mxu0 %v3110
  %v3439 = vpop.f32.mrb[0].mxu0
  %v3440 = vadd.f32 0.0, %v3439
  %v3441 = vpop.f32.mrb[0].mxu0
  %3442 = vmatprep.mubr.f32.mxu0 0.0
  %3443 = vmatmul.mubr.f32.gmra.mrb[0].mxu0 %v3113
  %v3444 = vpop.f32.mrb[0].mxu0
  %v3445 = vadd.f32 0.0, %v3444
  %v3446 = vpop.f32.mrb[0].mxu0
  %3447 = vmatprep.mubr.f32.mxu0 0.0
  %3448 = vmatmul.mubr.f32.gmra.mrb[0].mxu0 %v3116
  %v3449 = vpop.f32.mrb[0].mxu0
  %v3450 = vadd.f32 0.0, %v3449
  %v3451 = vpop.f32.mrb[0].mxu0
  %3452 = vmatprep.mubr.f32.mxu0 0.0
  %3453 = vmatmul.mubr.f32.gmra.mrb[0].mxu0 %v3119
  %v3454 = vpop.f32.mrb[0].mxu0
  %v3455 = vadd.f32 0.0, %v3454
  %v3456 = vpop.f32.mrb[0].mxu0
  %3457 = vmatprep.mubr.f32.mxu0 0.0
  %3458 = vmatmul.mubr.f32.gmra.mrb[0].mxu0 %v3122
  %v3459 = vpop.f32.mrb[0].mxu0
  %v3460 = vadd.f32 0.0, %v3459
  %v3461 = vpop.f32.mrb[0].mxu0
  %3462 = vmatprep.mubr.f32.mxu0 0.0
  %3463 = vmatmul.mubr.f32.gmra.mrb[0].mxu0 %v3125
  %v3464 = vpop.f32.mrb[0].mxu0
  %v3465 = vadd.f32 0.0, %v3464
  %v3466 = vpop.f32.mrb[0].mxu0
  %3467 = vmatprep.mubr.f32.mxu0 0.0
  %3468 = vmatmul.mubr.f32.gmra.mrb[0].mxu0 %v3128
  %v3469 = vpop.f32.mrb[0].mxu0
  %v3470 = vadd.f32 0.0, %v3469
  %v3471 = vpop.f32.mrb[0].mxu0
  %3472 = vmatprep.mubr.f32.mxu0 0.0
  %3473 = vmatmul.mubr.f32.gmra.mrb[0].mxu0 %v3131
  %v3474 = vpop.f32.mrb[0].mxu0
  %v3475 = vadd.f32 0.0, %v3474
  %v3476 = vpop.f32.mrb[0].mxu0
  %3477 = vmatprep.mubr.f32.mxu0 0.0
  %3478 = vmatmul.mubr.f32.gmra.mrb[0].mxu0 %v3134
  %v3479 = vpop.f32.mrb[0].mxu0
  %v3480 = vadd.f32 0.0, %v3479
  %v3481 = vpop.f32.mrb[0].mxu0
  %3482 = vmatprep.mubr.f32.mxu0 0.0
  %3483 = vmatmul.mubr.f32.gmra.mrb[0].mxu0 %v3137
  %v3484 = vpop.f32.mrb[0].mxu0
  %v3485 = vadd.f32 0.0, %v3484
  %v3486 = vpop.f32.mrb[0].mxu0
  %3487 = vmatprep.mubr.f32.mxu0 0.0
  %3488 = vmatmul.mubr.f32.gmra.mrb[0].mxu0 %v3140
  %v3489 = vpop.f32.mrb[0].mxu0
  %v3490 = vadd.f32 0.0, %v3489
  %v3491 = vpop.f32.mrb[0].mxu0
  %3492 = vmatprep.mubr.f32.mxu0 0.0
  %3493 = vmatmul.mubr.f32.gmra.mrb[0].mxu0 %v3143
  %v3494 = vpop.f32.mrb[0].mxu0
  %v3495 = vadd.f32 0.0, %v3494
  %v3496 = vpop.f32.mrb[0].mxu0
  %3497 = vmatprep.mubr.f32.mxu0 0.0
  %3498 = vmatmul.mubr.f32.gmra.mrb[0].mxu0 %v3146
  %v3499 = vpop.f32.mrb[0].mxu0
  %v3500 = vadd.f32 0.0, %v3499
  %v3501 = vpop.f32.mrb[0].mxu0
  %3502 = vmatprep.mubr.f32.mxu0 0.0
  %3503 = vmatmul.mubr.f32.gmra.mrb[0].mxu0 %v3149
  %v3504 = vpop.f32.mrb[0].mxu0
  %v3505 = vadd.f32 0.0, %v3504
  %v3506 = vpop.f32.mrb[0].mxu0
  %3507 = vmatprep.mubr.f32.mxu0 0.0
  %3508 = vmatmul.mubr.f32.gmra.mrb[0].mxu0 %v3152
  %v3509 = vpop.f32.mrb[0].mxu0
  %v3510 = vadd.f32 0.0, %v3509
  %v3511 = vpop.f32.mrb[0].mxu0
  %3512 = vmatprep.mubr.f32.mxu0 0.0
  %3513 = vmatmul.mubr.f32.gmra.mrb[0].mxu0 %v3155
  %v3514 = vpop.f32.mrb[0].mxu0
  %v3515 = vadd.f32 0.0, %v3514
  %v3516 = vpop.f32.mrb[0].mxu0
  %3517 = vmatprep.mubr.f32.mxu0 0.0
  %3518 = vmatmul.mubr.f32.gmra.mrb[0].mxu0 %v3158
  %v3519 = vpop.f32.mrb[0].mxu0
  %v3520 = vadd.f32 0.0, %v3519
  %v3521 = vpop.f32.mrb[0].mxu0
  %3522 = vmatprep.mubr.f32.mxu0 0.0
  %3523 = vmatmul.mubr.f32.gmra.mrb[0].mxu0 %v3161
  %v3524 = vpop.f32.mrb[0].mxu0
  %v3525 = vadd.f32 0.0, %v3524
  %v3526 = vpop.f32.mrb[0].mxu0
  %3527 = vmatprep.mubr.f32.mxu0 0.0
  %3528 = vmatmul.mubr.f32.gmra.mrb[0].mxu0 %v3164
  %v3529 = vpop.f32.mrb[0].mxu0
  %v3530 = vadd.f32 0.0, %v3529
  %v3531 = vpop.f32.mrb[0].mxu0
  %3532 = vmatprep.mubr.f32.mxu0 0.0
  %3533 = vmatmul.mubr.f32.gmra.mrb[0].mxu0 %v3167
  %v3534 = vpop.f32.mrb[0].mxu0
  %v3535 = vadd.f32 0.0, %v3534
  %v3536 = vpop.f32.mrb[0].mxu0
  %3537 = vmatprep.mubr.f32.mxu0 0.0
  %3538 = vmatmul.mubr.f32.gmra.mrb[0].mxu0 %v3170
  %v3539 = vpop.f32.mrb[0].mxu0
  %v3540 = vadd.f32 0.0, %v3539
  %v3541 = vpop.f32.mrb[0].mxu0
  %3542 = vmatprep.mubr.f32.mxu0 0.0
  %3543 = vmatmul.mubr.f32.gmra.mrb[0].mxu0 %v3173
  %v3544 = vpop.f32.mrb[0].mxu0
  %v3545 = vadd.f32 0.0, %v3544
  %v3546 = vpop.f32.mrb[0].mxu0
  %3547 = vmatprep.mubr.f32.mxu0 0.0
  %3548 = vmatmul.mubr.f32.gmra.mrb[0].mxu0 %v3176
  %v3549 = vpop.f32.mrb[0].mxu0
  %v3550 = vadd.f32 0.0, %v3549
  %v3551 = vpop.f32.mrb[0].mxu0
  %3552 = vmatprep.mubr.f32.mxu0 0.0
  %3553 = vmatmul.mubr.f32.gmra.mrb[0].mxu0 %v3179
  %v3554 = vpop.f32.mrb[0].mxu0
  %v3555 = vadd.f32 0.0, %v3554
  %v3556 = vpop.f32.mrb[0].mxu0
  %3557 = vmatprep.mubr.f32.mxu0 0.0
  %3558 = vmatmul.mubr.f32.gmra.mrb[0].mxu0 %v3182
  %v3559 = vpop.f32.mrb[0].mxu0
  %v3560 = vadd.f32 0.0, %v3559
  %v3561 = vpop.f32.mrb[0].mxu0
  %3562 = vmatprep.mubr.f32.mxu0 0.0
  %3563 = vmatmul.mubr.f32.gmra.mrb[0].mxu0 %v3185
  %v3564 = vpop.f32.mrb[0].mxu0
  %v3565 = vadd.f32 0.0, %v3564
  %v3566 = vpop.f32.mrb[0].mxu0
  %3567 = vmatprep.mubr.f32.mxu0 0.0
  %3568 = vmatmul.mubr.f32.gmra.mrb[0].mxu0 %v3188
  %v3569 = vpop.f32.mrb[0].mxu0
  %v3570 = vadd.f32 0.0, %v3569
  %v3571 = vpop.f32.mrb[0].mxu0
  %3572 = vmatprep.mubr.f32.mxu0 0.0
  %3573 = vmatmul.mubr.f32.gmra.mrb[0].mxu0 %v3191
  %v3574 = vpop.f32.mrb[0].mxu0
  %v3575 = vadd.f32 0.0, %v3574
  %v3576 = vpop.f32.mrb[0].mxu0
  %3577 = vdwg.mxu0
  %3578 = vst.msk [vmem:[%s7] sm:$0xff] %vm411, %v3260
  %3579 = vst.msk [vmem:[%s7 + $0x8] sm:$0xff] %vm411, %v3265
  %3580 = vst.msk [vmem:[%s7 + $0x10] sm:$0xff] %vm411, %v3270
  %3581 = vst.msk [vmem:[%s7 + $0x18] sm:$0xff] %vm411, %v3275
  %3582 = vst.msk [vmem:[%s7 + $0x20] sm:$0xff] %vm411, %v3280
  %3583 = vst.msk [vmem:[%s7 + $0x28] sm:$0xff] %vm411, %v3285
  %3584 = vst.msk [vmem:[%s7 + $0x30] sm:$0xff] %vm411, %v3290
  %3585 = vst.msk [vmem:[%s7 + $0x38] sm:$0xff] %vm411, %v3295
  %3586 = vst.msk [vmem:[%s7 + $0x40] sm:$0xff] %vm411, %v3300
  %3587 = vst.msk [vmem:[%s7 + $0x48] sm:$0xff] %vm411, %v3305
  %3588 = vst.msk [vmem:[%s7 + $0x50] sm:$0xff] %vm411, %v3310
  %3589 = vst.msk [vmem:[%s7 + $0x58] sm:$0xff] %vm411, %v3315
  %3590 = vst.msk [vmem:[%s7 + $0x60] sm:$0xff] %vm411, %v3320
  %3591 = vst.msk [vmem:[%s7 + $0x68] sm:$0xff] %vm411, %v3325
  %3592 = vst.msk [vmem:[%s7 + $0x70] sm:$0xff] %vm411, %v3330
  %3593 = vst.msk [vmem:[%s7 + $0x78] sm:$0xff] %vm411, %v3335
  %3594 = vst.msk [vmem:[%s7 + $0x80] sm:$0xff] %vm411, %v3340
  %3595 = vst.msk [vmem:[%s7 + $0x88] sm:$0xff] %vm411, %v3345
  %3596 = vst.msk [vmem:[%s7 + $0x90] sm:$0xff] %vm411, %v3350
  %3597 = vst.msk [vmem:[%s7 + $0x98] sm:$0xff] %vm411, %v3355
  %3598 = vst.msk [vmem:[%s7 + $0xa0] sm:$0xff] %vm411, %v3360
  %3599 = vst.msk [vmem:[%s7 + $0xa8] sm:$0xff] %vm411, %v3365
  %3600 = vst.msk [vmem:[%s7 + $0xb0] sm:$0xff] %vm411, %v3370
  %3601 = vst.msk [vmem:[%s7 + $0xb8] sm:$0xff] %vm411, %v3375
  %3602 = vst.msk [vmem:[%s7 + $0xc0] sm:$0xff] %vm411, %v3380
  %3603 = vst.msk [vmem:[%s7 + $0xc8] sm:$0xff] %vm411, %v3385
  %3604 = vst.msk [vmem:[%s7 + $0xd0] sm:$0xff] %vm411, %v3390
  %3605 = vst.msk [vmem:[%s7 + $0xd8] sm:$0xff] %vm411, %v3395
  %3606 = vst.msk [vmem:[%s7 + $0xe0] sm:$0xff] %vm411, %v3400
  %3607 = vst.msk [vmem:[%s7 + $0xe8] sm:$0xff] %vm411, %v3405
  %3608 = vst.msk [vmem:[%s7 + $0xf0] sm:$0xff] %vm411, %v3410
  %3609 = vst.msk [vmem:[%s7 + $0xf8] sm:$0xff] %vm411, %v3415
  %3610 = vst.msk [vmem:[%s7 + $0x100] sm:$0xff] %vm411, %v3420
  %3611 = vst.msk [vmem:[%s7 + $0x108] sm:$0xff] %vm411, %v3425
  %3612 = vst.msk [vmem:[%s7 + $0x110] sm:$0xff] %vm411, %v3430
  %3613 = vst.msk [vmem:[%s7 + $0x118] sm:$0xff] %vm411, %v3435
  %3614 = vst.msk [vmem:[%s7 + $0x120] sm:$0xff] %vm411, %v3440
  %3615 = vst.msk [vmem:[%s7 + $0x128] sm:$0xff] %vm411, %v3445
  %3616 = vst.msk [vmem:[%s7 + $0x130] sm:$0xff] %vm411, %v3450
  %3617 = vst.msk [vmem:[%s7 + $0x138] sm:$0xff] %vm411, %v3455
  %3618 = vst.msk [vmem:[%s7 + $0x140] sm:$0xff] %vm411, %v3460
  %3619 = vst.msk [vmem:[%s7 + $0x148] sm:$0xff] %vm411, %v3465
  %3620 = vst.msk [vmem:[%s7 + $0x150] sm:$0xff] %vm411, %v3470
  %3621 = vst.msk [vmem:[%s7 + $0x158] sm:$0xff] %vm411, %v3475
  %3622 = vst.msk [vmem:[%s7 + $0x160] sm:$0xff] %vm411, %v3480
  %3623 = vst.msk [vmem:[%s7 + $0x168] sm:$0xff] %vm411, %v3485
  %3624 = vst.msk [vmem:[%s7 + $0x170] sm:$0xff] %vm411, %v3490
  %3625 = vst.msk [vmem:[%s7 + $0x178] sm:$0xff] %vm411, %v3495
  %3626 = vst.msk [vmem:[%s7 + $0x180] sm:$0xff] %vm411, %v3500
  %3627 = vst.msk [vmem:[%s7 + $0x188] sm:$0xff] %vm411, %v3505
  %3628 = vst.msk [vmem:[%s7 + $0x190] sm:$0xff] %vm411, %v3510
  %3629 = vst.msk [vmem:[%s7 + $0x198] sm:$0xff] %vm411, %v3515
  %3630 = vst.msk [vmem:[%s7 + $0x1a0] sm:$0xff] %vm411, %v3520
  %3631 = vst.msk [vmem:[%s7 + $0x1a8] sm:$0xff] %vm411, %v3525
  %3632 = vst.msk [vmem:[%s7 + $0x1b0] sm:$0xff] %vm411, %v3530
  %3633 = vst.msk [vmem:[%s7 + $0x1b8] sm:$0xff] %vm411, %v3535
  %3634 = vst.msk [vmem:[%s7 + $0x1c0] sm:$0xff] %vm411, %v3540
  %3635 = vst.msk [vmem:[%s7 + $0x1c8] sm:$0xff] %vm411, %v3545
  %3636 = vst.msk [vmem:[%s7 + $0x1d0] sm:$0xff] %vm411, %v3550
  %3637 = vst.msk [vmem:[%s7 + $0x1d8] sm:$0xff] %vm411, %v3555
  %3638 = vst.msk [vmem:[%s7 + $0x1e0] sm:$0xff] %vm411, %v3560
  %3639 = vst.msk [vmem:[%s7 + $0x1e8] sm:$0xff] %vm411, %v3565
  %3640 = vst.msk [vmem:[%s7 + $0x1f0] sm:$0xff] %vm411, %v3570
  %3641 = vst.msk [vmem:[%s7 + $0x1f8] sm:$0xff] %vm411, %v3575
  // Predicated region
  $region30: #{a_call__.3} parent=0 // pred_check
    _
  $region31: #{a_call__.3} parent=0 // pred_check_branch
    %3643 = sbr.rel (0) target = $region33
  $region32: #{a_call__.3} parent=0 // pred_region
    _
  $region33: #{a_call__.3} parent=0 // pred_fallthru
    _
  // Predicated region
  $region34: #{a_call__.3} parent=0 // pred_check
    _
  $region35: #{a_call__.3} parent=0 // pred_check_branch
    %3645 = sbr.rel (0) target = $region37
  $region36: #{a_call__.3} parent=0 // pred_region
    _
  $region37: #{a_call__.3} parent=0 // pred_fallthru
    _

</llo_original>
